<compile_context>
chip_gen: v6e
topology: v6e:2x2x1
jax: 0.10.0
libtpu: 0.0.40
codegen_flags: <defaults>
</compile_context>

<pallas_src>
import jax
import jax.numpy as jnp
from jax import lax
from jax.experimental import pallas as pl
from jax.experimental.pallas import tpu as pltpu


def _encoder_x_kernel(x_ref,
                      w1t, b1, w2t, b2, w3t, b3, w4t, b4,
                      wh, bh,
                      out_ref,
                      acc_ref):
    """Channel-major PointNet feature extractor + fused fc1/fc2 head.

    Grid: (batch tiles [parallel], point tiles [arbitrary / running max]).
      x_ref   : (b_tile, C_in, n_tile)   NCL block, points lane-dense.
      w*t     : channel-major conv weights (C_out, C_in); b* : (C_out, 1).
      wh, bh  : fused + zero-padded head, (512x, HEAD_PAD) / (1, HEAD_PAD).
      out_ref : (b_tile, 1, HEAD_PAD)    lane-dense output block.
      acc_ref : (512x, b_tile)           running max over points (channel-major).
    """
    ni = pl.program_id(1)
    bt = x_ref.shape[0]

    @pl.when(ni == 0)
    def _init():
        acc_ref[...] = jnp.full_like(acc_ref, -jnp.inf)

    # Weights are whole-array VMEM residents; load them once per grid step
    # (hoisted out of the static batch loop).
    w1 = w1t[...]
    w2 = w2t[...]
    w3 = w3t[...]
    w4 = w4t[...]
    c1b = b1[...]
    c2b = b2[...]
    c3b = b3[...]
    c4b = b4[...]
    mx_dtype = w2.dtype

    acc = acc_ref[...]                                        # (c4, bt) f32, one load
    lane = lax.broadcasted_iota(jnp.int32, acc.shape, 1)      # 0..bt-1 per column

    # Channel-major per-point MLP: channels in sublanes, points in lanes.
    for b in range(bt):                                       # static, small unroll
        xb = x_ref[b]                                         # (C_in, n_tile) f32
        # conv1 + bn1 + relu: K = C_in is tiny -> one small f32 MXU pass.
        h = jnp.dot(w1, xb, preferred_element_type=jnp.float32) + c1b
        h = jnp.maximum(h, 0.0).astype(mx_dtype)
        # conv2..conv4 (+bn; relu after 2 and 3, none after 4): MXU matmuls with
        # f32 accumulation; bias + ReLU in f32.
        h = jnp.dot(w2, h, preferred_element_type=jnp.float32) + c2b
        h = jnp.maximum(h, 0.0).astype(mx_dtype)
        h = jnp.dot(w3, h, preferred_element_type=jnp.float32) + c3b
        h = jnp.maximum(h, 0.0).astype(mx_dtype)
        h = jnp.dot(w4, h, preferred_element_type=jnp.float32) + c4b   # (c4, nt) f32
        # Max over this tile's points: one lane (XLU) reduction per batch row,
        # merged into the running max of column b (register-resident update).
        col = jnp.max(h, axis=1, keepdims=True)               # (c4, 1)
        acc = jnp.where(lane == b, jnp.maximum(acc, col), acc)

    acc_ref[...] = acc                                        # one full-block store

    # Finalize on the last point tile: fused fc1/fc2 head, lane-dense store.
    @pl.when(ni == pl.num_programs(1) - 1)
    def _finalize():
        feat_cm = acc_ref[...]                                # (c4, bt), channel-major
        # Flip to batch-major with a tiny rhs-transposed MXU matmul against an
        # identity (same contraction pattern as the q @ k^T einsum), avoiding a
        # vector-relayout transpose:  (bt, bt) . (c4, bt)^T -> (bt, c4).
        rr = lax.broadcasted_iota(jnp.int32, (bt, bt), 0)
        cc = lax.broadcasted_iota(jnp.int32, (bt, bt), 1)
        eye = (rr == cc).astype(jnp.float32)
        feat = lax.dot_general(eye, feat_cm, (((1,), (1,)), ((), ())),
                               preferred_element_type=jnp.float32)    # (bt, c4)
        out = jnp.dot(feat, wh[...], preferred_element_type=jnp.float32) + bh[...]
        out_ref[...] = out.reshape(out_ref.shape)             # (bt, 1, HEAD_PAD)


def _pick_vmem_limit():
    """Generation-aware VMEM budget: ~75% of physical, capped at 100 MiB.

    v5e/v6e (128 MiB physical) -> ~96 MiB (well above their 16/32 MiB scoped
    defaults); v7x (64 MiB physical) -> ~48 MiB.  Conservative fallback if the
    query is unavailable.
    """
    cap = None
    try:
        info = pltpu.get_tpu_info()
        cap = getattr(info, "vmem_capacity_bytes", None)
    except Exception:
        cap = None
    if not cap:
        cap = 64 * 1024 * 1024
    return max(32 * 1024 * 1024, min(int(cap) * 3 // 4, 100 * 1024 * 1024))


def encoder_x_forward(x_ncl, params, *, b_tile=None, n_tile=None,
                      matmul_dtype=jnp.bfloat16):
    """x_ncl: (B, C_in, N_points) float32 -- PyTorch Conv1d NCL layout, consumed
    directly (no wrapper transpose).  Returns (mu, logvar, scale) with
    scale = exp(logvar) + 3e-22, i.e. the parameters of the reference module's
    Independent(Normal(mu, scale), 1)."""
    B, C_in, N = x_ncl.shape
    latent = params["wf1"].shape[1]
    c1 = params["w1"].shape[1]
    c2 = params["w2"].shape[1]
    c3 = params["w3"].shape[1]
    c4 = params["wf1"].shape[0]

    # ---- tile defaults ------------------------------------------------------
    if b_tile is None:
        if B == 1:
            b_tile = 1
        else:
            # >= 2 steps on the "parallel" batch axis (v7x megacore can shard
            # it) while bounding the static per-step batch unroll.
            b_tile = max(d for d in (1, 2, 4) if B % d == 0 and d <= B // 2)
    if n_tile is None:
        # Largest point tile (fewest ~0.35 us grid steps) that keeps the
        # double-buffered x block + bf16/f32 intermediates comfortably inside
        # the per-generation vmem_limit_bytes set below.
        n_tile = N
        for cand in (4096, 2048, 1024, 512):
            if N > cand and N % cand == 0:
                n_tile = cand
                break
    assert B % b_tile == 0 and N % n_tile == 0

    head = 2 * latent
    head_pad = ((head + 127) // 128) * 128        # lane-dense output store

    # ---- channel-major weights (C_out, C_in); biases as (C_out, 1) ----------
    f32 = jnp.float32
    w1t = params["w1"].T.astype(f32)              # layer 1 stays f32 (tiny K)
    w2t = params["w2"].T.astype(matmul_dtype)
    w3t = params["w3"].T.astype(matmul_dtype)
    w4t = params["w4"].T.astype(matmul_dtype)
    b1c = params["b1"].reshape(c1, 1).astype(f32)
    b2c = params["b2"].reshape(c2, 1).astype(f32)
    b3c = params["b3"].reshape(c3, 1).astype(f32)
    b4c = params["b4"].reshape(c4, 1).astype(f32)
    # Fused fc1/fc2 head, zero-padded to a multiple of 128 output columns.
    wh = jnp.concatenate([params["wf1"], params["wf2"]], axis=1)   # (c4, 2*latent)
    bh = jnp.concatenate([params["bf1"], params["bf2"]], axis=1)   # (1, 2*latent)
    wh_pad = jnp.zeros((c4, head_pad), f32).at[:, :head].set(wh)
    bh_pad = jnp.zeros((1, head_pad), f32).at[:, :head].set(bh)

    weight_args = (w1t, b1c, w2t, b2c, w3t, b3c, w4t, b4c, wh_pad, bh_pad)

    # Grid-invariant weights: whole-array VMEM residents (single buffered; no
    # BlockSpec double-buffering -> halves weight VMEM, matters at large x/v7x).
    weight_spec = pl.BlockSpec(memory_space=pltpu.MemorySpace.VMEM)

    in_specs = [pl.BlockSpec((b_tile, C_in, n_tile), lambda bi, ni: (bi, 0, ni))]
    in_specs += [weight_spec] * len(weight_args)
    out_specs = pl.BlockSpec((b_tile, 1, head_pad), lambda bi, ni: (bi, 0, 0))

    flops = int(2 * B * N * (C_in * c1 + c1 * c2 + c2 * c3 + c3 * c4)
                + 2 * B * c4 * head_pad)
    bytes_accessed = int(x_ncl.size * x_ncl.dtype.itemsize
                         + sum(int(a.size) * a.dtype.itemsize for a in weight_args)
                         + B * head_pad * 4)

    out = pl.pallas_call(
        _encoder_x_kernel,
        out_shape=jax.ShapeDtypeStruct((B, 1, head_pad), jnp.float32),
        grid_spec=pltpu.PrefetchScalarGridSpec(
            num_scalar_prefetch=0,
            grid=(B // b_tile, N // n_tile),
            in_specs=in_specs,
            out_specs=out_specs,
            scratch_shapes=[pltpu.VMEM((c4, b_tile), jnp.float32)],
        ),
        compiler_params=pltpu.CompilerParams(
            dimension_semantics=("parallel", "arbitrary"),
            vmem_limit_bytes=_pick_vmem_limit()),
        cost_estimate=pl.CostEstimate(flops=flops, transcendentals=0,
                                      bytes_accessed=bytes_accessed),
    )(x_ncl, *weight_args)

    head_out = out[:, 0, :head]
    mu = head_out[:, :latent]
    logvar = head_out[:, latent:head]
    # torch: Normal(loc=mu, scale=exp(logvar) + 3e-22), exactly as in the module.
    scale = jnp.exp(logvar) + 3e-22
    return mu, logvar, scale


def _encoder_x_reference(x_ncl, params):
    """Pure-JAX f32 reference of the PyTorch forward (BN folded, eval mode)."""
    x = jnp.transpose(x_ncl, (0, 2, 1))                    # (B, N, C_in)
    h = jnp.maximum(x @ params["w1"] + params["b1"], 0.0)
    h = jnp.maximum(h @ params["w2"] + params["b2"], 0.0)
    h = jnp.maximum(h @ params["w3"] + params["b3"], 0.0)
    h = h @ params["w4"] + params["b4"]                    # no ReLU after bn4
    feat = jnp.max(h, axis=1)                              # (B, 512x)
    mu = feat @ params["wf1"] + params["bf1"]
    logvar = feat @ params["wf2"] + params["bf2"]
    return mu, logvar


def _fold_bn(w, b, gamma, beta, mean, var, eps=1e-5):
    """Fold eval-mode BatchNorm1d into a (C_in, C_out) weight and (1, C_out) bias."""
    s = gamma / jnp.sqrt(var + eps)
    return w * s[None, :], ((b - mean) * s + beta)[None, :]


def init_params(key, input_channels=4, x=1, latent_size=3):
    c1, c2, c3, c4 = 64 * x, 128 * x, 256 * x, 512 * x
    keys = jax.random.split(key, 20)
    k = iter(keys)

    def lin(kk, cin, cout, scale=0.05):
        return jax.random.normal(kk, (cin, cout), jnp.float32) * scale

    params = {}
    dims = [(input_channels, c1), (c1, c2), (c2, c3), (c3, c4)]
    # conv1..conv4 (1x1 convs == per-point linears), each with BatchNorm folded in.
    for i, (cin, cout) in enumerate(dims, start=1):
        w = lin(next(k), cin, cout)
        b = jax.random.normal(next(k), (cout,), jnp.float32) * 0.01
        gamma = 1.0 + 0.1 * jax.random.normal(next(k), (cout,), jnp.float32)
        beta = 0.1 * jax.random.normal(next(k), (cout,), jnp.float32)
        mean = jnp.zeros((cout,), jnp.float32)
        var = jnp.ones((cout,), jnp.float32)
        wf, bf = _fold_bn(w, b, gamma, beta, mean, var)
        params[f"w{i}"], params[f"b{i}"] = wf, bf

    params["wf1"] = lin(next(k), c4, latent_size)
    params["bf1"] = (0.01 * jax.random.normal(next(k), (latent_size,), jnp.float32))[None, :]
    params["wf2"] = lin(next(k), c4, latent_size)
    params["bf2"] = (0.01 * jax.random.normal(next(k), (latent_size,), jnp.float32))[None, :]
    return params


if __name__ == "__main__":
    key = jax.random.PRNGKey(0)
    k_param, k_x = jax.random.split(key)

    B, C_IN, N_POINTS, X_MULT, LATENT = 2, 4, 128, 1, 3
    params = init_params(k_param, input_channels=C_IN, x=X_MULT, latent_size=LATENT)

    # PyTorch Conv1d NCL layout: (B, C_in, N_points); consumed directly.
    x_ncl = jax.random.normal(k_x, (B, C_IN, N_POINTS), jnp.float32)

    mu, logvar, scale = encoder_x_forward(x_ncl, params)
    jax.block_until_ready((mu, logvar, scale))

    assert mu.shape == (B, LATENT) and logvar.shape == (B, LATENT) and scale.shape == (B, LATENT)

    # Correctness vs. a pure-JAX f32 reference (loose tolerance: layers 2-4 run
    # in bf16 on the MXU with f32 accumulation).
    ref_mu, ref_logvar = _encoder_x_reference(x_ncl, params)
    assert jnp.allclose(mu, ref_mu, rtol=5e-2, atol=5e-2)
    assert jnp.allclose(logvar, ref_logvar, rtol=5e-2, atol=5e-2)

    print("KERNEL_OK")
</pallas_src>

<mosaic_0001>
module attributes {stable_mosaic.version = 11 : i64} {
  func.func @_encoder_x_kernel(%arg0: i32, %arg1: i32, %arg2: memref<1x4x128xf32, #tpu.memory_space<vmem>>, %arg3: memref<64x4xf32, #tpu.memory_space<vmem>>, %arg4: memref<64x1xf32, #tpu.memory_space<vmem>>, %arg5: memref<128x64xbf16, #tpu.memory_space<vmem>>, %arg6: memref<128x1xf32, #tpu.memory_space<vmem>>, %arg7: memref<256x128xbf16, #tpu.memory_space<vmem>>, %arg8: memref<256x1xf32, #tpu.memory_space<vmem>>, %arg9: memref<512x256xbf16, #tpu.memory_space<vmem>>, %arg10: memref<512x1xf32, #tpu.memory_space<vmem>>, %arg11: memref<512x128xf32, #tpu.memory_space<vmem>>, %arg12: memref<1x128xf32, #tpu.memory_space<vmem>>, %arg13: memref<1x1x128xf32, #tpu.memory_space<vmem>>, %arg14: memref<512x1xf32, #tpu.memory_space<vmem>>) attributes {dimension_semantics = [#tpu.dimension_semantics<parallel>, #tpu.dimension_semantics<arbitrary>], iteration_bounds = array<i64: 2, 1>, scalar_prefetch = 0 : i64, scratch_operands = 1 : i64, tpu.core_type = #tpu.core_type<tc>, window_params = [{transform_indices = @transform_0, window_bounds = array<i64: 1, 4, 128>}, {pipeline_mode = #tpu.pipeline_mode<synchronous>, transform_indices = @transform_1, window_bounds = array<i64: 64, 4>}, {pipeline_mode = #tpu.pipeline_mode<synchronous>, transform_indices = @transform_2, window_bounds = array<i64: 64, 1>}, {pipeline_mode = #tpu.pipeline_mode<synchronous>, transform_indices = @transform_3, window_bounds = array<i64: 128, 64>}, {pipeline_mode = #tpu.pipeline_mode<synchronous>, transform_indices = @transform_4, window_bounds = array<i64: 128, 1>}, {pipeline_mode = #tpu.pipeline_mode<synchronous>, transform_indices = @transform_5, window_bounds = array<i64: 256, 128>}, {pipeline_mode = #tpu.pipeline_mode<synchronous>, transform_indices = @transform_6, window_bounds = array<i64: 256, 1>}, {pipeline_mode = #tpu.pipeline_mode<synchronous>, transform_indices = @transform_7, window_bounds = array<i64: 512, 256>}, {pipeline_mode = #tpu.pipeline_mode<synchronous>, transform_indices = @transform_8, window_bounds = array<i64: 512, 1>}, {pipeline_mode = #tpu.pipeline_mode<synchronous>, transform_indices = @transform_9, window_bounds = array<i64: 512, 128>}, {pipeline_mode = #tpu.pipeline_mode<synchronous>, transform_indices = @transform_10, window_bounds = array<i64: 1, 128>}, {transform_indices = @transform_11, window_bounds = array<i64: 1, 1, 128>}]} {
    %c0_i32 = arith.constant 0 : i32
    %0 = arith.cmpi eq, %arg1, %c0_i32 : i32
    %1 = arith.extui %0 : i1 to i32
    %c0_i32_0 = arith.constant 0 : i32
    %2 = arith.cmpi ne, %1, %c0_i32_0 : i32
    scf.if %2 {
      %cst_33 = arith.constant 0xFF800000 : f32
      %46 = vector.broadcast %cst_33 : f32 to vector<512x1xf32>
      %c0_34 = arith.constant 0 : index
      %c0_35 = arith.constant 0 : index
      %47 = vector.load %arg14[%c0_34, %c0_35] : memref<512x1xf32, #tpu.memory_space<vmem>>, vector<512x1xf32>
      tpu.vector_store %arg14[%c0_34, %c0_35], %46 {strides = array<i32>} : memref<512x1xf32, #tpu.memory_space<vmem>>, vector<512x1xf32>,
    } else {
    }
    %c0 = arith.constant 0 : index
    %c0_1 = arith.constant 0 : index
    %3 = vector.load %arg3[%c0, %c0_1] : memref<64x4xf32, #tpu.memory_space<vmem>>, vector<64x4xf32>
    %c0_2 = arith.constant 0 : index
    %c0_3 = arith.constant 0 : index
    %4 = vector.load %arg5[%c0_2, %c0_3] : memref<128x64xbf16, #tpu.memory_space<vmem>>, vector<128x64xbf16>
    %c0_4 = arith.constant 0 : index
    %c0_5 = arith.constant 0 : index
    %5 = vector.load %arg7[%c0_4, %c0_5] : memref<256x128xbf16, #tpu.memory_space<vmem>>, vector<256x128xbf16>
    %c0_6 = arith.constant 0 : index
    %c0_7 = arith.constant 0 : index
    %6 = vector.load %arg9[%c0_6, %c0_7] : memref<512x256xbf16, #tpu.memory_space<vmem>>, vector<512x256xbf16>
    %c0_8 = arith.constant 0 : index
    %c0_9 = arith.constant 0 : index
    %7 = vector.load %arg4[%c0_8, %c0_9] : memref<64x1xf32, #tpu.memory_space<vmem>>, vector<64x1xf32>
    %c0_10 = arith.constant 0 : index
    %c0_11 = arith.constant 0 : index
    %8 = vector.load %arg6[%c0_10, %c0_11] : memref<128x1xf32, #tpu.memory_space<vmem>>, vector<128x1xf32>
    %c0_12 = arith.constant 0 : index
    %c0_13 = arith.constant 0 : index
    %9 = vector.load %arg8[%c0_12, %c0_13] : memref<256x1xf32, #tpu.memory_space<vmem>>, vector<256x1xf32>
    %c0_14 = arith.constant 0 : index
    %c0_15 = arith.constant 0 : index
    %10 = vector.load %arg10[%c0_14, %c0_15] : memref<512x1xf32, #tpu.memory_space<vmem>>, vector<512x1xf32>
    %c0_16 = arith.constant 0 : index
    %c0_17 = arith.constant 0 : index
    %11 = vector.load %arg14[%c0_16, %c0_17] : memref<512x1xf32, #tpu.memory_space<vmem>>, vector<512x1xf32>
    %12 = tpu.iota {dimensions = array<i32: 1>} : vector<512x1xi32>
    %c0_18 = arith.constant 0 : index
    %c0_19 = arith.constant 0 : index
    %c0_20 = arith.constant 0 : index
    %13 = vector.load %arg2[%c0_18, %c0_19, %c0_20] : memref<1x4x128xf32, #tpu.memory_space<vmem>>, vector<1x4x128xf32>
    %14 = vector.shape_cast %13 : vector<1x4x128xf32> to vector<4x128xf32>
    %cst = arith.constant dense<0.000000e+00> : vector<64x128xf32>
    %15 = tpu.matmul %3, %14, %cst {dimension_numbers = #tpu.dot_dimension_numbers<[1], [0], [0], [1], [0, 0, 1, 1], [], []>} : vector<64x4xf32>, vector<4x128xf32>, vector<64x128xf32> -> vector<64x128xf32>
    %16 = vector.broadcast %7 : vector<64x1xf32> to vector<64x128xf32>
    %17 = arith.addf %15, %16 : vector<64x128xf32>
    %cst_21 = arith.constant 0.000000e+00 : f32
    %18 = vector.broadcast %cst_21 : f32 to vector<64x128xf32>
    %19 = arith.maximumf %17, %18 : vector<64x128xf32>
    %20 = arith.truncf %19 : vector<64x128xf32> to vector<64x128xbf16>
    %cst_22 = arith.constant dense<0.000000e+00> : vector<128x128xf32>
    %21 = tpu.matmul %4, %20, %cst_22 {dimension_numbers = #tpu.dot_dimension_numbers<[1], [0], [0], [1], [0, 0, 1, 1], [], []>} : vector<128x64xbf16>, vector<64x128xbf16>, vector<128x128xf32> -> vector<128x128xf32>
    %22 = vector.broadcast %8 : vector<128x1xf32> to vector<128x128xf32>
    %23 = arith.addf %21, %22 : vector<128x128xf32>
    %cst_23 = arith.constant 0.000000e+00 : f32
    %24 = vector.broadcast %cst_23 : f32 to vector<128x128xf32>
    %25 = arith.maximumf %23, %24 : vector<128x128xf32>
    %26 = arith.truncf %25 : vector<128x128xf32> to vector<128x128xbf16>
    %cst_24 = arith.constant dense<0.000000e+00> : vector<256x128xf32>
    %27 = tpu.matmul %5, %26, %cst_24 {dimension_numbers = #tpu.dot_dimension_numbers<[1], [0], [0], [1], [0, 0, 1, 1], [], []>} : vector<256x128xbf16>, vector<128x128xbf16>, vector<256x128xf32> -> vector<256x128xf32>
    %28 = vector.broadcast %9 : vector<256x1xf32> to vector<256x128xf32>
    %29 = arith.addf %27, %28 : vector<256x128xf32>
    %cst_25 = arith.constant 0.000000e+00 : f32
    %30 = vector.broadcast %cst_25 : f32 to vector<256x128xf32>
    %31 = arith.maximumf %29, %30 : vector<256x128xf32>
    %32 = arith.truncf %31 : vector<256x128xf32> to vector<256x128xbf16>
    %cst_26 = arith.constant dense<0.000000e+00> : vector<512x128xf32>
    %33 = tpu.matmul %6, %32, %cst_26 {dimension_numbers = #tpu.dot_dimension_numbers<[1], [0], [0], [1], [0, 0, 1, 1], [], []>} : vector<512x256xbf16>, vector<256x128xbf16>, vector<512x128xf32> -> vector<512x128xf32>
    %34 = vector.broadcast %10 : vector<512x1xf32> to vector<512x128xf32>
    %35 = arith.addf %33, %34 : vector<512x128xf32>
    %cst_27 = arith.constant dense<0xFF800000> : vector<512xf32>
    %36 = vector.multi_reduction <maximumf>, %35, %cst_27 [1] : vector<512x128xf32> to vector<512xf32>
    %37 = vector.shape_cast %36 : vector<512xf32> to vector<512x1xf32>
    %c0_i32_28 = arith.constant 0 : i32
    %38 = vector.broadcast %c0_i32_28 : i32 to vector<512x1xi32>
    %39 = arith.cmpi eq, %12, %38 : vector<512x1xi32>
    %40 = arith.maximumf %11, %37 : vector<512x1xf32>
    %41 = arith.select %39, %40, %11 : vector<512x1xi1>, vector<512x1xf32>
    %c0_29 = arith.constant 0 : index
    %c0_30 = arith.constant 0 : index
    %42 = vector.load %arg14[%c0_29, %c0_30] : memref<512x1xf32, #tpu.memory_space<vmem>>, vector<512x1xf32>
    tpu.vector_store %arg14[%c0_29, %c0_30], %41 {strides = array<i32>} : memref<512x1xf32, #tpu.memory_space<vmem>>, vector<512x1xf32>,
    %c0_i32_31 = arith.constant 0 : i32
    %43 = arith.cmpi eq, %arg1, %c0_i32_31 : i32
    %44 = arith.extui %43 : i1 to i32
    %c0_i32_32 = arith.constant 0 : i32
    %45 = arith.cmpi ne, %44, %c0_i32_32 : i32
    scf.if %45 {
      %c0_33 = arith.constant 0 : index
      %c0_34 = arith.constant 0 : index
      %46 = vector.load %arg14[%c0_33, %c0_34] : memref<512x1xf32, #tpu.memory_space<vmem>>, vector<512x1xf32>
      %47 = tpu.iota {dimensions = array<i32: 0>} : vector<1x1xi32>
      %48 = tpu.iota {dimensions = array<i32: 1>} : vector<1x1xi32>
      %49 = arith.cmpi eq, %47, %48 : vector<1x1xi32>
      %50 = arith.extui %49 : vector<1x1xi1> to vector<1x1xi32>
      %51 = arith.sitofp %50 : vector<1x1xi32> to vector<1x1xf32>
      %cst_35 = arith.constant dense<0.000000e+00> : vector<1x512xf32>
      %52 = tpu.matmul %51, %46, %cst_35 {dimension_numbers = #tpu.dot_dimension_numbers<[1], [1], [0], [0], [0, 0, 1, 0], [], []>} : vector<1x1xf32>, vector<512x1xf32>, vector<1x512xf32> -> vector<1x512xf32>
      %c0_36 = arith.constant 0 : index
      %c0_37 = arith.constant 0 : index
      %53 = vector.load %arg11[%c0_36, %c0_37] : memref<512x128xf32, #tpu.memory_space<vmem>>, vector<512x128xf32>
      %cst_38 = arith.constant dense<0.000000e+00> : vector<1x128xf32>
      %54 = tpu.matmul %52, %53, %cst_38 {dimension_numbers = #tpu.dot_dimension_numbers<[1], [0], [0], [1], [0, 0, 1, 1], [], []>} : vector<1x512xf32>, vector<512x128xf32>, vector<1x128xf32> -> vector<1x128xf32>
      %c0_39 = arith.constant 0 : index
      %c0_40 = arith.constant 0 : index
      %55 = vector.load %arg12[%c0_39, %c0_40] : memref<1x128xf32, #tpu.memory_space<vmem>>, vector<1x128xf32>
      %56 = arith.addf %54, %55 : vector<1x128xf32>
      %57 = vector.shape_cast %56 : vector<1x128xf32> to vector<1x1x128xf32>
      %c0_41 = arith.constant 0 : index
      %c0_42 = arith.constant 0 : index
      %c0_43 = arith.constant 0 : index
      %58 = vector.load %arg13[%c0_41, %c0_42, %c0_43] : memref<1x1x128xf32, #tpu.memory_space<vmem>>, vector<1x1x128xf32>
      tpu.vector_store %arg13[%c0_41, %c0_42, %c0_43], %57 {strides = array<i32>} : memref<1x1x128xf32, #tpu.memory_space<vmem>>, vector<1x1x128xf32>,
    } else {
    }
    return
  }
  func.func @transform_0(%arg0: i32, %arg1: i32) -> (i32, i32, i32) {
    %c0_i32 = arith.constant 0 : i32
    %c0_i32_0 = arith.constant 0 : i32
    return %arg0, %c0_i32, %arg1 : i32, i32, i32
  }
  func.func @transform_1(%arg0: i32, %arg1: i32) -> (i32, i32) {
    %c0_i32 = arith.constant 0 : i32
    %c0_i32_0 = arith.constant 0 : i32
    %c0_i32_1 = arith.constant 0 : i32
    return %c0_i32, %c0_i32_0 : i32, i32
  }
  func.func @transform_2(%arg0: i32, %arg1: i32) -> (i32, i32) {
    %c0_i32 = arith.constant 0 : i32
    %c0_i32_0 = arith.constant 0 : i32
    %c0_i32_1 = arith.constant 0 : i32
    return %c0_i32, %c0_i32_0 : i32, i32
  }
  func.func @transform_3(%arg0: i32, %arg1: i32) -> (i32, i32) {
    %c0_i32 = arith.constant 0 : i32
    %c0_i32_0 = arith.constant 0 : i32
    %c0_i32_1 = arith.constant 0 : i32
    return %c0_i32, %c0_i32_0 : i32, i32
  }
  func.func @transform_4(%arg0: i32, %arg1: i32) -> (i32, i32) {
    %c0_i32 = arith.constant 0 : i32
    %c0_i32_0 = arith.constant 0 : i32
    %c0_i32_1 = arith.constant 0 : i32
    return %c0_i32, %c0_i32_0 : i32, i32
  }
  func.func @transform_5(%arg0: i32, %arg1: i32) -> (i32, i32) {
    %c0_i32 = arith.constant 0 : i32
    %c0_i32_0 = arith.constant 0 : i32
    %c0_i32_1 = arith.constant 0 : i32
    return %c0_i32, %c0_i32_0 : i32, i32
  }
  func.func @transform_6(%arg0: i32, %arg1: i32) -> (i32, i32) {
    %c0_i32 = arith.constant 0 : i32
    %c0_i32_0 = arith.constant 0 : i32
    %c0_i32_1 = arith.constant 0 : i32
    return %c0_i32, %c0_i32_0 : i32, i32
  }
  func.func @transform_7(%arg0: i32, %arg1: i32) -> (i32, i32) {
    %c0_i32 = arith.constant 0 : i32
    %c0_i32_0 = arith.constant 0 : i32
    %c0_i32_1 = arith.constant 0 : i32
    return %c0_i32, %c0_i32_0 : i32, i32
  }
  func.func @transform_8(%arg0: i32, %arg1: i32) -> (i32, i32) {
    %c0_i32 = arith.constant 0 : i32
    %c0_i32_0 = arith.constant 0 : i32
    %c0_i32_1 = arith.constant 0 : i32
    return %c0_i32, %c0_i32_0 : i32, i32
  }
  func.func @transform_9(%arg0: i32, %arg1: i32) -> (i32, i32) {
    %c0_i32 = arith.constant 0 : i32
    %c0_i32_0 = arith.constant 0 : i32
    %c0_i32_1 = arith.constant 0 : i32
    return %c0_i32, %c0_i32_0 : i32, i32
  }
  func.func @transform_10(%arg0: i32, %arg1: i32) -> (i32, i32) {
    %c0_i32 = arith.constant 0 : i32
    %c0_i32_0 = arith.constant 0 : i32
    %c0_i32_1 = arith.constant 0 : i32
    return %c0_i32, %c0_i32_0 : i32, i32
  }
  func.func @transform_11(%arg0: i32, %arg1: i32) -> (i32, i32, i32) {
    %c0_i32 = arith.constant 0 : i32
    %c0_i32_0 = arith.constant 0 : i32
    %c0_i32_1 = arith.constant 0 : i32
    return %arg0, %c0_i32, %c0_i32_0 : i32, i32, i32
  }
}

</mosaic_0001>

<llo_original>
// kernel: tpu_custom_call.1
$region0: #{tpu_custom_call.1}
  #allocation0 [shape = 'u32[]', space=smem, size = 0x4, offset = 0x4, fixed_abs, tag = 'smem constant byte address 0x4 - core index']
  #allocation1 [shape = 'u32[144,128]{1,0:T(1,128)}', space=vmem, size = 0x12000, scoped, tag = 'internal scratch']
  #allocation2 [shape = 'f32[512,1]{1,0:T(8,128)}', space=vmem, size = 0x40000, scoped, tag = 'scratch operand']
  %s0 = inlined_call_operand.vmem [shape: f32[2,4,128], index: 0, kind: input, shape index: {}]
  %s1 = inlined_call_operand.vmem [shape: f32[64,4], index: 1, kind: input, shape index: {}]
  %s2 = inlined_call_operand.vmem [shape: f32[64,1], index: 2, kind: input, shape index: {}]
  %s3 = inlined_call_operand.vmem [shape: bf16[128,64], index: 3, kind: input, shape index: {}]
  %s4 = inlined_call_operand.vmem [shape: f32[128,1], index: 4, kind: input, shape index: {}]
  %s5 = inlined_call_operand.hbm [shape: bf16[256,128], index: 5, kind: input, shape index: {}]
  %s6 = inlined_call_operand.vmem [shape: f32[256,1], index: 6, kind: input, shape index: {}]
  %s7 = inlined_call_operand.vmem [shape: bf16[512,256], index: 7, kind: input, shape index: {}]
  %s8 = inlined_call_operand.vmem [shape: f32[512,1], index: 8, kind: input, shape index: {}]
  %s9 = inlined_call_operand.vmem [shape: f32[512,128], index: 9, kind: input, shape index: {}]
  %s10 = inlined_call_operand.vmem [shape: f32[1,128], index: 10, kind: input, shape index: {}]
  %s11 = inlined_call_operand.hbm [shape: f32[2,1,128], index: 11, kind: output, shape index: {}]
  %s12 = sld [smem:[#allocation0]]
  $region89: #{tpu_custom_call.1} parent=0
    _
  %s14 = ssub.s32 1, %s12
  %s15 = scalar_select 0, %s14, %s12
  $region1: #{tpu_custom_call.1} parent=0
    #allocation3 [shape = 'u8[65536]{0}', space=vmem, size = 0x10000, scoped, tag = 'input window, operand 5, single buffered']
    #allocation4 [shape = 's32[2]{0}', space=sflag, size = 0x8, scoped, tag = 'scoped memory for tpu_custom_call.1']
    #allocation5 [shape = 's32[2]{0}', space=sflag, size = 0x8, scoped, tag = 'scoped memory for tpu_custom_call.1']
    #allocation6 [shape = 'u8[1024]{0}', space=vmem, size = 0x400, scoped, tag = 'output window, operand 0']
    %16 = vsyncpa [#allocation4], 0
    %17 = vsyncpa [#allocation5], 0
    %s18 = scalar_lea.sflag [#allocation5], 1
    %19 = vsyncpa %s18, 0
    loop: start=0, step=1, limit=4
    $region2: #{tpu_custom_call.1} parent=1 // loop_pre_header
      _
    $region3: #{tpu_custom_call.1} parent=1 // loop_header
      %s21 = sphi 0, %s25
      %p22 = scmp.ge.s32.totalorder %s21, 4
      %s28 = sphi 0, %s40
      %s29 = sphi 0, %s36
      %s30 = sphi 0, %s28
      %s31 = sphi 0, %s29
      %s32 = sphi 0, %s30
      %s33 = sphi 0, %s31
      %s45 = sphi 0, %s47
      %s48 = sphi 0, %s45
      %s49 = sphi 0, %s48
      %s65 = sphi 0, %s49
      %s69 = sphi 0, %s69
      %s71 = sphi 0, %s69
      %s72 = sphi 0, %s71
      %s86 = sphi 0, %s72
      %s90 = sphi 0, %s90
      %s92 = sphi 0, %s90
      %s93 = sphi 0, %s92
      %s107 = sphi 0, %s93
      %s111 = sphi 0, %s111
      %s113 = sphi 0, %s111
      %s114 = sphi 0, %s113
      %s128 = sphi 0, %s114
      %s132 = sphi 0, %s132
      %s134 = sphi 0, %s132
      %s135 = sphi 0, %s134
      %s149 = sphi 0, %s135
      %s153 = sphi 0, %s153
      %s155 = sphi 0, %s153
      %s156 = sphi 0, %s155
      %s170 = sphi 0, %s156
      %s174 = sphi 0, %s174
      %s176 = sphi 0, %s174
      %s177 = sphi 0, %s176
      %s191 = sphi 0, %s177
      %s195 = sphi 0, %s195
      %s197 = sphi 0, %s195
      %s198 = sphi 0, %s197
      %s212 = sphi 0, %s198
      %s216 = sphi 0, %s216
      %s218 = sphi 0, %s216
      %s219 = sphi 0, %s218
      %s233 = sphi 0, %s219
      %s237 = sphi 0, %s237
      %s239 = sphi 0, %s237
      %s240 = sphi 0, %s239
      %s254 = sphi 0, %s240
      %s258 = sphi 0, %s258
      %s260 = sphi 0, %s258
      %s261 = sphi 0, %s260
      %s275 = sphi 0, %s261
      %s281 = sphi 0, %s283
      %s284 = sphi 0, %s281
      %s285 = sphi 0, %s284
      %s301 = sphi 0, %s285
    $region4: #{tpu_custom_call.1} parent=1 // loop_header_branch
      %24 = sbr.rel (%p22) target = $region8
    $region5: #{tpu_custom_call.1} parent=1 // loop_body
      %s26 = ssub.s32 %s21, 1
      %s27 = ssub.s32 %s21, 2
      %s34 = sadd.s32 1, %s29
      %p35 = scmp.ge.s32.totalorder %s34, 1
      %s36 = scalar_select %p35, 0, %s34
      %s37 = sadd.s32 1, %s28
      %s38 = scalar_select %p35, %s37, %s28
      %p39 = scmp.ge.s32.totalorder %s38, 2
      %s40 = scalar_select %p39, 0, %s38
      %s41 = ssub.s32 %s28, %s40
      %s42 = ssub.s32 %s29, %s36
      %s43 = sor.u32 %s41, %s42
      %p44 = scmp.eq.s32.totalorder %s43, 0
      %s46 = sadd.s32 %s45, 1
      %s47 = scalar_select %p44, %s45, %s46
      %p50 = pneg %p44
      %p51 = scmp.eq.s32.totalorder %s21, 1
      %p52 = por %p50, %p51
      %p53 = scmp.ne.s32.totalorder %s45, %s48
      %p54 = scmp.eq.s32.totalorder %s21, 0
      %p55 = por %p53, %p54
      %p56 = scmp.ne.s32.totalorder %s45, %s48
      %p57 = scmp.eq.s32.totalorder %s26, 1
      %p58 = por %p56, %p57
      %p59 = scmp.ne.s32.totalorder %s48, %s49
      %p60 = scmp.eq.s32.totalorder %s26, 0
      %p61 = por %p59, %p60
      %p62 = scmp.ne.s32.totalorder %s48, %s49
      %p63 = scmp.eq.s32.totalorder %s27, 1
      %p64 = por %p62, %p63
      %p66 = scmp.ne.s32.totalorder %s49, %s65
      %p67 = scmp.eq.s32.totalorder %s27, 0
      %p68 = por %p66, %p67
      %s70 = sadd.s32 %s69, 1
      %p73 = scmp.eq.s32.totalorder %s21, 1
      %p74 = scmp.ne.s32.totalorder %s69, %s71
      %p75 = scmp.eq.s32.totalorder %s21, 0
      %p76 = por %p74, %p75
      %p77 = scmp.ne.s32.totalorder %s69, %s71
      %p78 = scmp.eq.s32.totalorder %s26, 1
      %p79 = por %p77, %p78
      %p80 = scmp.ne.s32.totalorder %s71, %s72
      %p81 = scmp.eq.s32.totalorder %s26, 0
      %p82 = por %p80, %p81
      %p83 = scmp.ne.s32.totalorder %s71, %s72
      %p84 = scmp.eq.s32.totalorder %s27, 1
      %p85 = por %p83, %p84
      %p87 = scmp.ne.s32.totalorder %s72, %s86
      %p88 = scmp.eq.s32.totalorder %s27, 0
      %p89 = por %p87, %p88
      %s91 = sadd.s32 %s90, 1
      %p94 = scmp.eq.s32.totalorder %s21, 1
      %p95 = scmp.ne.s32.totalorder %s90, %s92
      %p96 = scmp.eq.s32.totalorder %s21, 0
      %p97 = por %p95, %p96
      %p98 = scmp.ne.s32.totalorder %s90, %s92
      %p99 = scmp.eq.s32.totalorder %s26, 1
      %p100 = por %p98, %p99
      %p101 = scmp.ne.s32.totalorder %s92, %s93
      %p102 = scmp.eq.s32.totalorder %s26, 0
      %p103 = por %p101, %p102
      %p104 = scmp.ne.s32.totalorder %s92, %s93
      %p105 = scmp.eq.s32.totalorder %s27, 1
      %p106 = por %p104, %p105
      %p108 = scmp.ne.s32.totalorder %s93, %s107
      %p109 = scmp.eq.s32.totalorder %s27, 0
      %p110 = por %p108, %p109
      %s112 = sadd.s32 %s111, 1
      %p115 = scmp.eq.s32.totalorder %s21, 1
      %p116 = scmp.ne.s32.totalorder %s111, %s113
      %p117 = scmp.eq.s32.totalorder %s21, 0
      %p118 = por %p116, %p117
      %p119 = scmp.ne.s32.totalorder %s111, %s113
      %p120 = scmp.eq.s32.totalorder %s26, 1
      %p121 = por %p119, %p120
      %p122 = scmp.ne.s32.totalorder %s113, %s114
      %p123 = scmp.eq.s32.totalorder %s26, 0
      %p124 = por %p122, %p123
      %p125 = scmp.ne.s32.totalorder %s113, %s114
      %p126 = scmp.eq.s32.totalorder %s27, 1
      %p127 = por %p125, %p126
      %p129 = scmp.ne.s32.totalorder %s114, %s128
      %p130 = scmp.eq.s32.totalorder %s27, 0
      %p131 = por %p129, %p130
      %s133 = sadd.s32 %s132, 1
      %p136 = scmp.eq.s32.totalorder %s21, 1
      %p137 = scmp.ne.s32.totalorder %s132, %s134
      %p138 = scmp.eq.s32.totalorder %s21, 0
      %p139 = por %p137, %p138
      %p140 = scmp.ne.s32.totalorder %s132, %s134
      %p141 = scmp.eq.s32.totalorder %s26, 1
      %p142 = por %p140, %p141
      %p143 = scmp.ne.s32.totalorder %s134, %s135
      %p144 = scmp.eq.s32.totalorder %s26, 0
      %p145 = por %p143, %p144
      %p146 = scmp.ne.s32.totalorder %s134, %s135
      %p147 = scmp.eq.s32.totalorder %s27, 1
      %p148 = por %p146, %p147
      %p150 = scmp.ne.s32.totalorder %s135, %s149
      %p151 = scmp.eq.s32.totalorder %s27, 0
      %p152 = por %p150, %p151
      %s154 = sadd.s32 %s153, 1
      %p157 = scmp.eq.s32.totalorder %s21, 1
      %p158 = scmp.ne.s32.totalorder %s153, %s155
      %p159 = scmp.eq.s32.totalorder %s21, 0
      %p160 = por %p158, %p159
      %p161 = scmp.ne.s32.totalorder %s153, %s155
      %p162 = scmp.eq.s32.totalorder %s26, 1
      %p163 = por %p161, %p162
      %p164 = scmp.ne.s32.totalorder %s155, %s156
      %p165 = scmp.eq.s32.totalorder %s26, 0
      %p166 = por %p164, %p165
      %p167 = scmp.ne.s32.totalorder %s155, %s156
      %p168 = scmp.eq.s32.totalorder %s27, 1
      %p169 = por %p167, %p168
      %p171 = scmp.ne.s32.totalorder %s156, %s170
      %p172 = scmp.eq.s32.totalorder %s27, 0
      %p173 = por %p171, %p172
      %s175 = sadd.s32 %s174, 1
      %p178 = scmp.eq.s32.totalorder %s21, 1
      %p179 = scmp.ne.s32.totalorder %s174, %s176
      %p180 = scmp.eq.s32.totalorder %s21, 0
      %p181 = por %p179, %p180
      %p182 = scmp.ne.s32.totalorder %s174, %s176
      %p183 = scmp.eq.s32.totalorder %s26, 1
      %p184 = por %p182, %p183
      %p185 = scmp.ne.s32.totalorder %s176, %s177
      %p186 = scmp.eq.s32.totalorder %s26, 0
      %p187 = por %p185, %p186
      %p188 = scmp.ne.s32.totalorder %s176, %s177
      %p189 = scmp.eq.s32.totalorder %s27, 1
      %p190 = por %p188, %p189
      %p192 = scmp.ne.s32.totalorder %s177, %s191
      %p193 = scmp.eq.s32.totalorder %s27, 0
      %p194 = por %p192, %p193
      %s196 = sadd.s32 %s195, 1
      %p199 = scmp.eq.s32.totalorder %s21, 1
      %p200 = scmp.ne.s32.totalorder %s195, %s197
      %p201 = scmp.eq.s32.totalorder %s21, 0
      %p202 = por %p200, %p201
      %p203 = scmp.ne.s32.totalorder %s195, %s197
      %p204 = scmp.eq.s32.totalorder %s26, 1
      %p205 = por %p203, %p204
      %p206 = scmp.ne.s32.totalorder %s197, %s198
      %p207 = scmp.eq.s32.totalorder %s26, 0
      %p208 = por %p206, %p207
      %p209 = scmp.ne.s32.totalorder %s197, %s198
      %p210 = scmp.eq.s32.totalorder %s27, 1
      %p211 = por %p209, %p210
      %p213 = scmp.ne.s32.totalorder %s198, %s212
      %p214 = scmp.eq.s32.totalorder %s27, 0
      %p215 = por %p213, %p214
      %s217 = sadd.s32 %s216, 1
      %p220 = scmp.eq.s32.totalorder %s21, 1
      %p221 = scmp.ne.s32.totalorder %s216, %s218
      %p222 = scmp.eq.s32.totalorder %s21, 0
      %p223 = por %p221, %p222
      %p224 = scmp.ne.s32.totalorder %s216, %s218
      %p225 = scmp.eq.s32.totalorder %s26, 1
      %p226 = por %p224, %p225
      %p227 = scmp.ne.s32.totalorder %s218, %s219
      %p228 = scmp.eq.s32.totalorder %s26, 0
      %p229 = por %p227, %p228
      %p230 = scmp.ne.s32.totalorder %s218, %s219
      %p231 = scmp.eq.s32.totalorder %s27, 1
      %p232 = por %p230, %p231
      %p234 = scmp.ne.s32.totalorder %s219, %s233
      %p235 = scmp.eq.s32.totalorder %s27, 0
      %p236 = por %p234, %p235
      %s238 = sadd.s32 %s237, 1
      %p241 = scmp.eq.s32.totalorder %s21, 1
      %p242 = scmp.ne.s32.totalorder %s237, %s239
      %p243 = scmp.eq.s32.totalorder %s21, 0
      %p244 = por %p242, %p243
      %p245 = scmp.ne.s32.totalorder %s237, %s239
      %p246 = scmp.eq.s32.totalorder %s26, 1
      %p247 = por %p245, %p246
      %p248 = scmp.ne.s32.totalorder %s239, %s240
      %p249 = scmp.eq.s32.totalorder %s26, 0
      %p250 = por %p248, %p249
      %p251 = scmp.ne.s32.totalorder %s239, %s240
      %p252 = scmp.eq.s32.totalorder %s27, 1
      %p253 = por %p251, %p252
      %p255 = scmp.ne.s32.totalorder %s240, %s254
      %p256 = scmp.eq.s32.totalorder %s27, 0
      %p257 = por %p255, %p256
      %s259 = sadd.s32 %s258, 1
      %p262 = scmp.eq.s32.totalorder %s21, 1
      %p263 = scmp.ne.s32.totalorder %s258, %s260
      %p264 = scmp.eq.s32.totalorder %s21, 0
      %p265 = por %p263, %p264
      %p266 = scmp.ne.s32.totalorder %s258, %s260
      %p267 = scmp.eq.s32.totalorder %s26, 1
      %p268 = por %p266, %p267
      %p269 = scmp.ne.s32.totalorder %s260, %s261
      %p270 = scmp.eq.s32.totalorder %s26, 0
      %p271 = por %p269, %p270
      %p272 = scmp.ne.s32.totalorder %s260, %s261
      %p273 = scmp.eq.s32.totalorder %s27, 1
      %p274 = por %p272, %p273
      %p276 = scmp.ne.s32.totalorder %s261, %s275
      %p277 = scmp.eq.s32.totalorder %s27, 0
      %p278 = por %p276, %p277
      %s279 = ssub.s32 %s28, %s40
      %p280 = scmp.eq.s32.totalorder %s279, 0
      %s282 = sadd.s32 %s281, 1
      %s283 = scalar_select %p280, %s281, %s282
      %p286 = pneg %p280
      %p287 = scmp.eq.s32.totalorder %s21, 1
      %p288 = por %p286, %p287
      %p289 = scmp.ne.s32.totalorder %s281, %s284
      %p290 = scmp.eq.s32.totalorder %s21, 0
      %p291 = por %p289, %p290
      %p292 = scmp.ne.s32.totalorder %s281, %s284
      %p293 = scmp.eq.s32.totalorder %s26, 1
      %p294 = por %p292, %p293
      %p295 = scmp.ne.s32.totalorder %s284, %s285
      %p296 = scmp.eq.s32.totalorder %s26, 0
      %p297 = por %p295, %p296
      %p298 = scmp.ne.s32.totalorder %s284, %s285
      %p299 = scmp.eq.s32.totalorder %s27, 1
      %p300 = por %p298, %p299
      %p302 = scmp.ne.s32.totalorder %s285, %s301
      %p303 = scmp.eq.s32.totalorder %s27, 0
      %p304 = por %p302, %p303
      %p305 = scmp.le.s32.totalorder 1, %s21
      %p306 = scmp.lt.s32.totalorder %s21, 3
      %p307 = pnand %p305, %p306
      %p308 = pneg %p307
      // Predicated region
      $region9: #{tpu_custom_call.1} parent=5 // pred_check
        _
      $region10: #{tpu_custom_call.1} parent=5 // pred_check_branch
        %310 = sbr.rel (%p307) target = $region12
      $region11: #{tpu_custom_call.1} parent=5 // pred_region
        %s311 = ssub.s32 %s21, 1
        // Predicated region
        $region13: #{tpu_custom_call.1} parent=11 // pred_check
          %p312 = pneg %p82
        $region14: #{tpu_custom_call.1} parent=11 // pred_check_branch
          %314 = sbr.rel (%p312) target = $region16
        $region15: #{tpu_custom_call.1} parent=11 // pred_region
          _
        $region16: #{tpu_custom_call.1} parent=11 // pred_fallthru
          _
        // Predicated region
        $region17: #{tpu_custom_call.1} parent=11 // pred_check
          %p315 = pneg %p103
        $region18: #{tpu_custom_call.1} parent=11 // pred_check_branch
          %317 = sbr.rel (%p315) target = $region20
        $region19: #{tpu_custom_call.1} parent=11 // pred_region
          _
        $region20: #{tpu_custom_call.1} parent=11 // pred_fallthru
          _
        // Predicated region
        $region21: #{tpu_custom_call.1} parent=11 // pred_check
          %p318 = pneg %p124
        $region22: #{tpu_custom_call.1} parent=11 // pred_check_branch
          %320 = sbr.rel (%p318) target = $region24
        $region23: #{tpu_custom_call.1} parent=11 // pred_region
          _
        $region24: #{tpu_custom_call.1} parent=11 // pred_fallthru
          _
        // Predicated region
        $region25: #{tpu_custom_call.1} parent=11 // pred_check
          %p321 = pneg %p145
        $region26: #{tpu_custom_call.1} parent=11 // pred_check_branch
          %323 = sbr.rel (%p321) target = $region28
        $region27: #{tpu_custom_call.1} parent=11 // pred_region
          _
        $region28: #{tpu_custom_call.1} parent=11 // pred_fallthru
          _
        // Predicated region
        $region29: #{tpu_custom_call.1} parent=11 // pred_check
          %p324 = pneg %p166
        $region30: #{tpu_custom_call.1} parent=11 // pred_check_branch
          %326 = sbr.rel (%p324) target = $region32
        $region31: #{tpu_custom_call.1} parent=11 // pred_region
          %s328 = ssub.s32 2048, 2048
          %329 = vsyncadd [#allocation4], %s328
          %s330 = sshll.u32 [#allocation3], 4
          %s331 = int_to_ptr.vmem [resolvable:$true] %s330
          %336 = dma.hbm_to_vmem [thread:$0]  %s5, 2048, %s331, [#allocation4], 64, 64, 4
        $region32: #{tpu_custom_call.1} parent=11 // pred_fallthru
          _
        // Predicated region
        $region33: #{tpu_custom_call.1} parent=11 // pred_check
          %p337 = pneg %p187
        $region34: #{tpu_custom_call.1} parent=11 // pred_check_branch
          %339 = sbr.rel (%p337) target = $region36
        $region35: #{tpu_custom_call.1} parent=11 // pred_region
          _
        $region36: #{tpu_custom_call.1} parent=11 // pred_fallthru
          _
        // Predicated region
        $region37: #{tpu_custom_call.1} parent=11 // pred_check
          %p340 = pneg %p208
        $region38: #{tpu_custom_call.1} parent=11 // pred_check_branch
          %342 = sbr.rel (%p340) target = $region40
        $region39: #{tpu_custom_call.1} parent=11 // pred_region
          _
        $region40: #{tpu_custom_call.1} parent=11 // pred_fallthru
          _
        // Predicated region
        $region41: #{tpu_custom_call.1} parent=11 // pred_check
          %p343 = pneg %p229
        $region42: #{tpu_custom_call.1} parent=11 // pred_check_branch
          %345 = sbr.rel (%p343) target = $region44
        $region43: #{tpu_custom_call.1} parent=11 // pred_region
          _
        $region44: #{tpu_custom_call.1} parent=11 // pred_fallthru
          _
        // Predicated region
        $region45: #{tpu_custom_call.1} parent=11 // pred_check
          %p346 = pneg %p250
        $region46: #{tpu_custom_call.1} parent=11 // pred_check_branch
          %348 = sbr.rel (%p346) target = $region48
        $region47: #{tpu_custom_call.1} parent=11 // pred_region
          _
        $region48: #{tpu_custom_call.1} parent=11 // pred_fallthru
          _
        // Predicated region
        $region49: #{tpu_custom_call.1} parent=11 // pred_check
          %p349 = pneg %p271
        $region50: #{tpu_custom_call.1} parent=11 // pred_check_branch
          %351 = sbr.rel (%p349) target = $region52
        $region51: #{tpu_custom_call.1} parent=11 // pred_region
          _
        $region52: #{tpu_custom_call.1} parent=11 // pred_fallthru
          _
      $region12: #{tpu_custom_call.1} parent=5 // pred_fallthru
        _
      %p352 = scmp.lt.s32.totalorder %s21, 2
      // Predicated region
      $region53: #{tpu_custom_call.1} parent=5 // pred_check
        %p353 = pneg %p352
      $region54: #{tpu_custom_call.1} parent=5 // pred_check_branch
        %355 = sbr.rel (%p353) target = $region56
      $region55: #{tpu_custom_call.1} parent=5 // pred_region
        // Predicated region
        $region57: #{tpu_custom_call.1} parent=55 // pred_check
          %p356 = pneg %p55
        $region58: #{tpu_custom_call.1} parent=55 // pred_check_branch
          %358 = sbr.rel (%p356) target = $region60
        $region59: #{tpu_custom_call.1} parent=55 // pred_region
          %p359 = scmp.lt.s32.totalorder %s28, 1
          %s360 = scalar_select %p359, %s28, 1
          %p361 = scmp.lt.s32.totalorder %s29, 0
          %s362 = scalar_select %p361, %s29, 0
          %s363 = sadd.s32 %s362, %s360
          %s364 = smul.addr %s363, 4
          %s365 = scalar_lea.vmem %s0, %s364
        $region60: #{tpu_custom_call.1} parent=55 // pred_fallthru
          _
      $region56: #{tpu_custom_call.1} parent=5 // pred_fallthru
        _
      %p366 = scmp.le.s32.totalorder 1, %s21
      %p367 = scmp.lt.s32.totalorder %s21, 3
      %p368 = pnand %p366, %p367
      %p369 = pneg %p368
      // Predicated region
      $region61: #{tpu_custom_call.1} parent=5 // pred_check
        _
      $region62: #{tpu_custom_call.1} parent=5 // pred_check_branch
        %371 = sbr.rel (%p368) target = $region64
      $region63: #{tpu_custom_call.1} parent=5 // pred_region
        %s372 = ssub.s32 %s21, 1
        // Predicated region
        $region65: #{tpu_custom_call.1} parent=63 // pred_check
          %p373 = pneg %p166
        $region66: #{tpu_custom_call.1} parent=63 // pred_check_branch
          %375 = sbr.rel (%p373) target = $region68
        $region67: #{tpu_custom_call.1} parent=63 // pred_region
          %376 = dma.done [#allocation4], 2048
        $region68: #{tpu_custom_call.1} parent=63 // pred_fallthru
          _
        %p377 = scmp.lt.s32.totalorder %s30, 1
        %s378 = scalar_select %p377, %s30, 1
        %p379 = scmp.lt.s32.totalorder %s31, 0
        %s380 = scalar_select %p379, %s31, 0
        %s381 = sadd.s32 %s380, %s378
        %s382 = smul.addr %s381, 4
        %s383 = scalar_lea.vmem %s0, %s382
        %p384 = pneg %p61
        %p385 = pneg %p58
        %p386 = pneg %p82
        %p387 = pneg %p79
        %p388 = pneg %p103
        %p389 = pneg %p100
        %p390 = pneg %p124
        %p391 = pneg %p121
        %p392 = pneg %p145
        %p393 = pneg %p142
        %p394 = pneg %p166
        %p395 = pneg %p163
        %p396 = pneg %p187
        %p397 = pneg %p184
        %p398 = pneg %p208
        %p399 = pneg %p205
        %p400 = pneg %p229
        %p401 = pneg %p226
        %p402 = pneg %p250
        %p403 = pneg %p247
        %p404 = pneg %p271
        %p405 = pneg %p268
        %p406 = pneg %p297
        %p407 = pneg %p294
        %s408 = sand.u32 %s284, 1
        %s409 = scalar_lea.sflag [#allocation5], %s408
        %s410 = sand.u32 %s284, 1
        %s411 = scalar_lea.vmem [#allocation6], %s410
        %p412 = scmp.lt.s32.totalorder %s30, 1
        %s413 = scalar_select %p412, %s30, 1
        %p414 = scmp.lt.s32.totalorder %s31, 0
        %s415 = scalar_select %p414, %s31, 0
        %s416 = sadd.s32 %s415, %s413
        %s417 = smul.addr %s416, 4
        %s418 = scalar_lea.vmem %s0, %s417
        %p420 = scmp.eq.s32.totalorder %s31, 0
        // Predicated region
        $region69: #{tpu_custom_call.1} parent=63 // pred_check
          %p421 = pneg %p420
        $region70: #{tpu_custom_call.1} parent=63 // pred_check_branch
          %423 = sbr.rel (%p421) target = $region72
        $region71: #{tpu_custom_call.1} parent=63 // pred_region
          %vm424 = vcmask 7168
          %425 = vst.msk [vmem:[#allocation2] sm:$0xff] %vm424, -inf
          %426 = vst.msk [vmem:[#allocation2 + $0x8] sm:$0xff] %vm424, -inf
          %427 = vst.msk [vmem:[#allocation2 + $0x10] sm:$0xff] %vm424, -inf
          %428 = vst.msk [vmem:[#allocation2 + $0x18] sm:$0xff] %vm424, -inf
          %429 = vst.msk [vmem:[#allocation2 + $0x20] sm:$0xff] %vm424, -inf
          %430 = vst.msk [vmem:[#allocation2 + $0x28] sm:$0xff] %vm424, -inf
          %431 = vst.msk [vmem:[#allocation2 + $0x30] sm:$0xff] %vm424, -inf
          %432 = vst.msk [vmem:[#allocation2 + $0x38] sm:$0xff] %vm424, -inf
          %433 = vst.msk [vmem:[#allocation2 + $0x40] sm:$0xff] %vm424, -inf
          %434 = vst.msk [vmem:[#allocation2 + $0x48] sm:$0xff] %vm424, -inf
          %435 = vst.msk [vmem:[#allocation2 + $0x50] sm:$0xff] %vm424, -inf
          %436 = vst.msk [vmem:[#allocation2 + $0x58] sm:$0xff] %vm424, -inf
          %437 = vst.msk [vmem:[#allocation2 + $0x60] sm:$0xff] %vm424, -inf
          %438 = vst.msk [vmem:[#allocation2 + $0x68] sm:$0xff] %vm424, -inf
          %439 = vst.msk [vmem:[#allocation2 + $0x70] sm:$0xff] %vm424, -inf
          %440 = vst.msk [vmem:[#allocation2 + $0x78] sm:$0xff] %vm424, -inf
          %441 = vst.msk [vmem:[#allocation2 + $0x80] sm:$0xff] %vm424, -inf
          %442 = vst.msk [vmem:[#allocation2 + $0x88] sm:$0xff] %vm424, -inf
          %443 = vst.msk [vmem:[#allocation2 + $0x90] sm:$0xff] %vm424, -inf
          %444 = vst.msk [vmem:[#allocation2 + $0x98] sm:$0xff] %vm424, -inf
          %445 = vst.msk [vmem:[#allocation2 + $0xa0] sm:$0xff] %vm424, -inf
          %446 = vst.msk [vmem:[#allocation2 + $0xa8] sm:$0xff] %vm424, -inf
          %447 = vst.msk [vmem:[#allocation2 + $0xb0] sm:$0xff] %vm424, -inf
          %448 = vst.msk [vmem:[#allocation2 + $0xb8] sm:$0xff] %vm424, -inf
          %449 = vst.msk [vmem:[#allocation2 + $0xc0] sm:$0xff] %vm424, -inf
          %450 = vst.msk [vmem:[#allocation2 + $0xc8] sm:$0xff] %vm424, -inf
          %451 = vst.msk [vmem:[#allocation2 + $0xd0] sm:$0xff] %vm424, -inf
          %452 = vst.msk [vmem:[#allocation2 + $0xd8] sm:$0xff] %vm424, -inf
          %453 = vst.msk [vmem:[#allocation2 + $0xe0] sm:$0xff] %vm424, -inf
          %454 = vst.msk [vmem:[#allocation2 + $0xe8] sm:$0xff] %vm424, -inf
          %455 = vst.msk [vmem:[#allocation2 + $0xf0] sm:$0xff] %vm424, -inf
          %456 = vst.msk [vmem:[#allocation2 + $0xf8] sm:$0xff] %vm424, -inf
          %457 = vst.msk [vmem:[#allocation2 + $0x100] sm:$0xff] %vm424, -inf
          %458 = vst.msk [vmem:[#allocation2 + $0x108] sm:$0xff] %vm424, -inf
          %459 = vst.msk [vmem:[#allocation2 + $0x110] sm:$0xff] %vm424, -inf
          %460 = vst.msk [vmem:[#allocation2 + $0x118] sm:$0xff] %vm424, -inf
          %461 = vst.msk [vmem:[#allocation2 + $0x120] sm:$0xff] %vm424, -inf
          %462 = vst.msk [vmem:[#allocation2 + $0x128] sm:$0xff] %vm424, -inf
          %463 = vst.msk [vmem:[#allocation2 + $0x130] sm:$0xff] %vm424, -inf
          %464 = vst.msk [vmem:[#allocation2 + $0x138] sm:$0xff] %vm424, -inf
          %465 = vst.msk [vmem:[#allocation2 + $0x140] sm:$0xff] %vm424, -inf
          %466 = vst.msk [vmem:[#allocation2 + $0x148] sm:$0xff] %vm424, -inf
          %467 = vst.msk [vmem:[#allocation2 + $0x150] sm:$0xff] %vm424, -inf
          %468 = vst.msk [vmem:[#allocation2 + $0x158] sm:$0xff] %vm424, -inf
          %469 = vst.msk [vmem:[#allocation2 + $0x160] sm:$0xff] %vm424, -inf
          %470 = vst.msk [vmem:[#allocation2 + $0x168] sm:$0xff] %vm424, -inf
          %471 = vst.msk [vmem:[#allocation2 + $0x170] sm:$0xff] %vm424, -inf
          %472 = vst.msk [vmem:[#allocation2 + $0x178] sm:$0xff] %vm424, -inf
          %473 = vst.msk [vmem:[#allocation2 + $0x180] sm:$0xff] %vm424, -inf
          %474 = vst.msk [vmem:[#allocation2 + $0x188] sm:$0xff] %vm424, -inf
          %475 = vst.msk [vmem:[#allocation2 + $0x190] sm:$0xff] %vm424, -inf
          %476 = vst.msk [vmem:[#allocation2 + $0x198] sm:$0xff] %vm424, -inf
          %477 = vst.msk [vmem:[#allocation2 + $0x1a0] sm:$0xff] %vm424, -inf
          %478 = vst.msk [vmem:[#allocation2 + $0x1a8] sm:$0xff] %vm424, -inf
          %479 = vst.msk [vmem:[#allocation2 + $0x1b0] sm:$0xff] %vm424, -inf
          %480 = vst.msk [vmem:[#allocation2 + $0x1b8] sm:$0xff] %vm424, -inf
          %481 = vst.msk [vmem:[#allocation2 + $0x1c0] sm:$0xff] %vm424, -inf
          %482 = vst.msk [vmem:[#allocation2 + $0x1c8] sm:$0xff] %vm424, -inf
          %483 = vst.msk [vmem:[#allocation2 + $0x1d0] sm:$0xff] %vm424, -inf
          %484 = vst.msk [vmem:[#allocation2 + $0x1d8] sm:$0xff] %vm424, -inf
          %485 = vst.msk [vmem:[#allocation2 + $0x1e0] sm:$0xff] %vm424, -inf
          %486 = vst.msk [vmem:[#allocation2 + $0x1e8] sm:$0xff] %vm424, -inf
          %487 = vst.msk [vmem:[#allocation2 + $0x1f0] sm:$0xff] %vm424, -inf
          %488 = vst.msk [vmem:[#allocation2 + $0x1f8] sm:$0xff] %vm424, -inf
        $region72: #{tpu_custom_call.1} parent=63 // pred_fallthru
          _
        %v489 = vld [vmem:[%s1] sm:$0xff]
        %v490 = vld [vmem:[%s1 + $0x8] sm:$0xff]
        %v491 = vld [vmem:[%s1 + $0x10] sm:$0xff]
        %v492 = vld [vmem:[%s1 + $0x18] sm:$0xff]
        %v493 = vld [vmem:[%s1 + $0x20] sm:$0xff]
        %v494 = vld [vmem:[%s1 + $0x28] sm:$0xff]
        %v495 = vld [vmem:[%s1 + $0x30] sm:$0xff]
        %v496 = vld [vmem:[%s1 + $0x38] sm:$0xff]
        %v497 = vld [vmem:[%s3] sm:$0xf]
        %v498 = vld [vmem:[%s3 + $0x4] sm:$0xf]
        %v499 = vld [vmem:[%s3 + $0x8] sm:$0xf]
        %v500 = vld [vmem:[%s3 + $0xc] sm:$0xf]
        %v501 = vld [vmem:[%s3 + $0x10] sm:$0xf]
        %v502 = vld [vmem:[%s3 + $0x14] sm:$0xf]
        %v503 = vld [vmem:[%s3 + $0x18] sm:$0xf]
        %v504 = vld [vmem:[%s3 + $0x1c] sm:$0xf]
        %v505 = vld [vmem:[%s3 + $0x20] sm:$0xf]
        %v506 = vld [vmem:[%s3 + $0x24] sm:$0xf]
        %v507 = vld [vmem:[%s3 + $0x28] sm:$0xf]
        %v508 = vld [vmem:[%s3 + $0x2c] sm:$0xf]
        %v509 = vld [vmem:[%s3 + $0x30] sm:$0xf]
        %v510 = vld [vmem:[%s3 + $0x34] sm:$0xf]
        %v511 = vld [vmem:[%s3 + $0x38] sm:$0xf]
        %v512 = vld [vmem:[%s3 + $0x3c] sm:$0xf]
        %v513 = vld [vmem:[#allocation3] sm:$0xf]
        %v514 = vld [vmem:[#allocation3 + $0x4] sm:$0xf]
        %v515 = vld [vmem:[#allocation3 + $0x8] sm:$0xf]
        %v516 = vld [vmem:[#allocation3 + $0xc] sm:$0xf]
        %v517 = vld [vmem:[#allocation3 + $0x10] sm:$0xf]
        %v518 = vld [vmem:[#allocation3 + $0x14] sm:$0xf]
        %v519 = vld [vmem:[#allocation3 + $0x18] sm:$0xf]
        %v520 = vld [vmem:[#allocation3 + $0x1c] sm:$0xf]
        %v521 = vld [vmem:[#allocation3 + $0x20] sm:$0xf]
        %v522 = vld [vmem:[#allocation3 + $0x24] sm:$0xf]
        %v523 = vld [vmem:[#allocation3 + $0x28] sm:$0xf]
        %v524 = vld [vmem:[#allocation3 + $0x2c] sm:$0xf]
        %v525 = vld [vmem:[#allocation3 + $0x30] sm:$0xf]
        %v526 = vld [vmem:[#allocation3 + $0x34] sm:$0xf]
        %v527 = vld [vmem:[#allocation3 + $0x38] sm:$0xf]
        %v528 = vld [vmem:[#allocation3 + $0x3c] sm:$0xf]
        %v529 = vld [vmem:[#allocation3 + $0x40] sm:$0xf]
        %v530 = vld [vmem:[#allocation3 + $0x44] sm:$0xf]
        %v531 = vld [vmem:[#allocation3 + $0x48] sm:$0xf]
        %v532 = vld [vmem:[#allocation3 + $0x4c] sm:$0xf]
        %v533 = vld [vmem:[#allocation3 + $0x50] sm:$0xf]
        %v534 = vld [vmem:[#allocation3 + $0x54] sm:$0xf]
        %v535 = vld [vmem:[#allocation3 + $0x58] sm:$0xf]
        %v536 = vld [vmem:[#allocation3 + $0x5c] sm:$0xf]
        %v537 = vld [vmem:[#allocation3 + $0x60] sm:$0xf]
        %v538 = vld [vmem:[#allocation3 + $0x64] sm:$0xf]
        %v539 = vld [vmem:[#allocation3 + $0x68] sm:$0xf]
        %v540 = vld [vmem:[#allocation3 + $0x6c] sm:$0xf]
        %v541 = vld [vmem:[#allocation3 + $0x70] sm:$0xf]
        %v542 = vld [vmem:[#allocation3 + $0x74] sm:$0xf]
        %v543 = vld [vmem:[#allocation3 + $0x78] sm:$0xf]
        %v544 = vld [vmem:[#allocation3 + $0x7c] sm:$0xf]
        %v545 = vld [vmem:[%s7] sm:$0xff]
        %v546 = vld [vmem:[%s7 + $0x8] sm:$0xff]
        %v547 = vld [vmem:[%s7 + $0x10] sm:$0xff]
        %v548 = vld [vmem:[%s7 + $0x18] sm:$0xff]
        %v549 = vld [vmem:[%s7 + $0x20] sm:$0xff]
        %v550 = vld [vmem:[%s7 + $0x28] sm:$0xff]
        %v551 = vld [vmem:[%s7 + $0x30] sm:$0xff]
        %v552 = vld [vmem:[%s7 + $0x38] sm:$0xff]
        %v553 = vld [vmem:[%s7 + $0x40] sm:$0xff]
        %v554 = vld [vmem:[%s7 + $0x48] sm:$0xff]
        %v555 = vld [vmem:[%s7 + $0x50] sm:$0xff]
        %v556 = vld [vmem:[%s7 + $0x58] sm:$0xff]
        %v557 = vld [vmem:[%s7 + $0x60] sm:$0xff]
        %v558 = vld [vmem:[%s7 + $0x68] sm:$0xff]
        %v559 = vld [vmem:[%s7 + $0x70] sm:$0xff]
        %v560 = vld [vmem:[%s7 + $0x78] sm:$0xff]
        %v561 = vld [vmem:[%s7 + $0x80] sm:$0xff]
        %v562 = vld [vmem:[%s7 + $0x88] sm:$0xff]
        %v563 = vld [vmem:[%s7 + $0x90] sm:$0xff]
        %v564 = vld [vmem:[%s7 + $0x98] sm:$0xff]
        %v565 = vld [vmem:[%s7 + $0xa0] sm:$0xff]
        %v566 = vld [vmem:[%s7 + $0xa8] sm:$0xff]
        %v567 = vld [vmem:[%s7 + $0xb0] sm:$0xff]
        %v568 = vld [vmem:[%s7 + $0xb8] sm:$0xff]
        %v569 = vld [vmem:[%s7 + $0xc0] sm:$0xff]
        %v570 = vld [vmem:[%s7 + $0xc8] sm:$0xff]
        %v571 = vld [vmem:[%s7 + $0xd0] sm:$0xff]
        %v572 = vld [vmem:[%s7 + $0xd8] sm:$0xff]
        %v573 = vld [vmem:[%s7 + $0xe0] sm:$0xff]
        %v574 = vld [vmem:[%s7 + $0xe8] sm:$0xff]
        %v575 = vld [vmem:[%s7 + $0xf0] sm:$0xff]
        %v576 = vld [vmem:[%s7 + $0xf8] sm:$0xff]
        %v577 = vld [vmem:[%s7 + $0x100] sm:$0xff]
        %v578 = vld [vmem:[%s7 + $0x108] sm:$0xff]
        %v579 = vld [vmem:[%s7 + $0x110] sm:$0xff]
        %v580 = vld [vmem:[%s7 + $0x118] sm:$0xff]
        %v581 = vld [vmem:[%s7 + $0x120] sm:$0xff]
        %v582 = vld [vmem:[%s7 + $0x128] sm:$0xff]
        %v583 = vld [vmem:[%s7 + $0x130] sm:$0xff]
        %v584 = vld [vmem:[%s7 + $0x138] sm:$0xff]
        %v585 = vld [vmem:[%s7 + $0x140] sm:$0xff]
        %v586 = vld [vmem:[%s7 + $0x148] sm:$0xff]
        %v587 = vld [vmem:[%s7 + $0x150] sm:$0xff]
        %v588 = vld [vmem:[%s7 + $0x158] sm:$0xff]
        %v589 = vld [vmem:[%s7 + $0x160] sm:$0xff]
        %v590 = vld [vmem:[%s7 + $0x168] sm:$0xff]
        %v591 = vld [vmem:[%s7 + $0x170] sm:$0xff]
        %v592 = vld [vmem:[%s7 + $0x178] sm:$0xff]
        %v593 = vld [vmem:[%s7 + $0x180] sm:$0xff]
        %v594 = vld [vmem:[%s7 + $0x188] sm:$0xff]
        %v595 = vld [vmem:[%s7 + $0x190] sm:$0xff]
        %v596 = vld [vmem:[%s7 + $0x198] sm:$0xff]
        %v597 = vld [vmem:[%s7 + $0x1a0] sm:$0xff]
        %v598 = vld [vmem:[%s7 + $0x1a8] sm:$0xff]
        %v599 = vld [vmem:[%s7 + $0x1b0] sm:$0xff]
        %v600 = vld [vmem:[%s7 + $0x1b8] sm:$0xff]
        %v601 = vld [vmem:[%s7 + $0x1c0] sm:$0xff]
        %v602 = vld [vmem:[%s7 + $0x1c8] sm:$0xff]
        %v603 = vld [vmem:[%s7 + $0x1d0] sm:$0xff]
        %v604 = vld [vmem:[%s7 + $0x1d8] sm:$0xff]
        %v605 = vld [vmem:[%s7 + $0x1e0] sm:$0xff]
        %v606 = vld [vmem:[%s7 + $0x1e8] sm:$0xff]
        %v607 = vld [vmem:[%s7 + $0x1f0] sm:$0xff]
        %v608 = vld [vmem:[%s7 + $0x1f8] sm:$0xff]
        %v609 = vld [vmem:[%s2] sm:$0xff]
        %v610 = vld [vmem:[%s2 + $0x8] sm:$0xff]
        %v611 = vld [vmem:[%s2 + $0x10] sm:$0xff]
        %v612 = vld [vmem:[%s2 + $0x18] sm:$0xff]
        %v613 = vld [vmem:[%s2 + $0x20] sm:$0xff]
        %v614 = vld [vmem:[%s2 + $0x28] sm:$0xff]
        %v615 = vld [vmem:[%s2 + $0x30] sm:$0xff]
        %v616 = vld [vmem:[%s2 + $0x38] sm:$0xff]
        %v617 = vld [vmem:[%s4] sm:$0xff]
        %v618 = vld [vmem:[%s4 + $0x8] sm:$0xff]
        %v619 = vld [vmem:[%s4 + $0x10] sm:$0xff]
        %v620 = vld [vmem:[%s4 + $0x18] sm:$0xff]
        %v621 = vld [vmem:[%s4 + $0x20] sm:$0xff]
        %v622 = vld [vmem:[%s4 + $0x28] sm:$0xff]
        %v623 = vld [vmem:[%s4 + $0x30] sm:$0xff]
        %v624 = vld [vmem:[%s4 + $0x38] sm:$0xff]
        %v625 = vld [vmem:[%s4 + $0x40] sm:$0xff]
        %v626 = vld [vmem:[%s4 + $0x48] sm:$0xff]
        %v627 = vld [vmem:[%s4 + $0x50] sm:$0xff]
        %v628 = vld [vmem:[%s4 + $0x58] sm:$0xff]
        %v629 = vld [vmem:[%s4 + $0x60] sm:$0xff]
        %v630 = vld [vmem:[%s4 + $0x68] sm:$0xff]
        %v631 = vld [vmem:[%s4 + $0x70] sm:$0xff]
        %v632 = vld [vmem:[%s4 + $0x78] sm:$0xff]
        %v633 = vld [vmem:[%s6] sm:$0xff]
        %v634 = vld [vmem:[%s6 + $0x8] sm:$0xff]
        %v635 = vld [vmem:[%s6 + $0x10] sm:$0xff]
        %v636 = vld [vmem:[%s6 + $0x18] sm:$0xff]
        %v637 = vld [vmem:[%s6 + $0x20] sm:$0xff]
        %v638 = vld [vmem:[%s6 + $0x28] sm:$0xff]
        %v639 = vld [vmem:[%s6 + $0x30] sm:$0xff]
        %v640 = vld [vmem:[%s6 + $0x38] sm:$0xff]
        %v641 = vld [vmem:[%s6 + $0x40] sm:$0xff]
        %v642 = vld [vmem:[%s6 + $0x48] sm:$0xff]
        %v643 = vld [vmem:[%s6 + $0x50] sm:$0xff]
        %v644 = vld [vmem:[%s6 + $0x58] sm:$0xff]
        %v645 = vld [vmem:[%s6 + $0x60] sm:$0xff]
        %v646 = vld [vmem:[%s6 + $0x68] sm:$0xff]
        %v647 = vld [vmem:[%s6 + $0x70] sm:$0xff]
        %v648 = vld [vmem:[%s6 + $0x78] sm:$0xff]
        %v649 = vld [vmem:[%s6 + $0x80] sm:$0xff]
        %v650 = vld [vmem:[%s6 + $0x88] sm:$0xff]
        %v651 = vld [vmem:[%s6 + $0x90] sm:$0xff]
        %v652 = vld [vmem:[%s6 + $0x98] sm:$0xff]
        %v653 = vld [vmem:[%s6 + $0xa0] sm:$0xff]
        %v654 = vld [vmem:[%s6 + $0xa8] sm:$0xff]
        %v655 = vld [vmem:[%s6 + $0xb0] sm:$0xff]
        %v656 = vld [vmem:[%s6 + $0xb8] sm:$0xff]
        %v657 = vld [vmem:[%s6 + $0xc0] sm:$0xff]
        %v658 = vld [vmem:[%s6 + $0xc8] sm:$0xff]
        %v659 = vld [vmem:[%s6 + $0xd0] sm:$0xff]
        %v660 = vld [vmem:[%s6 + $0xd8] sm:$0xff]
        %v661 = vld [vmem:[%s6 + $0xe0] sm:$0xff]
        %v662 = vld [vmem:[%s6 + $0xe8] sm:$0xff]
        %v663 = vld [vmem:[%s6 + $0xf0] sm:$0xff]
        %v664 = vld [vmem:[%s6 + $0xf8] sm:$0xff]
        %v665 = vld [vmem:[%s8] sm:$0xff]
        %v666 = vld [vmem:[%s8 + $0x8] sm:$0xff]
        %v667 = vld [vmem:[%s8 + $0x10] sm:$0xff]
        %v668 = vld [vmem:[%s8 + $0x18] sm:$0xff]
        %v669 = vld [vmem:[%s8 + $0x20] sm:$0xff]
        %v670 = vld [vmem:[%s8 + $0x28] sm:$0xff]
        %v671 = vld [vmem:[%s8 + $0x30] sm:$0xff]
        %v672 = vld [vmem:[%s8 + $0x38] sm:$0xff]
        %v673 = vld [vmem:[%s8 + $0x40] sm:$0xff]
        %v674 = vld [vmem:[%s8 + $0x48] sm:$0xff]
        %v675 = vld [vmem:[%s8 + $0x50] sm:$0xff]
        %v676 = vld [vmem:[%s8 + $0x58] sm:$0xff]
        %v677 = vld [vmem:[%s8 + $0x60] sm:$0xff]
        %v678 = vld [vmem:[%s8 + $0x68] sm:$0xff]
        %v679 = vld [vmem:[%s8 + $0x70] sm:$0xff]
        %v680 = vld [vmem:[%s8 + $0x78] sm:$0xff]
        %v681 = vld [vmem:[%s8 + $0x80] sm:$0xff]
        %v682 = vld [vmem:[%s8 + $0x88] sm:$0xff]
        %v683 = vld [vmem:[%s8 + $0x90] sm:$0xff]
        %v684 = vld [vmem:[%s8 + $0x98] sm:$0xff]
        %v685 = vld [vmem:[%s8 + $0xa0] sm:$0xff]
        %v686 = vld [vmem:[%s8 + $0xa8] sm:$0xff]
        %v687 = vld [vmem:[%s8 + $0xb0] sm:$0xff]
        %v688 = vld [vmem:[%s8 + $0xb8] sm:$0xff]
        %v689 = vld [vmem:[%s8 + $0xc0] sm:$0xff]
        %v690 = vld [vmem:[%s8 + $0xc8] sm:$0xff]
        %v691 = vld [vmem:[%s8 + $0xd0] sm:$0xff]
        %v692 = vld [vmem:[%s8 + $0xd8] sm:$0xff]
        %v693 = vld [vmem:[%s8 + $0xe0] sm:$0xff]
        %v694 = vld [vmem:[%s8 + $0xe8] sm:$0xff]
        %v695 = vld [vmem:[%s8 + $0xf0] sm:$0xff]
        %v696 = vld [vmem:[%s8 + $0xf8] sm:$0xff]
        %v697 = vld [vmem:[%s8 + $0x100] sm:$0xff]
        %v698 = vld [vmem:[%s8 + $0x108] sm:$0xff]
        %v699 = vld [vmem:[%s8 + $0x110] sm:$0xff]
        %v700 = vld [vmem:[%s8 + $0x118] sm:$0xff]
        %v701 = vld [vmem:[%s8 + $0x120] sm:$0xff]
        %v702 = vld [vmem:[%s8 + $0x128] sm:$0xff]
        %v703 = vld [vmem:[%s8 + $0x130] sm:$0xff]
        %v704 = vld [vmem:[%s8 + $0x138] sm:$0xff]
        %v705 = vld [vmem:[%s8 + $0x140] sm:$0xff]
        %v706 = vld [vmem:[%s8 + $0x148] sm:$0xff]
        %v707 = vld [vmem:[%s8 + $0x150] sm:$0xff]
        %v708 = vld [vmem:[%s8 + $0x158] sm:$0xff]
        %v709 = vld [vmem:[%s8 + $0x160] sm:$0xff]
        %v710 = vld [vmem:[%s8 + $0x168] sm:$0xff]
        %v711 = vld [vmem:[%s8 + $0x170] sm:$0xff]
        %v712 = vld [vmem:[%s8 + $0x178] sm:$0xff]
        %v713 = vld [vmem:[%s8 + $0x180] sm:$0xff]
        %v714 = vld [vmem:[%s8 + $0x188] sm:$0xff]
        %v715 = vld [vmem:[%s8 + $0x190] sm:$0xff]
        %v716 = vld [vmem:[%s8 + $0x198] sm:$0xff]
        %v717 = vld [vmem:[%s8 + $0x1a0] sm:$0xff]
        %v718 = vld [vmem:[%s8 + $0x1a8] sm:$0xff]
        %v719 = vld [vmem:[%s8 + $0x1b0] sm:$0xff]
        %v720 = vld [vmem:[%s8 + $0x1b8] sm:$0xff]
        %v721 = vld [vmem:[%s8 + $0x1c0] sm:$0xff]
        %v722 = vld [vmem:[%s8 + $0x1c8] sm:$0xff]
        %v723 = vld [vmem:[%s8 + $0x1d0] sm:$0xff]
        %v724 = vld [vmem:[%s8 + $0x1d8] sm:$0xff]
        %v725 = vld [vmem:[%s8 + $0x1e0] sm:$0xff]
        %v726 = vld [vmem:[%s8 + $0x1e8] sm:$0xff]
        %v727 = vld [vmem:[%s8 + $0x1f0] sm:$0xff]
        %v728 = vld [vmem:[%s8 + $0x1f8] sm:$0xff]
        %v729 = vld [vmem:[#allocation2] sm:$0xff]
        %v730 = vld [vmem:[#allocation2 + $0x8] sm:$0xff]
        %v731 = vld [vmem:[#allocation2 + $0x10] sm:$0xff]
        %v732 = vld [vmem:[#allocation2 + $0x18] sm:$0xff]
        %v733 = vld [vmem:[#allocation2 + $0x20] sm:$0xff]
        %v734 = vld [vmem:[#allocation2 + $0x28] sm:$0xff]
        %v735 = vld [vmem:[#allocation2 + $0x30] sm:$0xff]
        %v736 = vld [vmem:[#allocation2 + $0x38] sm:$0xff]
        %v737 = vld [vmem:[#allocation2 + $0x40] sm:$0xff]
        %v738 = vld [vmem:[#allocation2 + $0x48] sm:$0xff]
        %v739 = vld [vmem:[#allocation2 + $0x50] sm:$0xff]
        %v740 = vld [vmem:[#allocation2 + $0x58] sm:$0xff]
        %v741 = vld [vmem:[#allocation2 + $0x60] sm:$0xff]
        %v742 = vld [vmem:[#allocation2 + $0x68] sm:$0xff]
        %v743 = vld [vmem:[#allocation2 + $0x70] sm:$0xff]
        %v744 = vld [vmem:[#allocation2 + $0x78] sm:$0xff]
        %v745 = vld [vmem:[#allocation2 + $0x80] sm:$0xff]
        %v746 = vld [vmem:[#allocation2 + $0x88] sm:$0xff]
        %v747 = vld [vmem:[#allocation2 + $0x90] sm:$0xff]
        %v748 = vld [vmem:[#allocation2 + $0x98] sm:$0xff]
        %v749 = vld [vmem:[#allocation2 + $0xa0] sm:$0xff]
        %v750 = vld [vmem:[#allocation2 + $0xa8] sm:$0xff]
        %v751 = vld [vmem:[#allocation2 + $0xb0] sm:$0xff]
        %v752 = vld [vmem:[#allocation2 + $0xb8] sm:$0xff]
        %v753 = vld [vmem:[#allocation2 + $0xc0] sm:$0xff]
        %v754 = vld [vmem:[#allocation2 + $0xc8] sm:$0xff]
        %v755 = vld [vmem:[#allocation2 + $0xd0] sm:$0xff]
        %v756 = vld [vmem:[#allocation2 + $0xd8] sm:$0xff]
        %v757 = vld [vmem:[#allocation2 + $0xe0] sm:$0xff]
        %v758 = vld [vmem:[#allocation2 + $0xe8] sm:$0xff]
        %v759 = vld [vmem:[#allocation2 + $0xf0] sm:$0xff]
        %v760 = vld [vmem:[#allocation2 + $0xf8] sm:$0xff]
        %v761 = vld [vmem:[#allocation2 + $0x100] sm:$0xff]
        %v762 = vld [vmem:[#allocation2 + $0x108] sm:$0xff]
        %v763 = vld [vmem:[#allocation2 + $0x110] sm:$0xff]
        %v764 = vld [vmem:[#allocation2 + $0x118] sm:$0xff]
        %v765 = vld [vmem:[#allocation2 + $0x120] sm:$0xff]
        %v766 = vld [vmem:[#allocation2 + $0x128] sm:$0xff]
        %v767 = vld [vmem:[#allocation2 + $0x130] sm:$0xff]
        %v768 = vld [vmem:[#allocation2 + $0x138] sm:$0xff]
        %v769 = vld [vmem:[#allocation2 + $0x140] sm:$0xff]
        %v770 = vld [vmem:[#allocation2 + $0x148] sm:$0xff]
        %v771 = vld [vmem:[#allocation2 + $0x150] sm:$0xff]
        %v772 = vld [vmem:[#allocation2 + $0x158] sm:$0xff]
        %v773 = vld [vmem:[#allocation2 + $0x160] sm:$0xff]
        %v774 = vld [vmem:[#allocation2 + $0x168] sm:$0xff]
        %v775 = vld [vmem:[#allocation2 + $0x170] sm:$0xff]
        %v776 = vld [vmem:[#allocation2 + $0x178] sm:$0xff]
        %v777 = vld [vmem:[#allocation2 + $0x180] sm:$0xff]
        %v778 = vld [vmem:[#allocation2 + $0x188] sm:$0xff]
        %v779 = vld [vmem:[#allocation2 + $0x190] sm:$0xff]
        %v780 = vld [vmem:[#allocation2 + $0x198] sm:$0xff]
        %v781 = vld [vmem:[#allocation2 + $0x1a0] sm:$0xff]
        %v782 = vld [vmem:[#allocation2 + $0x1a8] sm:$0xff]
        %v783 = vld [vmem:[#allocation2 + $0x1b0] sm:$0xff]
        %v784 = vld [vmem:[#allocation2 + $0x1b8] sm:$0xff]
        %v785 = vld [vmem:[#allocation2 + $0x1c0] sm:$0xff]
        %v786 = vld [vmem:[#allocation2 + $0x1c8] sm:$0xff]
        %v787 = vld [vmem:[#allocation2 + $0x1d0] sm:$0xff]
        %v788 = vld [vmem:[#allocation2 + $0x1d8] sm:$0xff]
        %v789 = vld [vmem:[#allocation2 + $0x1e0] sm:$0xff]
        %v790 = vld [vmem:[#allocation2 + $0x1e8] sm:$0xff]
        %v791 = vld [vmem:[#allocation2 + $0x1f0] sm:$0xff]
        %v792 = vld [vmem:[#allocation2 + $0x1f8] sm:$0xff]
        %v793 = vlaneseq
        %v794 = vand.u32 %v793, 127
        %v795 = vld [vmem:[%s418] sm:$0xf]
        %797 = vset.pattern.permute.xlu0 0
        %798 = vperm.xlu0 %797, %v609
        %v799 = vpop.permute.xlu0 %798
        %802 = vset.pattern.permute.xlu0 0
        %803 = vperm.xlu0 %802, %v610
        %v804 = vpop.permute.xlu0 %803
        %807 = vset.pattern.permute.xlu0 0
        %808 = vperm.xlu0 %807, %v611
        %v809 = vpop.permute.xlu0 %808
        %812 = vset.pattern.permute.xlu0 0
        %813 = vperm.xlu0 %812, %v612
        %v814 = vpop.permute.xlu0 %813
        %817 = vset.pattern.permute.xlu0 0
        %818 = vperm.xlu0 %817, %v613
        %v819 = vpop.permute.xlu0 %818
        %822 = vset.pattern.permute.xlu0 0
        %823 = vperm.xlu0 %822, %v614
        %v824 = vpop.permute.xlu0 %823
        %827 = vset.pattern.permute.xlu0 0
        %828 = vperm.xlu0 %827, %v615
        %v829 = vpop.permute.xlu0 %828
        %832 = vset.pattern.permute.xlu0 0
        %833 = vperm.xlu0 %832, %v616
        %v834 = vpop.permute.xlu0 %833
        %vm836 = vcmask 31744
        %v838 = vsel %vm836, %v489, 0
        %v841 = vsel %vm836, %v490, 0
        %v844 = vsel %vm836, %v491, 0
        %v847 = vsel %vm836, %v492, 0
        %v850 = vsel %vm836, %v493, 0
        %v853 = vsel %vm836, %v494, 0
        %v856 = vsel %vm836, %v495, 0
        %v859 = vsel %vm836, %v496, 0
        %vm861 = vcmask 1043456
        %v863 = vsel %vm861, %v795, 0
        %865 = vmatprep.subr.mxu0 0.0
        %866 = vmatpush1.msra.mxu0 0.0
        %867 = vmatprep.subr.mxu0 0.0
        %868 = vmatpush1.msra.mxu0 0.0
        %869 = vmatprep.subr.mxu0 0.0
        %870 = vmatpush1.msra.mxu0 0.0
        %871 = vmatprep.subr.mxu0 0.0
        %872 = vmatpush1.msra.mxu0 0.0
        %873 = vmatprep.subr.mxu0 0.0
        %874 = vmatpush1.msra.mxu0 0.0
        %875 = vmatprep.subr.mxu0 0.0
        %876 = vmatpush1.msra.mxu0 0.0
        %877 = vmatprep.subr.mxu0 0.0
        %878 = vmatpush1.msra.mxu0 0.0
        %879 = vmatprep.subr.mxu0 0.0
        %880 = vmatpush1.msra.mxu0 0.0
        %881 = vmatprep.subr.mxu0 0.0
        %882 = vmatpush1.msra.mxu0 0.0
        %883 = vmatprep.subr.mxu0 0.0
        %884 = vmatpush1.msra.mxu0 0.0
        %885 = vmatprep.subr.mxu0 0.0
        %886 = vmatpush1.msra.mxu0 0.0
        %887 = vmatprep.subr.mxu0 0.0
        %888 = vmatpush1.msra.mxu0 0.0
        %889 = vmatprep.subr.mxu0 0.0
        %890 = vmatpush1.msra.mxu0 0.0
        %891 = vmatprep.subr.mxu0 0.0
        %892 = vmatpush1.msra.mxu0 0.0
        %893 = vmatprep.subr.mxu0 0.0
        %894 = vmatpush1.msra.mxu0 0.0
        %895 = vmatprep.subr.mxu0 0.0
        %896 = vmatpush1.msra.mxu0 %v863
        %897 = vmatprep.subr.mxu0 0.0
        %898 = vmatpush2.msra.mxu0 0.0
        %899 = vmatprep.subr.mxu0 0.0
        %900 = vmatpush2.msra.mxu0 0.0
        %901 = vmatprep.subr.mxu0 0.0
        %902 = vmatpush2.msra.mxu0 0.0
        %903 = vmatprep.subr.mxu0 0.0
        %904 = vmatpush2.msra.mxu0 0.0
        %905 = vmatprep.subr.mxu0 0.0
        %906 = vmatpush2.msra.mxu0 0.0
        %907 = vmatprep.subr.mxu0 0.0
        %908 = vmatpush2.msra.mxu0 0.0
        %909 = vmatprep.subr.mxu0 0.0
        %910 = vmatpush2.msra.mxu0 0.0
        %911 = vmatprep.subr.mxu0 0.0
        %912 = vmatpush2.msra.mxu0 0.0
        %913 = vmatprep.subr.mxu0 0.0
        %914 = vmatpush2.msra.mxu0 0.0
        %915 = vmatprep.subr.mxu0 0.0
        %916 = vmatpush2.msra.mxu0 0.0
        %917 = vmatprep.subr.mxu0 0.0
        %918 = vmatpush2.msra.mxu0 0.0
        %919 = vmatprep.subr.mxu0 0.0
        %920 = vmatpush2.msra.mxu0 0.0
        %921 = vmatprep.subr.mxu0 0.0
        %922 = vmatpush2.msra.mxu0 0.0
        %923 = vmatprep.subr.mxu0 0.0
        %924 = vmatpush2.msra.mxu0 0.0
        %925 = vmatprep.subr.mxu0 0.0
        %926 = vmatpush2.msra.mxu0 0.0
        %927 = vmatprep.subr.mxu0 0.0
        %928 = vmatpush2.msra.mxu0 0.0
        %929 = vmatprep.mubr.f32.mxu0 0.0
        %930 = vmatmul.mubr.f32.gmra.mxu0 %v838
        %v931 = vpop.f32.mrf.mxu0
        %v932 = vadd.f32 %v799, %v931
        %v933 = vpop.f32.mrf.mxu0
        %934 = vmatprep.mubr.f32.mxu0 0.0
        %935 = vmatmul.mubr.f32.gmra.mxu0 %v841
        %v936 = vpop.f32.mrf.mxu0
        %v937 = vadd.f32 %v804, %v936
        %v938 = vpop.f32.mrf.mxu0
        %939 = vmatprep.mubr.f32.mxu0 0.0
        %940 = vmatmul.mubr.f32.gmra.mxu0 %v844
        %v941 = vpop.f32.mrf.mxu0
        %v942 = vadd.f32 %v809, %v941
        %v943 = vpop.f32.mrf.mxu0
        %944 = vmatprep.mubr.f32.mxu0 0.0
        %945 = vmatmul.mubr.f32.gmra.mxu0 %v847
        %v946 = vpop.f32.mrf.mxu0
        %v947 = vadd.f32 %v814, %v946
        %v948 = vpop.f32.mrf.mxu0
        %949 = vmatprep.mubr.f32.mxu0 0.0
        %950 = vmatmul.mubr.f32.gmra.mxu0 %v850
        %v951 = vpop.f32.mrf.mxu0
        %v952 = vadd.f32 %v819, %v951
        %v953 = vpop.f32.mrf.mxu0
        %954 = vmatprep.mubr.f32.mxu0 0.0
        %955 = vmatmul.mubr.f32.gmra.mxu0 %v853
        %v956 = vpop.f32.mrf.mxu0
        %v957 = vadd.f32 %v824, %v956
        %v958 = vpop.f32.mrf.mxu0
        %959 = vmatprep.mubr.f32.mxu0 0.0
        %960 = vmatmul.mubr.f32.gmra.mxu0 %v856
        %v961 = vpop.f32.mrf.mxu0
        %v962 = vadd.f32 %v829, %v961
        %v963 = vpop.f32.mrf.mxu0
        %964 = vmatprep.mubr.f32.mxu0 0.0
        %965 = vmatmul.mubr.f32.gmra.mxu0 %v859
        %v966 = vpop.f32.mrf.mxu0
        %v967 = vadd.f32 %v834, %v966
        %v968 = vpop.f32.mrf.mxu0
        %969 = vdwg.mxu0
        %v970 = vmax.f32 %v932, 0.0
        %v971 = vmax.f32 %v937, 0.0
        %v972 = vmax.f32 %v942, 0.0
        %v973 = vmax.f32 %v947, 0.0
        %v974 = vmax.f32 %v952, 0.0
        %v975 = vmax.f32 %v957, 0.0
        %v976 = vmax.f32 %v962, 0.0
        %v977 = vmax.f32 %v967, 0.0
        %v978 = vpack.c.bf16 %v971, %v970
        %v979 = vpack.c.bf16 %v973, %v972
        %v980 = vpack.c.bf16 %v975, %v974
        %v981 = vpack.c.bf16 %v977, %v976
        %983 = vset.pattern.permute.xlu0 0
        %984 = vperm.xlu0 %983, %v617
        %v985 = vpop.permute.xlu0 %984
        %988 = vset.pattern.permute.xlu0 0
        %989 = vperm.xlu0 %988, %v618
        %v990 = vpop.permute.xlu0 %989
        %993 = vset.pattern.permute.xlu0 0
        %994 = vperm.xlu0 %993, %v619
        %v995 = vpop.permute.xlu0 %994
        %998 = vset.pattern.permute.xlu0 0
        %999 = vperm.xlu0 %998, %v620
        %v1000 = vpop.permute.xlu0 %999
        %1003 = vset.pattern.permute.xlu0 0
        %1004 = vperm.xlu0 %1003, %v621
        %v1005 = vpop.permute.xlu0 %1004
        %1008 = vset.pattern.permute.xlu0 0
        %1009 = vperm.xlu0 %1008, %v622
        %v1010 = vpop.permute.xlu0 %1009
        %1013 = vset.pattern.permute.xlu0 0
        %1014 = vperm.xlu0 %1013, %v623
        %v1015 = vpop.permute.xlu0 %1014
        %1018 = vset.pattern.permute.xlu0 0
        %1019 = vperm.xlu0 %1018, %v624
        %v1020 = vpop.permute.xlu0 %1019
        %1023 = vset.pattern.permute.xlu0 0
        %1024 = vperm.xlu0 %1023, %v625
        %v1025 = vpop.permute.xlu0 %1024
        %1028 = vset.pattern.permute.xlu0 0
        %1029 = vperm.xlu0 %1028, %v626
        %v1030 = vpop.permute.xlu0 %1029
        %1033 = vset.pattern.permute.xlu0 0
        %1034 = vperm.xlu0 %1033, %v627
        %v1035 = vpop.permute.xlu0 %1034
        %1038 = vset.pattern.permute.xlu0 0
        %1039 = vperm.xlu0 %1038, %v628
        %v1040 = vpop.permute.xlu0 %1039
        %1043 = vset.pattern.permute.xlu0 0
        %1044 = vperm.xlu0 %1043, %v629
        %v1045 = vpop.permute.xlu0 %1044
        %1048 = vset.pattern.permute.xlu0 0
        %1049 = vperm.xlu0 %1048, %v630
        %v1050 = vpop.permute.xlu0 %1049
        %1053 = vset.pattern.permute.xlu0 0
        %1054 = vperm.xlu0 %1053, %v631
        %v1055 = vpop.permute.xlu0 %1054
        %1058 = vset.pattern.permute.xlu0 0
        %1059 = vperm.xlu0 %1058, %v632
        %v1060 = vpop.permute.xlu0 %1059
        %v1078 = vunpack.c.l.b16 %v497
        %v1079 = vunpack.c.l.b16 %v498
        %v1080 = vunpack.c.l.b16 %v499
        %v1081 = vunpack.c.l.b16 %v500
        %v1082 = vunpack.c.l.b16 %v501
        %v1083 = vunpack.c.l.b16 %v502
        %v1084 = vunpack.c.l.b16 %v503
        %v1085 = vunpack.c.l.b16 %v504
        %v1086 = vunpack.c.l.b16 %v505
        %v1087 = vunpack.c.l.b16 %v506
        %v1088 = vunpack.c.l.b16 %v507
        %v1089 = vunpack.c.l.b16 %v508
        %v1090 = vunpack.c.l.b16 %v509
        %v1091 = vunpack.c.l.b16 %v510
        %v1092 = vunpack.c.l.b16 %v511
        %v1093 = vunpack.c.l.b16 %v512
        %v1094 = vpack.c.b16 %v1079, %v1078
        %v1095 = vpack.c.b16 %v1081, %v1080
        %v1096 = vpack.c.b16 %v1083, %v1082
        %v1097 = vpack.c.b16 %v1085, %v1084
        %v1098 = vpack.c.b16 %v1087, %v1086
        %v1099 = vpack.c.b16 %v1089, %v1088
        %v1100 = vpack.c.b16 %v1091, %v1090
        %v1101 = vpack.c.b16 %v1093, %v1092
        %vm1102 = vcmask 523264
        %v1104 = vsel %vm1102, %v1094, 0
        %v1107 = vsel %vm1102, %v1095, 0
        %v1110 = vsel %vm1102, %v1096, 0
        %v1113 = vsel %vm1102, %v1097, 0
        %v1116 = vsel %vm1102, %v1098, 0
        %v1119 = vsel %vm1102, %v1099, 0
        %v1122 = vsel %vm1102, %v1100, 0
        %v1125 = vsel %vm1102, %v1101, 0
        %1127 = vmatprep.subr.bf16.mxu0 0
        %1128 = vmatpush1.bf16.msra.mxu0 0
        %1129 = vmatprep.subr.bf16.mxu0 0
        %1130 = vmatpush1.bf16.msra.mxu0 0
        %1131 = vmatprep.subr.bf16.mxu0 0
        %1132 = vmatpush1.bf16.msra.mxu0 0
        %1133 = vmatprep.subr.bf16.mxu0 0
        %1134 = vmatpush1.bf16.msra.mxu0 0
        %1135 = vmatprep.subr.bf16.mxu0 0
        %1136 = vmatpush1.bf16.msra.mxu0 %v981
        %1137 = vmatprep.subr.bf16.mxu0 0
        %1138 = vmatpush1.bf16.msra.mxu0 %v980
        %1139 = vmatprep.subr.bf16.mxu0 0
        %1140 = vmatpush1.bf16.msra.mxu0 %v979
        %1141 = vmatprep.subr.bf16.mxu0 0
        %1142 = vmatpush1.bf16.msra.mxu0 %v978
        %1143 = vmatprep.subr.bf16.mxu0 0
        %1144 = vmatpush2.bf16.msra.mxu0 0
        %1145 = vmatprep.subr.bf16.mxu0 0
        %1146 = vmatpush2.bf16.msra.mxu0 0
        %1147 = vmatprep.subr.bf16.mxu0 0
        %1148 = vmatpush2.bf16.msra.mxu0 0
        %1149 = vmatprep.subr.bf16.mxu0 0
        %1150 = vmatpush2.bf16.msra.mxu0 0
        %1151 = vmatprep.subr.bf16.mxu0 0
        %1152 = vmatpush2.bf16.msra.mxu0 0
        %1153 = vmatprep.subr.bf16.mxu0 0
        %1154 = vmatpush2.bf16.msra.mxu0 0
        %1155 = vmatprep.subr.bf16.mxu0 0
        %1156 = vmatpush2.bf16.msra.mxu0 0
        %1157 = vmatprep.subr.bf16.mxu0 0
        %1158 = vmatpush2.bf16.msra.mxu0 0
        %1159 = vmatprep.mubr.bf16.mxu0 0
        %1160 = vmatmul.mubr.bf16.gmra.mxu0 %v1104
        %v1161 = vpop.f32.mrf.mxu0
        %v1162 = vadd.f32 %v985, %v1161
        %v1163 = vpop.f32.mrf.mxu0
        %v1164 = vpop.f32.mrf.mxu0
        %v1165 = vadd.f32 %v990, %v1164
        %v1166 = vpop.f32.mrf.mxu0
        %1167 = vmatprep.mubr.bf16.mxu0 0
        %1168 = vmatmul.mubr.bf16.gmra.mxu0 %v1107
        %v1169 = vpop.f32.mrf.mxu0
        %v1170 = vadd.f32 %v995, %v1169
        %v1171 = vpop.f32.mrf.mxu0
        %v1172 = vpop.f32.mrf.mxu0
        %v1173 = vadd.f32 %v1000, %v1172
        %v1174 = vpop.f32.mrf.mxu0
        %1175 = vmatprep.mubr.bf16.mxu0 0
        %1176 = vmatmul.mubr.bf16.gmra.mxu0 %v1110
        %v1177 = vpop.f32.mrf.mxu0
        %v1178 = vadd.f32 %v1005, %v1177
        %v1179 = vpop.f32.mrf.mxu0
        %v1180 = vpop.f32.mrf.mxu0
        %v1181 = vadd.f32 %v1010, %v1180
        %v1182 = vpop.f32.mrf.mxu0
        %1183 = vmatprep.mubr.bf16.mxu0 0
        %1184 = vmatmul.mubr.bf16.gmra.mxu0 %v1113
        %v1185 = vpop.f32.mrf.mxu0
        %v1186 = vadd.f32 %v1015, %v1185
        %v1187 = vpop.f32.mrf.mxu0
        %v1188 = vpop.f32.mrf.mxu0
        %v1189 = vadd.f32 %v1020, %v1188
        %v1190 = vpop.f32.mrf.mxu0
        %1191 = vmatprep.mubr.bf16.mxu0 0
        %1192 = vmatmul.mubr.bf16.gmra.mxu0 %v1116
        %v1193 = vpop.f32.mrf.mxu0
        %v1194 = vadd.f32 %v1025, %v1193
        %v1195 = vpop.f32.mrf.mxu0
        %v1196 = vpop.f32.mrf.mxu0
        %v1197 = vadd.f32 %v1030, %v1196
        %v1198 = vpop.f32.mrf.mxu0
        %1199 = vmatprep.mubr.bf16.mxu0 0
        %1200 = vmatmul.mubr.bf16.gmra.mxu0 %v1119
        %v1201 = vpop.f32.mrf.mxu0
        %v1202 = vadd.f32 %v1035, %v1201
        %v1203 = vpop.f32.mrf.mxu0
        %v1204 = vpop.f32.mrf.mxu0
        %v1205 = vadd.f32 %v1040, %v1204
        %v1206 = vpop.f32.mrf.mxu0
        %1207 = vmatprep.mubr.bf16.mxu0 0
        %1208 = vmatmul.mubr.bf16.gmra.mxu0 %v1122
        %v1209 = vpop.f32.mrf.mxu0
        %v1210 = vadd.f32 %v1045, %v1209
        %v1211 = vpop.f32.mrf.mxu0
        %v1212 = vpop.f32.mrf.mxu0
        %v1213 = vadd.f32 %v1050, %v1212
        %v1214 = vpop.f32.mrf.mxu0
        %1215 = vmatprep.mubr.bf16.mxu0 0
        %1216 = vmatmul.mubr.bf16.gmra.mxu0 %v1125
        %v1217 = vpop.f32.mrf.mxu0
        %v1218 = vadd.f32 %v1055, %v1217
        %v1219 = vpop.f32.mrf.mxu0
        %v1220 = vpop.f32.mrf.mxu0
        %v1221 = vadd.f32 %v1060, %v1220
        %v1222 = vpop.f32.mrf.mxu0
        %1223 = vdwg.mxu0
        %v1224 = vmax.f32 %v1162, 0.0
        %v1225 = vmax.f32 %v1165, 0.0
        %v1226 = vmax.f32 %v1170, 0.0
        %v1227 = vmax.f32 %v1173, 0.0
        %v1228 = vmax.f32 %v1178, 0.0
        %v1229 = vmax.f32 %v1181, 0.0
        %v1230 = vmax.f32 %v1186, 0.0
        %v1231 = vmax.f32 %v1189, 0.0
        %v1232 = vmax.f32 %v1194, 0.0
        %v1233 = vmax.f32 %v1197, 0.0
        %v1234 = vmax.f32 %v1202, 0.0
        %v1235 = vmax.f32 %v1205, 0.0
        %v1236 = vmax.f32 %v1210, 0.0
        %v1237 = vmax.f32 %v1213, 0.0
        %v1238 = vmax.f32 %v1218, 0.0
        %v1239 = vmax.f32 %v1221, 0.0
        %v1240 = vpack.c.bf16 %v1225, %v1224
        %v1241 = vpack.c.bf16 %v1227, %v1226
        %v1242 = vpack.c.bf16 %v1229, %v1228
        %v1243 = vpack.c.bf16 %v1231, %v1230
        %v1244 = vpack.c.bf16 %v1233, %v1232
        %v1245 = vpack.c.bf16 %v1235, %v1234
        %v1246 = vpack.c.bf16 %v1237, %v1236
        %v1247 = vpack.c.bf16 %v1239, %v1238
        %1249 = vset.pattern.permute.xlu0 0
        %1250 = vperm.xlu0 %1249, %v633
        %v1251 = vpop.permute.xlu0 %1250
        %1254 = vset.pattern.permute.xlu0 0
        %1255 = vperm.xlu0 %1254, %v634
        %v1256 = vpop.permute.xlu0 %1255
        %1259 = vset.pattern.permute.xlu0 0
        %1260 = vperm.xlu0 %1259, %v635
        %v1261 = vpop.permute.xlu0 %1260
        %1264 = vset.pattern.permute.xlu0 0
        %1265 = vperm.xlu0 %1264, %v636
        %v1266 = vpop.permute.xlu0 %1265
        %1269 = vset.pattern.permute.xlu0 0
        %1270 = vperm.xlu0 %1269, %v637
        %v1271 = vpop.permute.xlu0 %1270
        %1274 = vset.pattern.permute.xlu0 0
        %1275 = vperm.xlu0 %1274, %v638
        %v1276 = vpop.permute.xlu0 %1275
        %1279 = vset.pattern.permute.xlu0 0
        %1280 = vperm.xlu0 %1279, %v639
        %v1281 = vpop.permute.xlu0 %1280
        %1284 = vset.pattern.permute.xlu0 0
        %1285 = vperm.xlu0 %1284, %v640
        %v1286 = vpop.permute.xlu0 %1285
        %1289 = vset.pattern.permute.xlu0 0
        %1290 = vperm.xlu0 %1289, %v641
        %v1291 = vpop.permute.xlu0 %1290
        %1294 = vset.pattern.permute.xlu0 0
        %1295 = vperm.xlu0 %1294, %v642
        %v1296 = vpop.permute.xlu0 %1295
        %1299 = vset.pattern.permute.xlu0 0
        %1300 = vperm.xlu0 %1299, %v643
        %v1301 = vpop.permute.xlu0 %1300
        %1304 = vset.pattern.permute.xlu0 0
        %1305 = vperm.xlu0 %1304, %v644
        %v1306 = vpop.permute.xlu0 %1305
        %1309 = vset.pattern.permute.xlu0 0
        %1310 = vperm.xlu0 %1309, %v645
        %v1311 = vpop.permute.xlu0 %1310
        %1314 = vset.pattern.permute.xlu0 0
        %1315 = vperm.xlu0 %1314, %v646
        %v1316 = vpop.permute.xlu0 %1315
        %1319 = vset.pattern.permute.xlu0 0
        %1320 = vperm.xlu0 %1319, %v647
        %v1321 = vpop.permute.xlu0 %1320
        %1324 = vset.pattern.permute.xlu0 0
        %1325 = vperm.xlu0 %1324, %v648
        %v1326 = vpop.permute.xlu0 %1325
        %1329 = vset.pattern.permute.xlu0 0
        %1330 = vperm.xlu0 %1329, %v649
        %v1331 = vpop.permute.xlu0 %1330
        %1334 = vset.pattern.permute.xlu0 0
        %1335 = vperm.xlu0 %1334, %v650
        %v1336 = vpop.permute.xlu0 %1335
        %1339 = vset.pattern.permute.xlu0 0
        %1340 = vperm.xlu0 %1339, %v651
        %v1341 = vpop.permute.xlu0 %1340
        %1344 = vset.pattern.permute.xlu0 0
        %1345 = vperm.xlu0 %1344, %v652
        %v1346 = vpop.permute.xlu0 %1345
        %1349 = vset.pattern.permute.xlu0 0
        %1350 = vperm.xlu0 %1349, %v653
        %v1351 = vpop.permute.xlu0 %1350
        %1354 = vset.pattern.permute.xlu0 0
        %1355 = vperm.xlu0 %1354, %v654
        %v1356 = vpop.permute.xlu0 %1355
        %1359 = vset.pattern.permute.xlu0 0
        %1360 = vperm.xlu0 %1359, %v655
        %v1361 = vpop.permute.xlu0 %1360
        %1364 = vset.pattern.permute.xlu0 0
        %1365 = vperm.xlu0 %1364, %v656
        %v1366 = vpop.permute.xlu0 %1365
        %1369 = vset.pattern.permute.xlu0 0
        %1370 = vperm.xlu0 %1369, %v657
        %v1371 = vpop.permute.xlu0 %1370
        %1374 = vset.pattern.permute.xlu0 0
        %1375 = vperm.xlu0 %1374, %v658
        %v1376 = vpop.permute.xlu0 %1375
        %1379 = vset.pattern.permute.xlu0 0
        %1380 = vperm.xlu0 %1379, %v659
        %v1381 = vpop.permute.xlu0 %1380
        %1384 = vset.pattern.permute.xlu0 0
        %1385 = vperm.xlu0 %1384, %v660
        %v1386 = vpop.permute.xlu0 %1385
        %1389 = vset.pattern.permute.xlu0 0
        %1390 = vperm.xlu0 %1389, %v661
        %v1391 = vpop.permute.xlu0 %1390
        %1394 = vset.pattern.permute.xlu0 0
        %1395 = vperm.xlu0 %1394, %v662
        %v1396 = vpop.permute.xlu0 %1395
        %1399 = vset.pattern.permute.xlu0 0
        %1400 = vperm.xlu0 %1399, %v663
        %v1401 = vpop.permute.xlu0 %1400
        %1404 = vset.pattern.permute.xlu0 0
        %1405 = vperm.xlu0 %1404, %v664
        %v1406 = vpop.permute.xlu0 %1405
        %v1440 = vunpack.c.l.b16 %v513
        %v1441 = vunpack.c.l.b16 %v514
        %v1442 = vunpack.c.l.b16 %v515
        %v1443 = vunpack.c.l.b16 %v516
        %v1444 = vunpack.c.l.b16 %v517
        %v1445 = vunpack.c.l.b16 %v518
        %v1446 = vunpack.c.l.b16 %v519
        %v1447 = vunpack.c.l.b16 %v520
        %v1448 = vunpack.c.l.b16 %v521
        %v1449 = vunpack.c.l.b16 %v522
        %v1450 = vunpack.c.l.b16 %v523
        %v1451 = vunpack.c.l.b16 %v524
        %v1452 = vunpack.c.l.b16 %v525
        %v1453 = vunpack.c.l.b16 %v526
        %v1454 = vunpack.c.l.b16 %v527
        %v1455 = vunpack.c.l.b16 %v528
        %v1456 = vunpack.c.l.b16 %v529
        %v1457 = vunpack.c.l.b16 %v530
        %v1458 = vunpack.c.l.b16 %v531
        %v1459 = vunpack.c.l.b16 %v532
        %v1460 = vunpack.c.l.b16 %v533
        %v1461 = vunpack.c.l.b16 %v534
        %v1462 = vunpack.c.l.b16 %v535
        %v1463 = vunpack.c.l.b16 %v536
        %v1464 = vunpack.c.l.b16 %v537
        %v1465 = vunpack.c.l.b16 %v538
        %v1466 = vunpack.c.l.b16 %v539
        %v1467 = vunpack.c.l.b16 %v540
        %v1468 = vunpack.c.l.b16 %v541
        %v1469 = vunpack.c.l.b16 %v542
        %v1470 = vunpack.c.l.b16 %v543
        %v1471 = vunpack.c.l.b16 %v544
        %v1472 = vpack.c.b16 %v1441, %v1440
        %v1473 = vpack.c.b16 %v1443, %v1442
        %v1474 = vpack.c.b16 %v1445, %v1444
        %v1475 = vpack.c.b16 %v1447, %v1446
        %v1476 = vpack.c.b16 %v1449, %v1448
        %v1477 = vpack.c.b16 %v1451, %v1450
        %v1478 = vpack.c.b16 %v1453, %v1452
        %v1479 = vpack.c.b16 %v1455, %v1454
        %v1480 = vpack.c.b16 %v1457, %v1456
        %v1481 = vpack.c.b16 %v1459, %v1458
        %v1482 = vpack.c.b16 %v1461, %v1460
        %v1483 = vpack.c.b16 %v1463, %v1462
        %v1484 = vpack.c.b16 %v1465, %v1464
        %v1485 = vpack.c.b16 %v1467, %v1466
        %v1486 = vpack.c.b16 %v1469, %v1468
        %v1487 = vpack.c.b16 %v1471, %v1470
        %1504 = vmatprep.subr.bf16.mxu0 0
        %1505 = vmatpush1.bf16.msra.mxu0 %v1247
        %1506 = vmatprep.subr.bf16.mxu0 0
        %1507 = vmatpush1.bf16.msra.mxu0 %v1246
        %1508 = vmatprep.subr.bf16.mxu0 0
        %1509 = vmatpush1.bf16.msra.mxu0 %v1245
        %1510 = vmatprep.subr.bf16.mxu0 0
        %1511 = vmatpush1.bf16.msra.mxu0 %v1244
        %1512 = vmatprep.subr.bf16.mxu0 0
        %1513 = vmatpush1.bf16.msra.mxu0 %v1243
        %1514 = vmatprep.subr.bf16.mxu0 0
        %1515 = vmatpush1.bf16.msra.mxu0 %v1242
        %1516 = vmatprep.subr.bf16.mxu0 0
        %1517 = vmatpush1.bf16.msra.mxu0 %v1241
        %1518 = vmatprep.subr.bf16.mxu0 0
        %1519 = vmatpush1.bf16.msra.mxu0 %v1240
        %1520 = vmatprep.subr.bf16.mxu0 0
        %1521 = vmatpush2.bf16.msra.mxu0 0
        %1522 = vmatprep.subr.bf16.mxu0 0
        %1523 = vmatpush2.bf16.msra.mxu0 0
        %1524 = vmatprep.subr.bf16.mxu0 0
        %1525 = vmatpush2.bf16.msra.mxu0 0
        %1526 = vmatprep.subr.bf16.mxu0 0
        %1527 = vmatpush2.bf16.msra.mxu0 0
        %1528 = vmatprep.subr.bf16.mxu0 0
        %1529 = vmatpush2.bf16.msra.mxu0 0
        %1530 = vmatprep.subr.bf16.mxu0 0
        %1531 = vmatpush2.bf16.msra.mxu0 0
        %1532 = vmatprep.subr.bf16.mxu0 0
        %1533 = vmatpush2.bf16.msra.mxu0 0
        %1534 = vmatprep.subr.bf16.mxu0 0
        %1535 = vmatpush2.bf16.msra.mxu0 0
        %1536 = vmatprep.mubr.bf16.mxu0 0
        %1537 = vmatmul.mubr.bf16.gmra.mxu0 %v1472
        %v1538 = vpop.f32.mrf.mxu0
        %v1539 = vadd.f32 %v1251, %v1538
        %v1540 = vpop.f32.mrf.mxu0
        %v1541 = vpop.f32.mrf.mxu0
        %v1542 = vadd.f32 %v1256, %v1541
        %v1543 = vpop.f32.mrf.mxu0
        %1544 = vmatprep.mubr.bf16.mxu0 0
        %1545 = vmatmul.mubr.bf16.gmra.mxu0 %v1473
        %v1546 = vpop.f32.mrf.mxu0
        %v1547 = vadd.f32 %v1261, %v1546
        %v1548 = vpop.f32.mrf.mxu0
        %v1549 = vpop.f32.mrf.mxu0
        %v1550 = vadd.f32 %v1266, %v1549
        %v1551 = vpop.f32.mrf.mxu0
        %1552 = vmatprep.mubr.bf16.mxu0 0
        %1553 = vmatmul.mubr.bf16.gmra.mxu0 %v1474
        %v1554 = vpop.f32.mrf.mxu0
        %v1555 = vadd.f32 %v1271, %v1554
        %v1556 = vpop.f32.mrf.mxu0
        %v1557 = vpop.f32.mrf.mxu0
        %v1558 = vadd.f32 %v1276, %v1557
        %v1559 = vpop.f32.mrf.mxu0
        %1560 = vmatprep.mubr.bf16.mxu0 0
        %1561 = vmatmul.mubr.bf16.gmra.mxu0 %v1475
        %v1562 = vpop.f32.mrf.mxu0
        %v1563 = vadd.f32 %v1281, %v1562
        %v1564 = vpop.f32.mrf.mxu0
        %v1565 = vpop.f32.mrf.mxu0
        %v1566 = vadd.f32 %v1286, %v1565
        %v1567 = vpop.f32.mrf.mxu0
        %1568 = vmatprep.mubr.bf16.mxu0 0
        %1569 = vmatmul.mubr.bf16.gmra.mxu0 %v1476
        %v1570 = vpop.f32.mrf.mxu0
        %v1571 = vadd.f32 %v1291, %v1570
        %v1572 = vpop.f32.mrf.mxu0
        %v1573 = vpop.f32.mrf.mxu0
        %v1574 = vadd.f32 %v1296, %v1573
        %v1575 = vpop.f32.mrf.mxu0
        %1576 = vmatprep.mubr.bf16.mxu0 0
        %1577 = vmatmul.mubr.bf16.gmra.mxu0 %v1477
        %v1578 = vpop.f32.mrf.mxu0
        %v1579 = vadd.f32 %v1301, %v1578
        %v1580 = vpop.f32.mrf.mxu0
        %v1581 = vpop.f32.mrf.mxu0
        %v1582 = vadd.f32 %v1306, %v1581
        %v1583 = vpop.f32.mrf.mxu0
        %1584 = vmatprep.mubr.bf16.mxu0 0
        %1585 = vmatmul.mubr.bf16.gmra.mxu0 %v1478
        %v1586 = vpop.f32.mrf.mxu0
        %v1587 = vadd.f32 %v1311, %v1586
        %v1588 = vpop.f32.mrf.mxu0
        %v1589 = vpop.f32.mrf.mxu0
        %v1590 = vadd.f32 %v1316, %v1589
        %v1591 = vpop.f32.mrf.mxu0
        %1592 = vmatprep.mubr.bf16.mxu0 0
        %1593 = vmatmul.mubr.bf16.gmra.mxu0 %v1479
        %v1594 = vpop.f32.mrf.mxu0
        %v1595 = vadd.f32 %v1321, %v1594
        %v1596 = vpop.f32.mrf.mxu0
        %v1597 = vpop.f32.mrf.mxu0
        %v1598 = vadd.f32 %v1326, %v1597
        %v1599 = vpop.f32.mrf.mxu0
        %1600 = vmatprep.mubr.bf16.mxu0 0
        %1601 = vmatmul.mubr.bf16.gmra.mxu0 %v1480
        %v1602 = vpop.f32.mrf.mxu0
        %v1603 = vadd.f32 %v1331, %v1602
        %v1604 = vpop.f32.mrf.mxu0
        %v1605 = vpop.f32.mrf.mxu0
        %v1606 = vadd.f32 %v1336, %v1605
        %v1607 = vpop.f32.mrf.mxu0
        %1608 = vmatprep.mubr.bf16.mxu0 0
        %1609 = vmatmul.mubr.bf16.gmra.mxu0 %v1481
        %v1610 = vpop.f32.mrf.mxu0
        %v1611 = vadd.f32 %v1341, %v1610
        %v1612 = vpop.f32.mrf.mxu0
        %v1613 = vpop.f32.mrf.mxu0
        %v1614 = vadd.f32 %v1346, %v1613
        %v1615 = vpop.f32.mrf.mxu0
        %1616 = vmatprep.mubr.bf16.mxu0 0
        %1617 = vmatmul.mubr.bf16.gmra.mxu0 %v1482
        %v1618 = vpop.f32.mrf.mxu0
        %v1619 = vadd.f32 %v1351, %v1618
        %v1620 = vpop.f32.mrf.mxu0
        %v1621 = vpop.f32.mrf.mxu0
        %v1622 = vadd.f32 %v1356, %v1621
        %v1623 = vpop.f32.mrf.mxu0
        %1624 = vmatprep.mubr.bf16.mxu0 0
        %1625 = vmatmul.mubr.bf16.gmra.mxu0 %v1483
        %v1626 = vpop.f32.mrf.mxu0
        %v1627 = vadd.f32 %v1361, %v1626
        %v1628 = vpop.f32.mrf.mxu0
        %v1629 = vpop.f32.mrf.mxu0
        %v1630 = vadd.f32 %v1366, %v1629
        %v1631 = vpop.f32.mrf.mxu0
        %1632 = vmatprep.mubr.bf16.mxu0 0
        %1633 = vmatmul.mubr.bf16.gmra.mxu0 %v1484
        %v1634 = vpop.f32.mrf.mxu0
        %v1635 = vadd.f32 %v1371, %v1634
        %v1636 = vpop.f32.mrf.mxu0
        %v1637 = vpop.f32.mrf.mxu0
        %v1638 = vadd.f32 %v1376, %v1637
        %v1639 = vpop.f32.mrf.mxu0
        %1640 = vmatprep.mubr.bf16.mxu0 0
        %1641 = vmatmul.mubr.bf16.gmra.mxu0 %v1485
        %v1642 = vpop.f32.mrf.mxu0
        %v1643 = vadd.f32 %v1381, %v1642
        %v1644 = vpop.f32.mrf.mxu0
        %v1645 = vpop.f32.mrf.mxu0
        %v1646 = vadd.f32 %v1386, %v1645
        %v1647 = vpop.f32.mrf.mxu0
        %1648 = vmatprep.mubr.bf16.mxu0 0
        %1649 = vmatmul.mubr.bf16.gmra.mxu0 %v1486
        %v1650 = vpop.f32.mrf.mxu0
        %v1651 = vadd.f32 %v1391, %v1650
        %v1652 = vpop.f32.mrf.mxu0
        %v1653 = vpop.f32.mrf.mxu0
        %v1654 = vadd.f32 %v1396, %v1653
        %v1655 = vpop.f32.mrf.mxu0
        %1656 = vmatprep.mubr.bf16.mxu0 0
        %1657 = vmatmul.mubr.bf16.gmra.mxu0 %v1487
        %v1658 = vpop.f32.mrf.mxu0
        %v1659 = vadd.f32 %v1401, %v1658
        %v1660 = vpop.f32.mrf.mxu0
        %v1661 = vpop.f32.mrf.mxu0
        %v1662 = vadd.f32 %v1406, %v1661
        %v1663 = vpop.f32.mrf.mxu0
        %1664 = vdwg.mxu0
        %v1665 = vmax.f32 %v1539, 0.0
        %v1666 = vmax.f32 %v1542, 0.0
        %v1667 = vmax.f32 %v1547, 0.0
        %v1668 = vmax.f32 %v1550, 0.0
        %v1669 = vmax.f32 %v1555, 0.0
        %v1670 = vmax.f32 %v1558, 0.0
        %v1671 = vmax.f32 %v1563, 0.0
        %v1672 = vmax.f32 %v1566, 0.0
        %v1673 = vmax.f32 %v1571, 0.0
        %v1674 = vmax.f32 %v1574, 0.0
        %v1675 = vmax.f32 %v1579, 0.0
        %v1676 = vmax.f32 %v1582, 0.0
        %v1677 = vmax.f32 %v1587, 0.0
        %v1678 = vmax.f32 %v1590, 0.0
        %v1679 = vmax.f32 %v1595, 0.0
        %v1680 = vmax.f32 %v1598, 0.0
        %v1681 = vmax.f32 %v1603, 0.0
        %v1682 = vmax.f32 %v1606, 0.0
        %v1683 = vmax.f32 %v1611, 0.0
        %v1684 = vmax.f32 %v1614, 0.0
        %v1685 = vmax.f32 %v1619, 0.0
        %v1686 = vmax.f32 %v1622, 0.0
        %v1687 = vmax.f32 %v1627, 0.0
        %v1688 = vmax.f32 %v1630, 0.0
        %v1689 = vmax.f32 %v1635, 0.0
        %v1690 = vmax.f32 %v1638, 0.0
        %v1691 = vmax.f32 %v1643, 0.0
        %v1692 = vmax.f32 %v1646, 0.0
        %v1693 = vmax.f32 %v1651, 0.0
        %v1694 = vmax.f32 %v1654, 0.0
        %v1695 = vmax.f32 %v1659, 0.0
        %v1696 = vmax.f32 %v1662, 0.0
        %v1697 = vpack.c.bf16 %v1666, %v1665
        %v1698 = vpack.c.bf16 %v1668, %v1667
        %v1699 = vpack.c.bf16 %v1670, %v1669
        %v1700 = vpack.c.bf16 %v1672, %v1671
        %v1701 = vpack.c.bf16 %v1674, %v1673
        %v1702 = vpack.c.bf16 %v1676, %v1675
        %v1703 = vpack.c.bf16 %v1678, %v1677
        %v1704 = vpack.c.bf16 %v1680, %v1679
        %v1705 = vpack.c.bf16 %v1682, %v1681
        %v1706 = vpack.c.bf16 %v1684, %v1683
        %v1707 = vpack.c.bf16 %v1686, %v1685
        %v1708 = vpack.c.bf16 %v1688, %v1687
        %v1709 = vpack.c.bf16 %v1690, %v1689
        %v1710 = vpack.c.bf16 %v1692, %v1691
        %v1711 = vpack.c.bf16 %v1694, %v1693
        %v1712 = vpack.c.bf16 %v1696, %v1695
        %1714 = vset.pattern.permute.xlu0 0
        %1715 = vperm.xlu0 %1714, %v665
        %v1716 = vpop.permute.xlu0 %1715
        %1719 = vset.pattern.permute.xlu0 0
        %1720 = vperm.xlu0 %1719, %v666
        %v1721 = vpop.permute.xlu0 %1720
        %1724 = vset.pattern.permute.xlu0 0
        %1725 = vperm.xlu0 %1724, %v667
        %v1726 = vpop.permute.xlu0 %1725
        %1729 = vset.pattern.permute.xlu0 0
        %1730 = vperm.xlu0 %1729, %v668
        %v1731 = vpop.permute.xlu0 %1730
        %1734 = vset.pattern.permute.xlu0 0
        %1735 = vperm.xlu0 %1734, %v669
        %v1736 = vpop.permute.xlu0 %1735
        %1739 = vset.pattern.permute.xlu0 0
        %1740 = vperm.xlu0 %1739, %v670
        %v1741 = vpop.permute.xlu0 %1740
        %1744 = vset.pattern.permute.xlu0 0
        %1745 = vperm.xlu0 %1744, %v671
        %v1746 = vpop.permute.xlu0 %1745
        %1749 = vset.pattern.permute.xlu0 0
        %1750 = vperm.xlu0 %1749, %v672
        %v1751 = vpop.permute.xlu0 %1750
        %1754 = vset.pattern.permute.xlu0 0
        %1755 = vperm.xlu0 %1754, %v673
        %v1756 = vpop.permute.xlu0 %1755
        %1759 = vset.pattern.permute.xlu0 0
        %1760 = vperm.xlu0 %1759, %v674
        %v1761 = vpop.permute.xlu0 %1760
        %1764 = vset.pattern.permute.xlu0 0
        %1765 = vperm.xlu0 %1764, %v675
        %v1766 = vpop.permute.xlu0 %1765
        %1769 = vset.pattern.permute.xlu0 0
        %1770 = vperm.xlu0 %1769, %v676
        %v1771 = vpop.permute.xlu0 %1770
        %1774 = vset.pattern.permute.xlu0 0
        %1775 = vperm.xlu0 %1774, %v677
        %v1776 = vpop.permute.xlu0 %1775
        %1779 = vset.pattern.permute.xlu0 0
        %1780 = vperm.xlu0 %1779, %v678
        %v1781 = vpop.permute.xlu0 %1780
        %1784 = vset.pattern.permute.xlu0 0
        %1785 = vperm.xlu0 %1784, %v679
        %v1786 = vpop.permute.xlu0 %1785
        %1789 = vset.pattern.permute.xlu0 0
        %1790 = vperm.xlu0 %1789, %v680
        %v1791 = vpop.permute.xlu0 %1790
        %1794 = vset.pattern.permute.xlu0 0
        %1795 = vperm.xlu0 %1794, %v681
        %v1796 = vpop.permute.xlu0 %1795
        %1799 = vset.pattern.permute.xlu0 0
        %1800 = vperm.xlu0 %1799, %v682
        %v1801 = vpop.permute.xlu0 %1800
        %1804 = vset.pattern.permute.xlu0 0
        %1805 = vperm.xlu0 %1804, %v683
        %v1806 = vpop.permute.xlu0 %1805
        %1809 = vset.pattern.permute.xlu0 0
        %1810 = vperm.xlu0 %1809, %v684
        %v1811 = vpop.permute.xlu0 %1810
        %1814 = vset.pattern.permute.xlu0 0
        %1815 = vperm.xlu0 %1814, %v685
        %v1816 = vpop.permute.xlu0 %1815
        %1819 = vset.pattern.permute.xlu0 0
        %1820 = vperm.xlu0 %1819, %v686
        %v1821 = vpop.permute.xlu0 %1820
        %1824 = vset.pattern.permute.xlu0 0
        %1825 = vperm.xlu0 %1824, %v687
        %v1826 = vpop.permute.xlu0 %1825
        %1829 = vset.pattern.permute.xlu0 0
        %1830 = vperm.xlu0 %1829, %v688
        %v1831 = vpop.permute.xlu0 %1830
        %1834 = vset.pattern.permute.xlu0 0
        %1835 = vperm.xlu0 %1834, %v689
        %v1836 = vpop.permute.xlu0 %1835
        %1839 = vset.pattern.permute.xlu0 0
        %1840 = vperm.xlu0 %1839, %v690
        %v1841 = vpop.permute.xlu0 %1840
        %1844 = vset.pattern.permute.xlu0 0
        %1845 = vperm.xlu0 %1844, %v691
        %v1846 = vpop.permute.xlu0 %1845
        %1849 = vset.pattern.permute.xlu0 0
        %1850 = vperm.xlu0 %1849, %v692
        %v1851 = vpop.permute.xlu0 %1850
        %1854 = vset.pattern.permute.xlu0 0
        %1855 = vperm.xlu0 %1854, %v693
        %v1856 = vpop.permute.xlu0 %1855
        %1859 = vset.pattern.permute.xlu0 0
        %1860 = vperm.xlu0 %1859, %v694
        %v1861 = vpop.permute.xlu0 %1860
        %1864 = vset.pattern.permute.xlu0 0
        %1865 = vperm.xlu0 %1864, %v695
        %v1866 = vpop.permute.xlu0 %1865
        %1869 = vset.pattern.permute.xlu0 0
        %1870 = vperm.xlu0 %1869, %v696
        %v1871 = vpop.permute.xlu0 %1870
        %1874 = vset.pattern.permute.xlu0 0
        %1875 = vperm.xlu0 %1874, %v697
        %v1876 = vpop.permute.xlu0 %1875
        %1879 = vset.pattern.permute.xlu0 0
        %1880 = vperm.xlu0 %1879, %v698
        %v1881 = vpop.permute.xlu0 %1880
        %1884 = vset.pattern.permute.xlu0 0
        %1885 = vperm.xlu0 %1884, %v699
        %v1886 = vpop.permute.xlu0 %1885
        %1889 = vset.pattern.permute.xlu0 0
        %1890 = vperm.xlu0 %1889, %v700
        %v1891 = vpop.permute.xlu0 %1890
        %1894 = vset.pattern.permute.xlu0 0
        %1895 = vperm.xlu0 %1894, %v701
        %v1896 = vpop.permute.xlu0 %1895
        %1899 = vset.pattern.permute.xlu0 0
        %1900 = vperm.xlu0 %1899, %v702
        %v1901 = vpop.permute.xlu0 %1900
        %1904 = vset.pattern.permute.xlu0 0
        %1905 = vperm.xlu0 %1904, %v703
        %v1906 = vpop.permute.xlu0 %1905
        %1909 = vset.pattern.permute.xlu0 0
        %1910 = vperm.xlu0 %1909, %v704
        %v1911 = vpop.permute.xlu0 %1910
        %1914 = vset.pattern.permute.xlu0 0
        %1915 = vperm.xlu0 %1914, %v705
        %v1916 = vpop.permute.xlu0 %1915
        %1919 = vset.pattern.permute.xlu0 0
        %1920 = vperm.xlu0 %1919, %v706
        %v1921 = vpop.permute.xlu0 %1920
        %1924 = vset.pattern.permute.xlu0 0
        %1925 = vperm.xlu0 %1924, %v707
        %v1926 = vpop.permute.xlu0 %1925
        %1929 = vset.pattern.permute.xlu0 0
        %1930 = vperm.xlu0 %1929, %v708
        %v1931 = vpop.permute.xlu0 %1930
        %1934 = vset.pattern.permute.xlu0 0
        %1935 = vperm.xlu0 %1934, %v709
        %v1936 = vpop.permute.xlu0 %1935
        %1939 = vset.pattern.permute.xlu0 0
        %1940 = vperm.xlu0 %1939, %v710
        %v1941 = vpop.permute.xlu0 %1940
        %1944 = vset.pattern.permute.xlu0 0
        %1945 = vperm.xlu0 %1944, %v711
        %v1946 = vpop.permute.xlu0 %1945
        %1949 = vset.pattern.permute.xlu0 0
        %1950 = vperm.xlu0 %1949, %v712
        %v1951 = vpop.permute.xlu0 %1950
        %1954 = vset.pattern.permute.xlu0 0
        %1955 = vperm.xlu0 %1954, %v713
        %v1956 = vpop.permute.xlu0 %1955
        %1959 = vset.pattern.permute.xlu0 0
        %1960 = vperm.xlu0 %1959, %v714
        %v1961 = vpop.permute.xlu0 %1960
        %1964 = vset.pattern.permute.xlu0 0
        %1965 = vperm.xlu0 %1964, %v715
        %v1966 = vpop.permute.xlu0 %1965
        %1969 = vset.pattern.permute.xlu0 0
        %1970 = vperm.xlu0 %1969, %v716
        %v1971 = vpop.permute.xlu0 %1970
        %1974 = vset.pattern.permute.xlu0 0
        %1975 = vperm.xlu0 %1974, %v717
        %v1976 = vpop.permute.xlu0 %1975
        %1979 = vset.pattern.permute.xlu0 0
        %1980 = vperm.xlu0 %1979, %v718
        %v1981 = vpop.permute.xlu0 %1980
        %1984 = vset.pattern.permute.xlu0 0
        %1985 = vperm.xlu0 %1984, %v719
        %v1986 = vpop.permute.xlu0 %1985
        %1989 = vset.pattern.permute.xlu0 0
        %1990 = vperm.xlu0 %1989, %v720
        %v1991 = vpop.permute.xlu0 %1990
        %1994 = vset.pattern.permute.xlu0 0
        %1995 = vperm.xlu0 %1994, %v721
        %v1996 = vpop.permute.xlu0 %1995
        %1999 = vset.pattern.permute.xlu0 0
        %2000 = vperm.xlu0 %1999, %v722
        %v2001 = vpop.permute.xlu0 %2000
        %2004 = vset.pattern.permute.xlu0 0
        %2005 = vperm.xlu0 %2004, %v723
        %v2006 = vpop.permute.xlu0 %2005
        %2009 = vset.pattern.permute.xlu0 0
        %2010 = vperm.xlu0 %2009, %v724
        %v2011 = vpop.permute.xlu0 %2010
        %2014 = vset.pattern.permute.xlu0 0
        %2015 = vperm.xlu0 %2014, %v725
        %v2016 = vpop.permute.xlu0 %2015
        %2019 = vset.pattern.permute.xlu0 0
        %2020 = vperm.xlu0 %2019, %v726
        %v2021 = vpop.permute.xlu0 %2020
        %2024 = vset.pattern.permute.xlu0 0
        %2025 = vperm.xlu0 %2024, %v727
        %v2026 = vpop.permute.xlu0 %2025
        %2029 = vset.pattern.permute.xlu0 0
        %2030 = vperm.xlu0 %2029, %v728
        %v2031 = vpop.permute.xlu0 %2030
        %v2097 = vunpack.c.l.b16 %v545
        %v2098 = vunpack.c.h.b16 %v545
        %v2099 = vunpack.c.l.b16 %v546
        %v2100 = vunpack.c.h.b16 %v546
        %v2101 = vunpack.c.l.b16 %v547
        %v2102 = vunpack.c.h.b16 %v547
        %v2103 = vunpack.c.l.b16 %v548
        %v2104 = vunpack.c.h.b16 %v548
        %v2105 = vunpack.c.l.b16 %v549
        %v2106 = vunpack.c.h.b16 %v549
        %v2107 = vunpack.c.l.b16 %v550
        %v2108 = vunpack.c.h.b16 %v550
        %v2109 = vunpack.c.l.b16 %v551
        %v2110 = vunpack.c.h.b16 %v551
        %v2111 = vunpack.c.l.b16 %v552
        %v2112 = vunpack.c.h.b16 %v552
        %v2113 = vunpack.c.l.b16 %v553
        %v2114 = vunpack.c.h.b16 %v553
        %v2115 = vunpack.c.l.b16 %v554
        %v2116 = vunpack.c.h.b16 %v554
        %v2117 = vunpack.c.l.b16 %v555
        %v2118 = vunpack.c.h.b16 %v555
        %v2119 = vunpack.c.l.b16 %v556
        %v2120 = vunpack.c.h.b16 %v556
        %v2121 = vunpack.c.l.b16 %v557
        %v2122 = vunpack.c.h.b16 %v557
        %v2123 = vunpack.c.l.b16 %v558
        %v2124 = vunpack.c.h.b16 %v558
        %v2125 = vunpack.c.l.b16 %v559
        %v2126 = vunpack.c.h.b16 %v559
        %v2127 = vunpack.c.l.b16 %v560
        %v2128 = vunpack.c.h.b16 %v560
        %v2129 = vunpack.c.l.b16 %v561
        %v2130 = vunpack.c.h.b16 %v561
        %v2131 = vunpack.c.l.b16 %v562
        %v2132 = vunpack.c.h.b16 %v562
        %v2133 = vunpack.c.l.b16 %v563
        %v2134 = vunpack.c.h.b16 %v563
        %v2135 = vunpack.c.l.b16 %v564
        %v2136 = vunpack.c.h.b16 %v564
        %v2137 = vunpack.c.l.b16 %v565
        %v2138 = vunpack.c.h.b16 %v565
        %v2139 = vunpack.c.l.b16 %v566
        %v2140 = vunpack.c.h.b16 %v566
        %v2141 = vunpack.c.l.b16 %v567
        %v2142 = vunpack.c.h.b16 %v567
        %v2143 = vunpack.c.l.b16 %v568
        %v2144 = vunpack.c.h.b16 %v568
        %v2145 = vunpack.c.l.b16 %v569
        %v2146 = vunpack.c.h.b16 %v569
        %v2147 = vunpack.c.l.b16 %v570
        %v2148 = vunpack.c.h.b16 %v570
        %v2149 = vunpack.c.l.b16 %v571
        %v2150 = vunpack.c.h.b16 %v571
        %v2151 = vunpack.c.l.b16 %v572
        %v2152 = vunpack.c.h.b16 %v572
        %v2153 = vunpack.c.l.b16 %v573
        %v2154 = vunpack.c.h.b16 %v573
        %v2155 = vunpack.c.l.b16 %v574
        %v2156 = vunpack.c.h.b16 %v574
        %v2157 = vunpack.c.l.b16 %v575
        %v2158 = vunpack.c.h.b16 %v575
        %v2159 = vunpack.c.l.b16 %v576
        %v2160 = vunpack.c.h.b16 %v576
        %v2161 = vunpack.c.l.b16 %v577
        %v2162 = vunpack.c.h.b16 %v577
        %v2163 = vunpack.c.l.b16 %v578
        %v2164 = vunpack.c.h.b16 %v578
        %v2165 = vunpack.c.l.b16 %v579
        %v2166 = vunpack.c.h.b16 %v579
        %v2167 = vunpack.c.l.b16 %v580
        %v2168 = vunpack.c.h.b16 %v580
        %v2169 = vunpack.c.l.b16 %v581
        %v2170 = vunpack.c.h.b16 %v581
        %v2171 = vunpack.c.l.b16 %v582
        %v2172 = vunpack.c.h.b16 %v582
        %v2173 = vunpack.c.l.b16 %v583
        %v2174 = vunpack.c.h.b16 %v583
        %v2175 = vunpack.c.l.b16 %v584
        %v2176 = vunpack.c.h.b16 %v584
        %v2177 = vunpack.c.l.b16 %v585
        %v2178 = vunpack.c.h.b16 %v585
        %v2179 = vunpack.c.l.b16 %v586
        %v2180 = vunpack.c.h.b16 %v586
        %v2181 = vunpack.c.l.b16 %v587
        %v2182 = vunpack.c.h.b16 %v587
        %v2183 = vunpack.c.l.b16 %v588
        %v2184 = vunpack.c.h.b16 %v588
        %v2185 = vunpack.c.l.b16 %v589
        %v2186 = vunpack.c.h.b16 %v589
        %v2187 = vunpack.c.l.b16 %v590
        %v2188 = vunpack.c.h.b16 %v590
        %v2189 = vunpack.c.l.b16 %v591
        %v2190 = vunpack.c.h.b16 %v591
        %v2191 = vunpack.c.l.b16 %v592
        %v2192 = vunpack.c.h.b16 %v592
        %v2193 = vunpack.c.l.b16 %v593
        %v2194 = vunpack.c.h.b16 %v593
        %v2195 = vunpack.c.l.b16 %v594
        %v2196 = vunpack.c.h.b16 %v594
        %v2197 = vunpack.c.l.b16 %v595
        %v2198 = vunpack.c.h.b16 %v595
        %v2199 = vunpack.c.l.b16 %v596
        %v2200 = vunpack.c.h.b16 %v596
        %v2201 = vunpack.c.l.b16 %v597
        %v2202 = vunpack.c.h.b16 %v597
        %v2203 = vunpack.c.l.b16 %v598
        %v2204 = vunpack.c.h.b16 %v598
        %v2205 = vunpack.c.l.b16 %v599
        %v2206 = vunpack.c.h.b16 %v599
        %v2207 = vunpack.c.l.b16 %v600
        %v2208 = vunpack.c.h.b16 %v600
        %v2209 = vunpack.c.l.b16 %v601
        %v2210 = vunpack.c.h.b16 %v601
        %v2211 = vunpack.c.l.b16 %v602
        %v2212 = vunpack.c.h.b16 %v602
        %v2213 = vunpack.c.l.b16 %v603
        %v2214 = vunpack.c.h.b16 %v603
        %v2215 = vunpack.c.l.b16 %v604
        %v2216 = vunpack.c.h.b16 %v604
        %v2217 = vunpack.c.l.b16 %v605
        %v2218 = vunpack.c.h.b16 %v605
        %v2219 = vunpack.c.l.b16 %v606
        %v2220 = vunpack.c.h.b16 %v606
        %v2221 = vunpack.c.l.b16 %v607
        %v2222 = vunpack.c.h.b16 %v607
        %v2223 = vunpack.c.l.b16 %v608
        %v2224 = vunpack.c.h.b16 %v608
        %v2225 = vpack.c.b16 %v2099, %v2097
        %v2226 = vpack.c.b16 %v2100, %v2098
        %v2227 = vpack.c.b16 %v2103, %v2101
        %v2228 = vpack.c.b16 %v2104, %v2102
        %v2229 = vpack.c.b16 %v2107, %v2105
        %v2230 = vpack.c.b16 %v2108, %v2106
        %v2231 = vpack.c.b16 %v2111, %v2109
        %v2232 = vpack.c.b16 %v2112, %v2110
        %v2233 = vpack.c.b16 %v2115, %v2113
        %v2234 = vpack.c.b16 %v2116, %v2114
        %v2235 = vpack.c.b16 %v2119, %v2117
        %v2236 = vpack.c.b16 %v2120, %v2118
        %v2237 = vpack.c.b16 %v2123, %v2121
        %v2238 = vpack.c.b16 %v2124, %v2122
        %v2239 = vpack.c.b16 %v2127, %v2125
        %v2240 = vpack.c.b16 %v2128, %v2126
        %v2241 = vpack.c.b16 %v2131, %v2129
        %v2242 = vpack.c.b16 %v2132, %v2130
        %v2243 = vpack.c.b16 %v2135, %v2133
        %v2244 = vpack.c.b16 %v2136, %v2134
        %v2245 = vpack.c.b16 %v2139, %v2137
        %v2246 = vpack.c.b16 %v2140, %v2138
        %v2247 = vpack.c.b16 %v2143, %v2141
        %v2248 = vpack.c.b16 %v2144, %v2142
        %v2249 = vpack.c.b16 %v2147, %v2145
        %v2250 = vpack.c.b16 %v2148, %v2146
        %v2251 = vpack.c.b16 %v2151, %v2149
        %v2252 = vpack.c.b16 %v2152, %v2150
        %v2253 = vpack.c.b16 %v2155, %v2153
        %v2254 = vpack.c.b16 %v2156, %v2154
        %v2255 = vpack.c.b16 %v2159, %v2157
        %v2256 = vpack.c.b16 %v2160, %v2158
        %v2257 = vpack.c.b16 %v2163, %v2161
        %v2258 = vpack.c.b16 %v2164, %v2162
        %v2259 = vpack.c.b16 %v2167, %v2165
        %v2260 = vpack.c.b16 %v2168, %v2166
        %v2261 = vpack.c.b16 %v2171, %v2169
        %v2262 = vpack.c.b16 %v2172, %v2170
        %v2263 = vpack.c.b16 %v2175, %v2173
        %v2264 = vpack.c.b16 %v2176, %v2174
        %v2265 = vpack.c.b16 %v2179, %v2177
        %v2266 = vpack.c.b16 %v2180, %v2178
        %v2267 = vpack.c.b16 %v2183, %v2181
        %v2268 = vpack.c.b16 %v2184, %v2182
        %v2269 = vpack.c.b16 %v2187, %v2185
        %v2270 = vpack.c.b16 %v2188, %v2186
        %v2271 = vpack.c.b16 %v2191, %v2189
        %v2272 = vpack.c.b16 %v2192, %v2190
        %v2273 = vpack.c.b16 %v2195, %v2193
        %v2274 = vpack.c.b16 %v2196, %v2194
        %v2275 = vpack.c.b16 %v2199, %v2197
        %v2276 = vpack.c.b16 %v2200, %v2198
        %v2277 = vpack.c.b16 %v2203, %v2201
        %v2278 = vpack.c.b16 %v2204, %v2202
        %v2279 = vpack.c.b16 %v2207, %v2205
        %v2280 = vpack.c.b16 %v2208, %v2206
        %v2281 = vpack.c.b16 %v2211, %v2209
        %v2282 = vpack.c.b16 %v2212, %v2210
        %v2283 = vpack.c.b16 %v2215, %v2213
        %v2284 = vpack.c.b16 %v2216, %v2214
        %v2285 = vpack.c.b16 %v2219, %v2217
        %v2286 = vpack.c.b16 %v2220, %v2218
        %v2287 = vpack.c.b16 %v2223, %v2221
        %v2288 = vpack.c.b16 %v2224, %v2222
        %2353 = vmatprep.subr.bf16.mxu0 0
        %2354 = vmatpush1.bf16.msra.mxu0 %v1704
        %2355 = vmatprep.subr.bf16.mxu0 0
        %2356 = vmatpush1.bf16.msra.mxu0 %v1703
        %2357 = vmatprep.subr.bf16.mxu0 0
        %2358 = vmatpush1.bf16.msra.mxu0 %v1702
        %2359 = vmatprep.subr.bf16.mxu0 0
        %2360 = vmatpush1.bf16.msra.mxu0 %v1701
        %2361 = vmatprep.subr.bf16.mxu0 0
        %2362 = vmatpush1.bf16.msra.mxu0 %v1700
        %2363 = vmatprep.subr.bf16.mxu0 0
        %2364 = vmatpush1.bf16.msra.mxu0 %v1699
        %2365 = vmatprep.subr.bf16.mxu0 0
        %2366 = vmatpush1.bf16.msra.mxu0 %v1698
        %2367 = vmatprep.subr.bf16.mxu0 0
        %2368 = vmatpush1.bf16.msra.mxu0 %v1697
        %2369 = vmatprep.subr.bf16.mxu0 0
        %2370 = vmatpush2.bf16.msra.mxu0 %v1712
        %2371 = vmatprep.subr.bf16.mxu0 0
        %2372 = vmatpush2.bf16.msra.mxu0 %v1711
        %2373 = vmatprep.subr.bf16.mxu0 0
        %2374 = vmatpush2.bf16.msra.mxu0 %v1710
        %2375 = vmatprep.subr.bf16.mxu0 0
        %2376 = vmatpush2.bf16.msra.mxu0 %v1709
        %2377 = vmatprep.subr.bf16.mxu0 0
        %2378 = vmatpush2.bf16.msra.mxu0 %v1708
        %2379 = vmatprep.subr.bf16.mxu0 0
        %2380 = vmatpush2.bf16.msra.mxu0 %v1707
        %2381 = vmatprep.subr.bf16.mxu0 0
        %2382 = vmatpush2.bf16.msra.mxu0 %v1706
        %2383 = vmatprep.subr.bf16.mxu0 0
        %2384 = vmatpush2.bf16.msra.mxu0 %v1705
        %2385 = vmatprep.mubr.bf16.mxu0 %v2226
        %2386 = vmatmul.mubr.bf16.gmra.mxu0 %v2225
        %v2387 = vpop.f32.mrf.mxu0
        %v2388 = vadd.f32 %v1716, %v2387
        %v2389 = vpop.f32.mrf.mxu0
        %v2390 = vpop.f32.mrf.mxu0
        %v2391 = vadd.f32 %v1721, %v2390
        %v2392 = vpop.f32.mrf.mxu0
        %2393 = vmatprep.mubr.bf16.mxu0 %v2228
        %2394 = vmatmul.mubr.bf16.gmra.mxu0 %v2227
        %v2395 = vpop.f32.mrf.mxu0
        %v2396 = vadd.f32 %v1726, %v2395
        %v2397 = vpop.f32.mrf.mxu0
        %v2398 = vpop.f32.mrf.mxu0
        %v2399 = vadd.f32 %v1731, %v2398
        %v2400 = vpop.f32.mrf.mxu0
        %2401 = vmatprep.mubr.bf16.mxu0 %v2230
        %2402 = vmatmul.mubr.bf16.gmra.mxu0 %v2229
        %v2403 = vpop.f32.mrf.mxu0
        %v2404 = vadd.f32 %v1736, %v2403
        %v2405 = vpop.f32.mrf.mxu0
        %v2406 = vpop.f32.mrf.mxu0
        %v2407 = vadd.f32 %v1741, %v2406
        %v2408 = vpop.f32.mrf.mxu0
        %2409 = vmatprep.mubr.bf16.mxu0 %v2232
        %2410 = vmatmul.mubr.bf16.gmra.mxu0 %v2231
        %v2411 = vpop.f32.mrf.mxu0
        %v2412 = vadd.f32 %v1746, %v2411
        %v2413 = vpop.f32.mrf.mxu0
        %v2414 = vpop.f32.mrf.mxu0
        %v2415 = vadd.f32 %v1751, %v2414
        %v2416 = vpop.f32.mrf.mxu0
        %2417 = vmatprep.mubr.bf16.mxu0 %v2234
        %2418 = vmatmul.mubr.bf16.gmra.mxu0 %v2233
        %v2419 = vpop.f32.mrf.mxu0
        %v2420 = vadd.f32 %v1756, %v2419
        %v2421 = vpop.f32.mrf.mxu0
        %v2422 = vpop.f32.mrf.mxu0
        %v2423 = vadd.f32 %v1761, %v2422
        %v2424 = vpop.f32.mrf.mxu0
        %2425 = vmatprep.mubr.bf16.mxu0 %v2236
        %2426 = vmatmul.mubr.bf16.gmra.mxu0 %v2235
        %v2427 = vpop.f32.mrf.mxu0
        %v2428 = vadd.f32 %v1766, %v2427
        %v2429 = vpop.f32.mrf.mxu0
        %v2430 = vpop.f32.mrf.mxu0
        %v2431 = vadd.f32 %v1771, %v2430
        %v2432 = vpop.f32.mrf.mxu0
        %2433 = vmatprep.mubr.bf16.mxu0 %v2238
        %2434 = vmatmul.mubr.bf16.gmra.mxu0 %v2237
        %v2435 = vpop.f32.mrf.mxu0
        %v2436 = vadd.f32 %v1776, %v2435
        %v2437 = vpop.f32.mrf.mxu0
        %v2438 = vpop.f32.mrf.mxu0
        %v2439 = vadd.f32 %v1781, %v2438
        %v2440 = vpop.f32.mrf.mxu0
        %2441 = vmatprep.mubr.bf16.mxu0 %v2240
        %2442 = vmatmul.mubr.bf16.gmra.mxu0 %v2239
        %v2443 = vpop.f32.mrf.mxu0
        %v2444 = vadd.f32 %v1786, %v2443
        %v2445 = vpop.f32.mrf.mxu0
        %v2446 = vpop.f32.mrf.mxu0
        %v2447 = vadd.f32 %v1791, %v2446
        %v2448 = vpop.f32.mrf.mxu0
        %2449 = vmatprep.mubr.bf16.mxu0 %v2242
        %2450 = vmatmul.mubr.bf16.gmra.mxu0 %v2241
        %v2451 = vpop.f32.mrf.mxu0
        %v2452 = vadd.f32 %v1796, %v2451
        %v2453 = vpop.f32.mrf.mxu0
        %v2454 = vpop.f32.mrf.mxu0
        %v2455 = vadd.f32 %v1801, %v2454
        %v2456 = vpop.f32.mrf.mxu0
        %2457 = vmatprep.mubr.bf16.mxu0 %v2244
        %2458 = vmatmul.mubr.bf16.gmra.mxu0 %v2243
        %v2459 = vpop.f32.mrf.mxu0
        %v2460 = vadd.f32 %v1806, %v2459
        %v2461 = vpop.f32.mrf.mxu0
        %v2462 = vpop.f32.mrf.mxu0
        %v2463 = vadd.f32 %v1811, %v2462
        %v2464 = vpop.f32.mrf.mxu0
        %2465 = vmatprep.mubr.bf16.mxu0 %v2246
        %2466 = vmatmul.mubr.bf16.gmra.mxu0 %v2245
        %v2467 = vpop.f32.mrf.mxu0
        %v2468 = vadd.f32 %v1816, %v2467
        %v2469 = vpop.f32.mrf.mxu0
        %v2470 = vpop.f32.mrf.mxu0
        %v2471 = vadd.f32 %v1821, %v2470
        %v2472 = vpop.f32.mrf.mxu0
        %2473 = vmatprep.mubr.bf16.mxu0 %v2248
        %2474 = vmatmul.mubr.bf16.gmra.mxu0 %v2247
        %v2475 = vpop.f32.mrf.mxu0
        %v2476 = vadd.f32 %v1826, %v2475
        %v2477 = vpop.f32.mrf.mxu0
        %v2478 = vpop.f32.mrf.mxu0
        %v2479 = vadd.f32 %v1831, %v2478
        %v2480 = vpop.f32.mrf.mxu0
        %2481 = vmatprep.mubr.bf16.mxu0 %v2250
        %2482 = vmatmul.mubr.bf16.gmra.mxu0 %v2249
        %v2483 = vpop.f32.mrf.mxu0
        %v2484 = vadd.f32 %v1836, %v2483
        %v2485 = vpop.f32.mrf.mxu0
        %v2486 = vpop.f32.mrf.mxu0
        %v2487 = vadd.f32 %v1841, %v2486
        %v2488 = vpop.f32.mrf.mxu0
        %2489 = vmatprep.mubr.bf16.mxu0 %v2252
        %2490 = vmatmul.mubr.bf16.gmra.mxu0 %v2251
        %v2491 = vpop.f32.mrf.mxu0
        %v2492 = vadd.f32 %v1846, %v2491
        %v2493 = vpop.f32.mrf.mxu0
        %v2494 = vpop.f32.mrf.mxu0
        %v2495 = vadd.f32 %v1851, %v2494
        %v2496 = vpop.f32.mrf.mxu0
        %2497 = vmatprep.mubr.bf16.mxu0 %v2254
        %2498 = vmatmul.mubr.bf16.gmra.mxu0 %v2253
        %v2499 = vpop.f32.mrf.mxu0
        %v2500 = vadd.f32 %v1856, %v2499
        %v2501 = vpop.f32.mrf.mxu0
        %v2502 = vpop.f32.mrf.mxu0
        %v2503 = vadd.f32 %v1861, %v2502
        %v2504 = vpop.f32.mrf.mxu0
        %2505 = vmatprep.mubr.bf16.mxu0 %v2256
        %2506 = vmatmul.mubr.bf16.gmra.mxu0 %v2255
        %v2507 = vpop.f32.mrf.mxu0
        %v2508 = vadd.f32 %v1866, %v2507
        %v2509 = vpop.f32.mrf.mxu0
        %v2510 = vpop.f32.mrf.mxu0
        %v2511 = vadd.f32 %v1871, %v2510
        %v2512 = vpop.f32.mrf.mxu0
        %2513 = vmatprep.mubr.bf16.mxu0 %v2258
        %2514 = vmatmul.mubr.bf16.gmra.mxu0 %v2257
        %v2515 = vpop.f32.mrf.mxu0
        %v2516 = vadd.f32 %v1876, %v2515
        %v2517 = vpop.f32.mrf.mxu0
        %v2518 = vpop.f32.mrf.mxu0
        %v2519 = vadd.f32 %v1881, %v2518
        %v2520 = vpop.f32.mrf.mxu0
        %2521 = vmatprep.mubr.bf16.mxu0 %v2260
        %2522 = vmatmul.mubr.bf16.gmra.mxu0 %v2259
        %v2523 = vpop.f32.mrf.mxu0
        %v2524 = vadd.f32 %v1886, %v2523
        %v2525 = vpop.f32.mrf.mxu0
        %v2526 = vpop.f32.mrf.mxu0
        %v2527 = vadd.f32 %v1891, %v2526
        %v2528 = vpop.f32.mrf.mxu0
        %2529 = vmatprep.mubr.bf16.mxu0 %v2262
        %2530 = vmatmul.mubr.bf16.gmra.mxu0 %v2261
        %v2531 = vpop.f32.mrf.mxu0
        %v2532 = vadd.f32 %v1896, %v2531
        %v2533 = vpop.f32.mrf.mxu0
        %v2534 = vpop.f32.mrf.mxu0
        %v2535 = vadd.f32 %v1901, %v2534
        %v2536 = vpop.f32.mrf.mxu0
        %2537 = vmatprep.mubr.bf16.mxu0 %v2264
        %2538 = vmatmul.mubr.bf16.gmra.mxu0 %v2263
        %v2539 = vpop.f32.mrf.mxu0
        %v2540 = vadd.f32 %v1906, %v2539
        %v2541 = vpop.f32.mrf.mxu0
        %v2542 = vpop.f32.mrf.mxu0
        %v2543 = vadd.f32 %v1911, %v2542
        %v2544 = vpop.f32.mrf.mxu0
        %2545 = vmatprep.mubr.bf16.mxu0 %v2266
        %2546 = vmatmul.mubr.bf16.gmra.mxu0 %v2265
        %v2547 = vpop.f32.mrf.mxu0
        %v2548 = vadd.f32 %v1916, %v2547
        %v2549 = vpop.f32.mrf.mxu0
        %v2550 = vpop.f32.mrf.mxu0
        %v2551 = vadd.f32 %v1921, %v2550
        %v2552 = vpop.f32.mrf.mxu0
        %2553 = vmatprep.mubr.bf16.mxu0 %v2268
        %2554 = vmatmul.mubr.bf16.gmra.mxu0 %v2267
        %v2555 = vpop.f32.mrf.mxu0
        %v2556 = vadd.f32 %v1926, %v2555
        %v2557 = vpop.f32.mrf.mxu0
        %v2558 = vpop.f32.mrf.mxu0
        %v2559 = vadd.f32 %v1931, %v2558
        %v2560 = vpop.f32.mrf.mxu0
        %2561 = vmatprep.mubr.bf16.mxu0 %v2270
        %2562 = vmatmul.mubr.bf16.gmra.mxu0 %v2269
        %v2563 = vpop.f32.mrf.mxu0
        %v2564 = vadd.f32 %v1936, %v2563
        %v2565 = vpop.f32.mrf.mxu0
        %v2566 = vpop.f32.mrf.mxu0
        %v2567 = vadd.f32 %v1941, %v2566
        %v2568 = vpop.f32.mrf.mxu0
        %2569 = vmatprep.mubr.bf16.mxu0 %v2272
        %2570 = vmatmul.mubr.bf16.gmra.mxu0 %v2271
        %v2571 = vpop.f32.mrf.mxu0
        %v2572 = vadd.f32 %v1946, %v2571
        %v2573 = vpop.f32.mrf.mxu0
        %v2574 = vpop.f32.mrf.mxu0
        %v2575 = vadd.f32 %v1951, %v2574
        %v2576 = vpop.f32.mrf.mxu0
        %2577 = vmatprep.mubr.bf16.mxu0 %v2274
        %2578 = vmatmul.mubr.bf16.gmra.mxu0 %v2273
        %v2579 = vpop.f32.mrf.mxu0
        %v2580 = vadd.f32 %v1956, %v2579
        %v2581 = vpop.f32.mrf.mxu0
        %v2582 = vpop.f32.mrf.mxu0
        %v2583 = vadd.f32 %v1961, %v2582
        %v2584 = vpop.f32.mrf.mxu0
        %2585 = vmatprep.mubr.bf16.mxu0 %v2276
        %2586 = vmatmul.mubr.bf16.gmra.mxu0 %v2275
        %v2587 = vpop.f32.mrf.mxu0
        %v2588 = vadd.f32 %v1966, %v2587
        %v2589 = vpop.f32.mrf.mxu0
        %v2590 = vpop.f32.mrf.mxu0
        %v2591 = vadd.f32 %v1971, %v2590
        %v2592 = vpop.f32.mrf.mxu0
        %2593 = vmatprep.mubr.bf16.mxu0 %v2278
        %2594 = vmatmul.mubr.bf16.gmra.mxu0 %v2277
        %v2595 = vpop.f32.mrf.mxu0
        %v2596 = vadd.f32 %v1976, %v2595
        %v2597 = vpop.f32.mrf.mxu0
        %v2598 = vpop.f32.mrf.mxu0
        %v2599 = vadd.f32 %v1981, %v2598
        %v2600 = vpop.f32.mrf.mxu0
        %2601 = vmatprep.mubr.bf16.mxu0 %v2280
        %2602 = vmatmul.mubr.bf16.gmra.mxu0 %v2279
        %v2603 = vpop.f32.mrf.mxu0
        %v2604 = vadd.f32 %v1986, %v2603
        %v2605 = vpop.f32.mrf.mxu0
        %v2606 = vpop.f32.mrf.mxu0
        %v2607 = vadd.f32 %v1991, %v2606
        %v2608 = vpop.f32.mrf.mxu0
        %2609 = vmatprep.mubr.bf16.mxu0 %v2282
        %2610 = vmatmul.mubr.bf16.gmra.mxu0 %v2281
        %v2611 = vpop.f32.mrf.mxu0
        %v2612 = vadd.f32 %v1996, %v2611
        %v2613 = vpop.f32.mrf.mxu0
        %v2614 = vpop.f32.mrf.mxu0
        %v2615 = vadd.f32 %v2001, %v2614
        %v2616 = vpop.f32.mrf.mxu0
        %2617 = vmatprep.mubr.bf16.mxu0 %v2284
        %2618 = vmatmul.mubr.bf16.gmra.mxu0 %v2283
        %v2619 = vpop.f32.mrf.mxu0
        %v2620 = vadd.f32 %v2006, %v2619
        %v2621 = vpop.f32.mrf.mxu0
        %v2622 = vpop.f32.mrf.mxu0
        %v2623 = vadd.f32 %v2011, %v2622
        %v2624 = vpop.f32.mrf.mxu0
        %2625 = vmatprep.mubr.bf16.mxu0 %v2286
        %2626 = vmatmul.mubr.bf16.gmra.mxu0 %v2285
        %v2627 = vpop.f32.mrf.mxu0
        %v2628 = vadd.f32 %v2016, %v2627
        %v2629 = vpop.f32.mrf.mxu0
        %v2630 = vpop.f32.mrf.mxu0
        %v2631 = vadd.f32 %v2021, %v2630
        %v2632 = vpop.f32.mrf.mxu0
        %2633 = vmatprep.mubr.bf16.mxu0 %v2288
        %2634 = vmatmul.mubr.bf16.gmra.mxu0 %v2287
        %v2635 = vpop.f32.mrf.mxu0
        %v2636 = vadd.f32 %v2026, %v2635
        %v2637 = vpop.f32.mrf.mxu0
        %v2638 = vpop.f32.mrf.mxu0
        %v2639 = vadd.f32 %v2031, %v2638
        %v2640 = vpop.f32.mrf.mxu0
        %2641 = vdwg.mxu0
        %2642 = vmax.xlane.f32.xlu0 %v2388
        %v2643 = vpop.xlane.xlu0 %2642
        %2644 = vmax.xlane.f32.xlu0 %v2391
        %v2645 = vpop.xlane.xlu0 %2644
        %2646 = vmax.xlane.f32.xlu0 %v2396
        %v2647 = vpop.xlane.xlu0 %2646
        %2648 = vmax.xlane.f32.xlu0 %v2399
        %v2649 = vpop.xlane.xlu0 %2648
        %2650 = vmax.xlane.f32.xlu0 %v2404
        %v2651 = vpop.xlane.xlu0 %2650
        %2652 = vmax.xlane.f32.xlu0 %v2407
        %v2653 = vpop.xlane.xlu0 %2652
        %2654 = vmax.xlane.f32.xlu0 %v2412
        %v2655 = vpop.xlane.xlu0 %2654
        %2656 = vmax.xlane.f32.xlu0 %v2415
        %v2657 = vpop.xlane.xlu0 %2656
        %2658 = vmax.xlane.f32.xlu0 %v2420
        %v2659 = vpop.xlane.xlu0 %2658
        %2660 = vmax.xlane.f32.xlu0 %v2423
        %v2661 = vpop.xlane.xlu0 %2660
        %2662 = vmax.xlane.f32.xlu0 %v2428
        %v2663 = vpop.xlane.xlu0 %2662
        %2664 = vmax.xlane.f32.xlu0 %v2431
        %v2665 = vpop.xlane.xlu0 %2664
        %2666 = vmax.xlane.f32.xlu0 %v2436
        %v2667 = vpop.xlane.xlu0 %2666
        %2668 = vmax.xlane.f32.xlu0 %v2439
        %v2669 = vpop.xlane.xlu0 %2668
        %2670 = vmax.xlane.f32.xlu0 %v2444
        %v2671 = vpop.xlane.xlu0 %2670
        %2672 = vmax.xlane.f32.xlu0 %v2447
        %v2673 = vpop.xlane.xlu0 %2672
        %2674 = vmax.xlane.f32.xlu0 %v2452
        %v2675 = vpop.xlane.xlu0 %2674
        %2676 = vmax.xlane.f32.xlu0 %v2455
        %v2677 = vpop.xlane.xlu0 %2676
        %2678 = vmax.xlane.f32.xlu0 %v2460
        %v2679 = vpop.xlane.xlu0 %2678
        %2680 = vmax.xlane.f32.xlu0 %v2463
        %v2681 = vpop.xlane.xlu0 %2680
        %2682 = vmax.xlane.f32.xlu0 %v2468
        %v2683 = vpop.xlane.xlu0 %2682
        %2684 = vmax.xlane.f32.xlu0 %v2471
        %v2685 = vpop.xlane.xlu0 %2684
        %2686 = vmax.xlane.f32.xlu0 %v2476
        %v2687 = vpop.xlane.xlu0 %2686
        %2688 = vmax.xlane.f32.xlu0 %v2479
        %v2689 = vpop.xlane.xlu0 %2688
        %2690 = vmax.xlane.f32.xlu0 %v2484
        %v2691 = vpop.xlane.xlu0 %2690
        %2692 = vmax.xlane.f32.xlu0 %v2487
        %v2693 = vpop.xlane.xlu0 %2692
        %2694 = vmax.xlane.f32.xlu0 %v2492
        %v2695 = vpop.xlane.xlu0 %2694
        %2696 = vmax.xlane.f32.xlu0 %v2495
        %v2697 = vpop.xlane.xlu0 %2696
        %2698 = vmax.xlane.f32.xlu0 %v2500
        %v2699 = vpop.xlane.xlu0 %2698
        %2700 = vmax.xlane.f32.xlu0 %v2503
        %v2701 = vpop.xlane.xlu0 %2700
        %2702 = vmax.xlane.f32.xlu0 %v2508
        %v2703 = vpop.xlane.xlu0 %2702
        %2704 = vmax.xlane.f32.xlu0 %v2511
        %v2705 = vpop.xlane.xlu0 %2704
        %2706 = vmax.xlane.f32.xlu0 %v2516
        %v2707 = vpop.xlane.xlu0 %2706
        %2708 = vmax.xlane.f32.xlu0 %v2519
        %v2709 = vpop.xlane.xlu0 %2708
        %2710 = vmax.xlane.f32.xlu0 %v2524
        %v2711 = vpop.xlane.xlu0 %2710
        %2712 = vmax.xlane.f32.xlu0 %v2527
        %v2713 = vpop.xlane.xlu0 %2712
        %2714 = vmax.xlane.f32.xlu0 %v2532
        %v2715 = vpop.xlane.xlu0 %2714
        %2716 = vmax.xlane.f32.xlu0 %v2535
        %v2717 = vpop.xlane.xlu0 %2716
        %2718 = vmax.xlane.f32.xlu0 %v2540
        %v2719 = vpop.xlane.xlu0 %2718
        %2720 = vmax.xlane.f32.xlu0 %v2543
        %v2721 = vpop.xlane.xlu0 %2720
        %2722 = vmax.xlane.f32.xlu0 %v2548
        %v2723 = vpop.xlane.xlu0 %2722
        %2724 = vmax.xlane.f32.xlu0 %v2551
        %v2725 = vpop.xlane.xlu0 %2724
        %2726 = vmax.xlane.f32.xlu0 %v2556
        %v2727 = vpop.xlane.xlu0 %2726
        %2728 = vmax.xlane.f32.xlu0 %v2559
        %v2729 = vpop.xlane.xlu0 %2728
        %2730 = vmax.xlane.f32.xlu0 %v2564
        %v2731 = vpop.xlane.xlu0 %2730
        %2732 = vmax.xlane.f32.xlu0 %v2567
        %v2733 = vpop.xlane.xlu0 %2732
        %2734 = vmax.xlane.f32.xlu0 %v2572
        %v2735 = vpop.xlane.xlu0 %2734
        %2736 = vmax.xlane.f32.xlu0 %v2575
        %v2737 = vpop.xlane.xlu0 %2736
        %2738 = vmax.xlane.f32.xlu0 %v2580
        %v2739 = vpop.xlane.xlu0 %2738
        %2740 = vmax.xlane.f32.xlu0 %v2583
        %v2741 = vpop.xlane.xlu0 %2740
        %2742 = vmax.xlane.f32.xlu0 %v2588
        %v2743 = vpop.xlane.xlu0 %2742
        %2744 = vmax.xlane.f32.xlu0 %v2591
        %v2745 = vpop.xlane.xlu0 %2744
        %2746 = vmax.xlane.f32.xlu0 %v2596
        %v2747 = vpop.xlane.xlu0 %2746
        %2748 = vmax.xlane.f32.xlu0 %v2599
        %v2749 = vpop.xlane.xlu0 %2748
        %2750 = vmax.xlane.f32.xlu0 %v2604
        %v2751 = vpop.xlane.xlu0 %2750
        %2752 = vmax.xlane.f32.xlu0 %v2607
        %v2753 = vpop.xlane.xlu0 %2752
        %2754 = vmax.xlane.f32.xlu0 %v2612
        %v2755 = vpop.xlane.xlu0 %2754
        %2756 = vmax.xlane.f32.xlu0 %v2615
        %v2757 = vpop.xlane.xlu0 %2756
        %2758 = vmax.xlane.f32.xlu0 %v2620
        %v2759 = vpop.xlane.xlu0 %2758
        %2760 = vmax.xlane.f32.xlu0 %v2623
        %v2761 = vpop.xlane.xlu0 %2760
        %2762 = vmax.xlane.f32.xlu0 %v2628
        %v2763 = vpop.xlane.xlu0 %2762
        %2764 = vmax.xlane.f32.xlu0 %v2631
        %v2765 = vpop.xlane.xlu0 %2764
        %2766 = vmax.xlane.f32.xlu0 %v2636
        %v2767 = vpop.xlane.xlu0 %2766
        %2768 = vmax.xlane.f32.xlu0 %v2639
        %v2769 = vpop.xlane.xlu0 %2768
        %vm2770 = vcmp.eq.s32.totalorder %v794, 0
        %v2771 = vmax.f32 %v729, %v2643
        %v2772 = vmax.f32 %v730, %v2645
        %v2773 = vmax.f32 %v731, %v2647
        %v2774 = vmax.f32 %v732, %v2649
        %v2775 = vmax.f32 %v733, %v2651
        %v2776 = vmax.f32 %v734, %v2653
        %v2777 = vmax.f32 %v735, %v2655
        %v2778 = vmax.f32 %v736, %v2657
        %v2779 = vmax.f32 %v737, %v2659
        %v2780 = vmax.f32 %v738, %v2661
        %v2781 = vmax.f32 %v739, %v2663
        %v2782 = vmax.f32 %v740, %v2665
        %v2783 = vmax.f32 %v741, %v2667
        %v2784 = vmax.f32 %v742, %v2669
        %v2785 = vmax.f32 %v743, %v2671
        %v2786 = vmax.f32 %v744, %v2673
        %v2787 = vmax.f32 %v745, %v2675
        %v2788 = vmax.f32 %v746, %v2677
        %v2789 = vmax.f32 %v747, %v2679
        %v2790 = vmax.f32 %v748, %v2681
        %v2791 = vmax.f32 %v749, %v2683
        %v2792 = vmax.f32 %v750, %v2685
        %v2793 = vmax.f32 %v751, %v2687
        %v2794 = vmax.f32 %v752, %v2689
        %v2795 = vmax.f32 %v753, %v2691
        %v2796 = vmax.f32 %v754, %v2693
        %v2797 = vmax.f32 %v755, %v2695
        %v2798 = vmax.f32 %v756, %v2697
        %v2799 = vmax.f32 %v757, %v2699
        %v2800 = vmax.f32 %v758, %v2701
        %v2801 = vmax.f32 %v759, %v2703
        %v2802 = vmax.f32 %v760, %v2705
        %v2803 = vmax.f32 %v761, %v2707
        %v2804 = vmax.f32 %v762, %v2709
        %v2805 = vmax.f32 %v763, %v2711
        %v2806 = vmax.f32 %v764, %v2713
        %v2807 = vmax.f32 %v765, %v2715
        %v2808 = vmax.f32 %v766, %v2717
        %v2809 = vmax.f32 %v767, %v2719
        %v2810 = vmax.f32 %v768, %v2721
        %v2811 = vmax.f32 %v769, %v2723
        %v2812 = vmax.f32 %v770, %v2725
        %v2813 = vmax.f32 %v771, %v2727
        %v2814 = vmax.f32 %v772, %v2729
        %v2815 = vmax.f32 %v773, %v2731
        %v2816 = vmax.f32 %v774, %v2733
        %v2817 = vmax.f32 %v775, %v2735
        %v2818 = vmax.f32 %v776, %v2737
        %v2819 = vmax.f32 %v777, %v2739
        %v2820 = vmax.f32 %v778, %v2741
        %v2821 = vmax.f32 %v779, %v2743
        %v2822 = vmax.f32 %v780, %v2745
        %v2823 = vmax.f32 %v781, %v2747
        %v2824 = vmax.f32 %v782, %v2749
        %v2825 = vmax.f32 %v783, %v2751
        %v2826 = vmax.f32 %v784, %v2753
        %v2827 = vmax.f32 %v785, %v2755
        %v2828 = vmax.f32 %v786, %v2757
        %v2829 = vmax.f32 %v787, %v2759
        %v2830 = vmax.f32 %v788, %v2761
        %v2831 = vmax.f32 %v789, %v2763
        %v2832 = vmax.f32 %v790, %v2765
        %v2833 = vmax.f32 %v791, %v2767
        %v2834 = vmax.f32 %v792, %v2769
        %v2835 = vsel %vm2770, %v2771, %v729
        %v2836 = vsel %vm2770, %v2772, %v730
        %v2837 = vsel %vm2770, %v2773, %v731
        %v2838 = vsel %vm2770, %v2774, %v732
        %v2839 = vsel %vm2770, %v2775, %v733
        %v2840 = vsel %vm2770, %v2776, %v734
        %v2841 = vsel %vm2770, %v2777, %v735
        %v2842 = vsel %vm2770, %v2778, %v736
        %v2843 = vsel %vm2770, %v2779, %v737
        %v2844 = vsel %vm2770, %v2780, %v738
        %v2845 = vsel %vm2770, %v2781, %v739
        %v2846 = vsel %vm2770, %v2782, %v740
        %v2847 = vsel %vm2770, %v2783, %v741
        %v2848 = vsel %vm2770, %v2784, %v742
        %v2849 = vsel %vm2770, %v2785, %v743
        %v2850 = vsel %vm2770, %v2786, %v744
        %v2851 = vsel %vm2770, %v2787, %v745
        %v2852 = vsel %vm2770, %v2788, %v746
        %v2853 = vsel %vm2770, %v2789, %v747
        %v2854 = vsel %vm2770, %v2790, %v748
        %v2855 = vsel %vm2770, %v2791, %v749
        %v2856 = vsel %vm2770, %v2792, %v750
        %v2857 = vsel %vm2770, %v2793, %v751
        %v2858 = vsel %vm2770, %v2794, %v752
        %v2859 = vsel %vm2770, %v2795, %v753
        %v2860 = vsel %vm2770, %v2796, %v754
        %v2861 = vsel %vm2770, %v2797, %v755
        %v2862 = vsel %vm2770, %v2798, %v756
        %v2863 = vsel %vm2770, %v2799, %v757
        %v2864 = vsel %vm2770, %v2800, %v758
        %v2865 = vsel %vm2770, %v2801, %v759
        %v2866 = vsel %vm2770, %v2802, %v760
        %v2867 = vsel %vm2770, %v2803, %v761
        %v2868 = vsel %vm2770, %v2804, %v762
        %v2869 = vsel %vm2770, %v2805, %v763
        %v2870 = vsel %vm2770, %v2806, %v764
        %v2871 = vsel %vm2770, %v2807, %v765
        %v2872 = vsel %vm2770, %v2808, %v766
        %v2873 = vsel %vm2770, %v2809, %v767
        %v2874 = vsel %vm2770, %v2810, %v768
        %v2875 = vsel %vm2770, %v2811, %v769
        %v2876 = vsel %vm2770, %v2812, %v770
        %v2877 = vsel %vm2770, %v2813, %v771
        %v2878 = vsel %vm2770, %v2814, %v772
        %v2879 = vsel %vm2770, %v2815, %v773
        %v2880 = vsel %vm2770, %v2816, %v774
        %v2881 = vsel %vm2770, %v2817, %v775
        %v2882 = vsel %vm2770, %v2818, %v776
        %v2883 = vsel %vm2770, %v2819, %v777
        %v2884 = vsel %vm2770, %v2820, %v778
        %v2885 = vsel %vm2770, %v2821, %v779
        %v2886 = vsel %vm2770, %v2822, %v780
        %v2887 = vsel %vm2770, %v2823, %v781
        %v2888 = vsel %vm2770, %v2824, %v782
        %v2889 = vsel %vm2770, %v2825, %v783
        %v2890 = vsel %vm2770, %v2826, %v784
        %v2891 = vsel %vm2770, %v2827, %v785
        %v2892 = vsel %vm2770, %v2828, %v786
        %v2893 = vsel %vm2770, %v2829, %v787
        %v2894 = vsel %vm2770, %v2830, %v788
        %v2895 = vsel %vm2770, %v2831, %v789
        %v2896 = vsel %vm2770, %v2832, %v790
        %v2897 = vsel %vm2770, %v2833, %v791
        %v2898 = vsel %vm2770, %v2834, %v792
        %vm2899 = vcmask 7168
        %2900 = vst.msk [vmem:[#allocation2] sm:$0xff] %vm2899, %v2835
        %2901 = vst.msk [vmem:[#allocation2 + $0x8] sm:$0xff] %vm2899, %v2836
        %2902 = vst.msk [vmem:[#allocation2 + $0x10] sm:$0xff] %vm2899, %v2837
        %2903 = vst.msk [vmem:[#allocation2 + $0x18] sm:$0xff] %vm2899, %v2838
        %2904 = vst.msk [vmem:[#allocation2 + $0x20] sm:$0xff] %vm2899, %v2839
        %2905 = vst.msk [vmem:[#allocation2 + $0x28] sm:$0xff] %vm2899, %v2840
        %2906 = vst.msk [vmem:[#allocation2 + $0x30] sm:$0xff] %vm2899, %v2841
        %2907 = vst.msk [vmem:[#allocation2 + $0x38] sm:$0xff] %vm2899, %v2842
        %2908 = vst.msk [vmem:[#allocation2 + $0x40] sm:$0xff] %vm2899, %v2843
        %2909 = vst.msk [vmem:[#allocation2 + $0x48] sm:$0xff] %vm2899, %v2844
        %2910 = vst.msk [vmem:[#allocation2 + $0x50] sm:$0xff] %vm2899, %v2845
        %2911 = vst.msk [vmem:[#allocation2 + $0x58] sm:$0xff] %vm2899, %v2846
        %2912 = vst.msk [vmem:[#allocation2 + $0x60] sm:$0xff] %vm2899, %v2847
        %2913 = vst.msk [vmem:[#allocation2 + $0x68] sm:$0xff] %vm2899, %v2848
        %2914 = vst.msk [vmem:[#allocation2 + $0x70] sm:$0xff] %vm2899, %v2849
        %2915 = vst.msk [vmem:[#allocation2 + $0x78] sm:$0xff] %vm2899, %v2850
        %2916 = vst.msk [vmem:[#allocation2 + $0x80] sm:$0xff] %vm2899, %v2851
        %2917 = vst.msk [vmem:[#allocation2 + $0x88] sm:$0xff] %vm2899, %v2852
        %2918 = vst.msk [vmem:[#allocation2 + $0x90] sm:$0xff] %vm2899, %v2853
        %2919 = vst.msk [vmem:[#allocation2 + $0x98] sm:$0xff] %vm2899, %v2854
        %2920 = vst.msk [vmem:[#allocation2 + $0xa0] sm:$0xff] %vm2899, %v2855
        %2921 = vst.msk [vmem:[#allocation2 + $0xa8] sm:$0xff] %vm2899, %v2856
        %2922 = vst.msk [vmem:[#allocation2 + $0xb0] sm:$0xff] %vm2899, %v2857
        %2923 = vst.msk [vmem:[#allocation2 + $0xb8] sm:$0xff] %vm2899, %v2858
        %2924 = vst.msk [vmem:[#allocation2 + $0xc0] sm:$0xff] %vm2899, %v2859
        %2925 = vst.msk [vmem:[#allocation2 + $0xc8] sm:$0xff] %vm2899, %v2860
        %2926 = vst.msk [vmem:[#allocation2 + $0xd0] sm:$0xff] %vm2899, %v2861
        %2927 = vst.msk [vmem:[#allocation2 + $0xd8] sm:$0xff] %vm2899, %v2862
        %2928 = vst.msk [vmem:[#allocation2 + $0xe0] sm:$0xff] %vm2899, %v2863
        %2929 = vst.msk [vmem:[#allocation2 + $0xe8] sm:$0xff] %vm2899, %v2864
        %2930 = vst.msk [vmem:[#allocation2 + $0xf0] sm:$0xff] %vm2899, %v2865
        %2931 = vst.msk [vmem:[#allocation2 + $0xf8] sm:$0xff] %vm2899, %v2866
        %2932 = vst.msk [vmem:[#allocation2 + $0x100] sm:$0xff] %vm2899, %v2867
        %2933 = vst.msk [vmem:[#allocation2 + $0x108] sm:$0xff] %vm2899, %v2868
        %2934 = vst.msk [vmem:[#allocation2 + $0x110] sm:$0xff] %vm2899, %v2869
        %2935 = vst.msk [vmem:[#allocation2 + $0x118] sm:$0xff] %vm2899, %v2870
        %2936 = vst.msk [vmem:[#allocation2 + $0x120] sm:$0xff] %vm2899, %v2871
        %2937 = vst.msk [vmem:[#allocation2 + $0x128] sm:$0xff] %vm2899, %v2872
        %2938 = vst.msk [vmem:[#allocation2 + $0x130] sm:$0xff] %vm2899, %v2873
        %2939 = vst.msk [vmem:[#allocation2 + $0x138] sm:$0xff] %vm2899, %v2874
        %2940 = vst.msk [vmem:[#allocation2 + $0x140] sm:$0xff] %vm2899, %v2875
        %2941 = vst.msk [vmem:[#allocation2 + $0x148] sm:$0xff] %vm2899, %v2876
        %2942 = vst.msk [vmem:[#allocation2 + $0x150] sm:$0xff] %vm2899, %v2877
        %2943 = vst.msk [vmem:[#allocation2 + $0x158] sm:$0xff] %vm2899, %v2878
        %2944 = vst.msk [vmem:[#allocation2 + $0x160] sm:$0xff] %vm2899, %v2879
        %2945 = vst.msk [vmem:[#allocation2 + $0x168] sm:$0xff] %vm2899, %v2880
        %2946 = vst.msk [vmem:[#allocation2 + $0x170] sm:$0xff] %vm2899, %v2881
        %2947 = vst.msk [vmem:[#allocation2 + $0x178] sm:$0xff] %vm2899, %v2882
        %2948 = vst.msk [vmem:[#allocation2 + $0x180] sm:$0xff] %vm2899, %v2883
        %2949 = vst.msk [vmem:[#allocation2 + $0x188] sm:$0xff] %vm2899, %v2884
        %2950 = vst.msk [vmem:[#allocation2 + $0x190] sm:$0xff] %vm2899, %v2885
        %2951 = vst.msk [vmem:[#allocation2 + $0x198] sm:$0xff] %vm2899, %v2886
        %2952 = vst.msk [vmem:[#allocation2 + $0x1a0] sm:$0xff] %vm2899, %v2887
        %2953 = vst.msk [vmem:[#allocation2 + $0x1a8] sm:$0xff] %vm2899, %v2888
        %2954 = vst.msk [vmem:[#allocation2 + $0x1b0] sm:$0xff] %vm2899, %v2889
        %2955 = vst.msk [vmem:[#allocation2 + $0x1b8] sm:$0xff] %vm2899, %v2890
        %2956 = vst.msk [vmem:[#allocation2 + $0x1c0] sm:$0xff] %vm2899, %v2891
        %2957 = vst.msk [vmem:[#allocation2 + $0x1c8] sm:$0xff] %vm2899, %v2892
        %2958 = vst.msk [vmem:[#allocation2 + $0x1d0] sm:$0xff] %vm2899, %v2893
        %2959 = vst.msk [vmem:[#allocation2 + $0x1d8] sm:$0xff] %vm2899, %v2894
        %2960 = vst.msk [vmem:[#allocation2 + $0x1e0] sm:$0xff] %vm2899, %v2895
        %2961 = vst.msk [vmem:[#allocation2 + $0x1e8] sm:$0xff] %vm2899, %v2896
        %2962 = vst.msk [vmem:[#allocation2 + $0x1f0] sm:$0xff] %vm2899, %v2897
        %2963 = vst.msk [vmem:[#allocation2 + $0x1f8] sm:$0xff] %vm2899, %v2898
        // Predicated region
        $region73: #{tpu_custom_call.1} parent=63 // pred_check
          %p2964 = pneg %p420
        $region74: #{tpu_custom_call.1} parent=63 // pred_check_branch
          %2966 = sbr.rel (%p2964) target = $region76
        $region75: #{tpu_custom_call.1} parent=63 // pred_region
          %v2967 = vld [vmem:[#allocation2] sm:$0xff]
          %v2968 = vld [vmem:[#allocation2 + $0x8] sm:$0xff]
          %v2969 = vld [vmem:[#allocation2 + $0x10] sm:$0xff]
          %v2970 = vld [vmem:[#allocation2 + $0x18] sm:$0xff]
          %v2971 = vld [vmem:[#allocation2 + $0x20] sm:$0xff]
          %v2972 = vld [vmem:[#allocation2 + $0x28] sm:$0xff]
          %v2973 = vld [vmem:[#allocation2 + $0x30] sm:$0xff]
          %v2974 = vld [vmem:[#allocation2 + $0x38] sm:$0xff]
          %v2975 = vld [vmem:[#allocation2 + $0x40] sm:$0xff]
          %v2976 = vld [vmem:[#allocation2 + $0x48] sm:$0xff]
          %v2977 = vld [vmem:[#allocation2 + $0x50] sm:$0xff]
          %v2978 = vld [vmem:[#allocation2 + $0x58] sm:$0xff]
          %v2979 = vld [vmem:[#allocation2 + $0x60] sm:$0xff]
          %v2980 = vld [vmem:[#allocation2 + $0x68] sm:$0xff]
          %v2981 = vld [vmem:[#allocation2 + $0x70] sm:$0xff]
          %v2982 = vld [vmem:[#allocation2 + $0x78] sm:$0xff]
          %v2983 = vld [vmem:[#allocation2 + $0x80] sm:$0xff]
          %v2984 = vld [vmem:[#allocation2 + $0x88] sm:$0xff]
          %v2985 = vld [vmem:[#allocation2 + $0x90] sm:$0xff]
          %v2986 = vld [vmem:[#allocation2 + $0x98] sm:$0xff]
          %v2987 = vld [vmem:[#allocation2 + $0xa0] sm:$0xff]
          %v2988 = vld [vmem:[#allocation2 + $0xa8] sm:$0xff]
          %v2989 = vld [vmem:[#allocation2 + $0xb0] sm:$0xff]
          %v2990 = vld [vmem:[#allocation2 + $0xb8] sm:$0xff]
          %v2991 = vld [vmem:[#allocation2 + $0xc0] sm:$0xff]
          %v2992 = vld [vmem:[#allocation2 + $0xc8] sm:$0xff]
          %v2993 = vld [vmem:[#allocation2 + $0xd0] sm:$0xff]
          %v2994 = vld [vmem:[#allocation2 + $0xd8] sm:$0xff]
          %v2995 = vld [vmem:[#allocation2 + $0xe0] sm:$0xff]
          %v2996 = vld [vmem:[#allocation2 + $0xe8] sm:$0xff]
          %v2997 = vld [vmem:[#allocation2 + $0xf0] sm:$0xff]
          %v2998 = vld [vmem:[#allocation2 + $0xf8] sm:$0xff]
          %v2999 = vld [vmem:[#allocation2 + $0x100] sm:$0xff]
          %v3000 = vld [vmem:[#allocation2 + $0x108] sm:$0xff]
          %v3001 = vld [vmem:[#allocation2 + $0x110] sm:$0xff]
          %v3002 = vld [vmem:[#allocation2 + $0x118] sm:$0xff]
          %v3003 = vld [vmem:[#allocation2 + $0x120] sm:$0xff]
          %v3004 = vld [vmem:[#allocation2 + $0x128] sm:$0xff]
          %v3005 = vld [vmem:[#allocation2 + $0x130] sm:$0xff]
          %v3006 = vld [vmem:[#allocation2 + $0x138] sm:$0xff]
          %v3007 = vld [vmem:[#allocation2 + $0x140] sm:$0xff]
          %v3008 = vld [vmem:[#allocation2 + $0x148] sm:$0xff]
          %v3009 = vld [vmem:[#allocation2 + $0x150] sm:$0xff]
          %v3010 = vld [vmem:[#allocation2 + $0x158] sm:$0xff]
          %v3011 = vld [vmem:[#allocation2 + $0x160] sm:$0xff]
          %v3012 = vld [vmem:[#allocation2 + $0x168] sm:$0xff]
          %v3013 = vld [vmem:[#allocation2 + $0x170] sm:$0xff]
          %v3014 = vld [vmem:[#allocation2 + $0x178] sm:$0xff]
          %v3015 = vld [vmem:[#allocation2 + $0x180] sm:$0xff]
          %v3016 = vld [vmem:[#allocation2 + $0x188] sm:$0xff]
          %v3017 = vld [vmem:[#allocation2 + $0x190] sm:$0xff]
          %v3018 = vld [vmem:[#allocation2 + $0x198] sm:$0xff]
          %v3019 = vld [vmem:[#allocation2 + $0x1a0] sm:$0xff]
          %v3020 = vld [vmem:[#allocation2 + $0x1a8] sm:$0xff]
          %v3021 = vld [vmem:[#allocation2 + $0x1b0] sm:$0xff]
          %v3022 = vld [vmem:[#allocation2 + $0x1b8] sm:$0xff]
          %v3023 = vld [vmem:[#allocation2 + $0x1c0] sm:$0xff]
          %v3024 = vld [vmem:[#allocation2 + $0x1c8] sm:$0xff]
          %v3025 = vld [vmem:[#allocation2 + $0x1d0] sm:$0xff]
          %v3026 = vld [vmem:[#allocation2 + $0x1d8] sm:$0xff]
          %v3027 = vld [vmem:[#allocation2 + $0x1e0] sm:$0xff]
          %v3028 = vld [vmem:[#allocation2 + $0x1e8] sm:$0xff]
          %v3029 = vld [vmem:[#allocation2 + $0x1f0] sm:$0xff]
          %v3030 = vld [vmem:[#allocation2 + $0x1f8] sm:$0xff]
          %v3031 = vlaneseq
          %v3032 = vshrl.u32 %v3031, 7
          %vm3033 = vcmp.eq.s32.totalorder %v3032, %v794
          %v3034 = vsel %vm3033, 1, 0
          %v3035 = vcvt.s32.f32 %v3034
          %v3037 = vsel %vm2899, %v3035, 0
          %v3040 = vsel %vm2899, %v2967, 0
          %v3043 = vsel %vm2899, %v2968, 0
          %v3046 = vsel %vm2899, %v2969, 0
          %v3049 = vsel %vm2899, %v2970, 0
          %v3052 = vsel %vm2899, %v2971, 0
          %v3055 = vsel %vm2899, %v2972, 0
          %v3058 = vsel %vm2899, %v2973, 0
          %v3061 = vsel %vm2899, %v2974, 0
          %v3064 = vsel %vm2899, %v2975, 0
          %v3067 = vsel %vm2899, %v2976, 0
          %v3070 = vsel %vm2899, %v2977, 0
          %v3073 = vsel %vm2899, %v2978, 0
          %v3076 = vsel %vm2899, %v2979, 0
          %v3079 = vsel %vm2899, %v2980, 0
          %v3082 = vsel %vm2899, %v2981, 0
          %v3085 = vsel %vm2899, %v2982, 0
          %v3088 = vsel %vm2899, %v2983, 0
          %v3091 = vsel %vm2899, %v2984, 0
          %v3094 = vsel %vm2899, %v2985, 0
          %v3097 = vsel %vm2899, %v2986, 0
          %v3100 = vsel %vm2899, %v2987, 0
          %v3103 = vsel %vm2899, %v2988, 0
          %v3106 = vsel %vm2899, %v2989, 0
          %v3109 = vsel %vm2899, %v2990, 0
          %v3112 = vsel %vm2899, %v2991, 0
          %v3115 = vsel %vm2899, %v2992, 0
          %v3118 = vsel %vm2899, %v2993, 0
          %v3121 = vsel %vm2899, %v2994, 0
          %v3124 = vsel %vm2899, %v2995, 0
          %v3127 = vsel %vm2899, %v2996, 0
          %v3130 = vsel %vm2899, %v2997, 0
          %v3133 = vsel %vm2899, %v2998, 0
          %v3136 = vsel %vm2899, %v2999, 0
          %v3139 = vsel %vm2899, %v3000, 0
          %v3142 = vsel %vm2899, %v3001, 0
          %v3145 = vsel %vm2899, %v3002, 0
          %v3148 = vsel %vm2899, %v3003, 0
          %v3151 = vsel %vm2899, %v3004, 0
          %v3154 = vsel %vm2899, %v3005, 0
          %v3157 = vsel %vm2899, %v3006, 0
          %v3160 = vsel %vm2899, %v3007, 0
          %v3163 = vsel %vm2899, %v3008, 0
          %v3166 = vsel %vm2899, %v3009, 0
          %v3169 = vsel %vm2899, %v3010, 0
          %v3172 = vsel %vm2899, %v3011, 0
          %v3175 = vsel %vm2899, %v3012, 0
          %v3178 = vsel %vm2899, %v3013, 0
          %v3181 = vsel %vm2899, %v3014, 0
          %v3184 = vsel %vm2899, %v3015, 0
          %v3187 = vsel %vm2899, %v3016, 0
          %v3190 = vsel %vm2899, %v3017, 0
          %v3193 = vsel %vm2899, %v3018, 0
          %v3196 = vsel %vm2899, %v3019, 0
          %v3199 = vsel %vm2899, %v3020, 0
          %v3202 = vsel %vm2899, %v3021, 0
          %v3205 = vsel %vm2899, %v3022, 0
          %v3208 = vsel %vm2899, %v3023, 0
          %v3211 = vsel %vm2899, %v3024, 0
          %v3214 = vsel %vm2899, %v3025, 0
          %v3217 = vsel %vm2899, %v3026, 0
          %v3220 = vsel %vm2899, %v3027, 0
          %v3223 = vsel %vm2899, %v3028, 0
          %v3226 = vsel %vm2899, %v3029, 0
          %v3229 = vsel %vm2899, %v3030, 0
          %3231 = vmatprep.subr.mxu0 0.0
          %3232 = vmatpush1.xpose.msra.mxu0 %v3085
          %3233 = vmatprep.subr.mxu0 0.0
          %3234 = vmatpush1.xpose.msra.mxu0 %v3082
          %3235 = vmatprep.subr.mxu0 0.0
          %3236 = vmatpush1.xpose.msra.mxu0 %v3079
          %3237 = vmatprep.subr.mxu0 0.0
          %3238 = vmatpush1.xpose.msra.mxu0 %v3076
          %3239 = vmatprep.subr.mxu0 0.0
          %3240 = vmatpush1.xpose.msra.mxu0 %v3073
          %3241 = vmatprep.subr.mxu0 0.0
          %3242 = vmatpush1.xpose.msra.mxu0 %v3070
          %3243 = vmatprep.subr.mxu0 0.0
          %3244 = vmatpush1.xpose.msra.mxu0 %v3067
          %3245 = vmatprep.subr.mxu0 0.0
          %3246 = vmatpush1.xpose.msra.mxu0 %v3064
          %3247 = vmatprep.subr.mxu0 0.0
          %3248 = vmatpush1.xpose.msra.mxu0 %v3061
          %3249 = vmatprep.subr.mxu0 0.0
          %3250 = vmatpush1.xpose.msra.mxu0 %v3058
          %3251 = vmatprep.subr.mxu0 0.0
          %3252 = vmatpush1.xpose.msra.mxu0 %v3055
          %3253 = vmatprep.subr.mxu0 0.0
          %3254 = vmatpush1.xpose.msra.mxu0 %v3052
          %3255 = vmatprep.subr.mxu0 0.0
          %3256 = vmatpush1.xpose.msra.mxu0 %v3049
          %3257 = vmatprep.subr.mxu0 0.0
          %3258 = vmatpush1.xpose.msra.mxu0 %v3046
          %3259 = vmatprep.subr.mxu0 0.0
          %3260 = vmatpush1.xpose.msra.mxu0 %v3043
          %3261 = vmatprep.subr.mxu0 0.0
          %3262 = vmatpush1.xpose.msra.mxu0 %v3040
          %3263 = vmatprep.subr.mxu0 0.0
          %3264 = vmatpush2.xpose.msra.mxu0 %v3133
          %3265 = vmatprep.subr.mxu0 0.0
          %3266 = vmatpush2.xpose.msra.mxu0 %v3130
          %3267 = vmatprep.subr.mxu0 0.0
          %3268 = vmatpush2.xpose.msra.mxu0 %v3127
          %3269 = vmatprep.subr.mxu0 0.0
          %3270 = vmatpush2.xpose.msra.mxu0 %v3124
          %3271 = vmatprep.subr.mxu0 0.0
          %3272 = vmatpush2.xpose.msra.mxu0 %v3121
          %3273 = vmatprep.subr.mxu0 0.0
          %3274 = vmatpush2.xpose.msra.mxu0 %v3118
          %3275 = vmatprep.subr.mxu0 0.0
          %3276 = vmatpush2.xpose.msra.mxu0 %v3115
          %3277 = vmatprep.subr.mxu0 0.0
          %3278 = vmatpush2.xpose.msra.mxu0 %v3112
          %3279 = vmatprep.subr.mxu0 0.0
          %3280 = vmatpush2.xpose.msra.mxu0 %v3109
          %3281 = vmatprep.subr.mxu0 0.0
          %3282 = vmatpush2.xpose.msra.mxu0 %v3106
          %3283 = vmatprep.subr.mxu0 0.0
          %3284 = vmatpush2.xpose.msra.mxu0 %v3103
          %3285 = vmatprep.subr.mxu0 0.0
          %3286 = vmatpush2.xpose.msra.mxu0 %v3100
          %3287 = vmatprep.subr.mxu0 0.0
          %3288 = vmatpush2.xpose.msra.mxu0 %v3097
          %3289 = vmatprep.subr.mxu0 0.0
          %3290 = vmatpush2.xpose.msra.mxu0 %v3094
          %3291 = vmatprep.subr.mxu0 0.0
          %3292 = vmatpush2.xpose.msra.mxu0 %v3091
          %3293 = vmatprep.subr.mxu0 0.0
          %3294 = vmatpush2.xpose.msra.mxu0 %v3088
          %3295 = vmatprep.mubr.f32.mxu0 0.0
          %3296 = vmatmul.mubr.f32.gmra.mxu0 %v3037
          %v3297 = vpop.f32.mrf.mxu0
          %v3298 = vadd.f32 0.0, %v3297
          %v3299 = vpop.f32.mrf.mxu0
          %v3300 = vadd.f32 0.0, %v3299
          %3301 = vdwg.mxu0
          %3302 = vmatprep.subr.mxu0 0.0
          %3303 = vmatpush1.xpose.msra.mxu0 %v3181
          %3304 = vmatprep.subr.mxu0 0.0
          %3305 = vmatpush1.xpose.msra.mxu0 %v3178
          %3306 = vmatprep.subr.mxu0 0.0
          %3307 = vmatpush1.xpose.msra.mxu0 %v3175
          %3308 = vmatprep.subr.mxu0 0.0
          %3309 = vmatpush1.xpose.msra.mxu0 %v3172
          %3310 = vmatprep.subr.mxu0 0.0
          %3311 = vmatpush1.xpose.msra.mxu0 %v3169
          %3312 = vmatprep.subr.mxu0 0.0
          %3313 = vmatpush1.xpose.msra.mxu0 %v3166
          %3314 = vmatprep.subr.mxu0 0.0
          %3315 = vmatpush1.xpose.msra.mxu0 %v3163
          %3316 = vmatprep.subr.mxu0 0.0
          %3317 = vmatpush1.xpose.msra.mxu0 %v3160
          %3318 = vmatprep.subr.mxu0 0.0
          %3319 = vmatpush1.xpose.msra.mxu0 %v3157
          %3320 = vmatprep.subr.mxu0 0.0
          %3321 = vmatpush1.xpose.msra.mxu0 %v3154
          %3322 = vmatprep.subr.mxu0 0.0
          %3323 = vmatpush1.xpose.msra.mxu0 %v3151
          %3324 = vmatprep.subr.mxu0 0.0
          %3325 = vmatpush1.xpose.msra.mxu0 %v3148
          %3326 = vmatprep.subr.mxu0 0.0
          %3327 = vmatpush1.xpose.msra.mxu0 %v3145
          %3328 = vmatprep.subr.mxu0 0.0
          %3329 = vmatpush1.xpose.msra.mxu0 %v3142
          %3330 = vmatprep.subr.mxu0 0.0
          %3331 = vmatpush1.xpose.msra.mxu0 %v3139
          %3332 = vmatprep.subr.mxu0 0.0
          %3333 = vmatpush1.xpose.msra.mxu0 %v3136
          %3334 = vmatprep.subr.mxu0 0.0
          %3335 = vmatpush2.xpose.msra.mxu0 %v3229
          %3336 = vmatprep.subr.mxu0 0.0
          %3337 = vmatpush2.xpose.msra.mxu0 %v3226
          %3338 = vmatprep.subr.mxu0 0.0
          %3339 = vmatpush2.xpose.msra.mxu0 %v3223
          %3340 = vmatprep.subr.mxu0 0.0
          %3341 = vmatpush2.xpose.msra.mxu0 %v3220
          %3342 = vmatprep.subr.mxu0 0.0
          %3343 = vmatpush2.xpose.msra.mxu0 %v3217
          %3344 = vmatprep.subr.mxu0 0.0
          %3345 = vmatpush2.xpose.msra.mxu0 %v3214
          %3346 = vmatprep.subr.mxu0 0.0
          %3347 = vmatpush2.xpose.msra.mxu0 %v3211
          %3348 = vmatprep.subr.mxu0 0.0
          %3349 = vmatpush2.xpose.msra.mxu0 %v3208
          %3350 = vmatprep.subr.mxu0 0.0
          %3351 = vmatpush2.xpose.msra.mxu0 %v3205
          %3352 = vmatprep.subr.mxu0 0.0
          %3353 = vmatpush2.xpose.msra.mxu0 %v3202
          %3354 = vmatprep.subr.mxu0 0.0
          %3355 = vmatpush2.xpose.msra.mxu0 %v3199
          %3356 = vmatprep.subr.mxu0 0.0
          %3357 = vmatpush2.xpose.msra.mxu0 %v3196
          %3358 = vmatprep.subr.mxu0 0.0
          %3359 = vmatpush2.xpose.msra.mxu0 %v3193
          %3360 = vmatprep.subr.mxu0 0.0
          %3361 = vmatpush2.xpose.msra.mxu0 %v3190
          %3362 = vmatprep.subr.mxu0 0.0
          %3363 = vmatpush2.xpose.msra.mxu0 %v3187
          %3364 = vmatprep.subr.mxu0 0.0
          %3365 = vmatpush2.xpose.msra.mxu0 %v3184
          %3366 = vmatprep.mubr.f32.mxu0 0.0
          %3367 = vmatmul.mubr.f32.gmra.mxu0 %v3037
          %v3368 = vpop.f32.mrf.mxu0
          %v3369 = vadd.f32 0.0, %v3368
          %v3370 = vpop.f32.mrf.mxu0
          %v3371 = vadd.f32 0.0, %v3370
          %3372 = vdwg.mxu0
          %v3373 = vld [vmem:[%s9] sm:$0xff]
          %v3374 = vld [vmem:[%s9 + $0x8] sm:$0xff]
          %v3375 = vld [vmem:[%s9 + $0x10] sm:$0xff]
          %v3376 = vld [vmem:[%s9 + $0x18] sm:$0xff]
          %v3377 = vld [vmem:[%s9 + $0x20] sm:$0xff]
          %v3378 = vld [vmem:[%s9 + $0x28] sm:$0xff]
          %v3379 = vld [vmem:[%s9 + $0x30] sm:$0xff]
          %v3380 = vld [vmem:[%s9 + $0x38] sm:$0xff]
          %v3381 = vld [vmem:[%s9 + $0x40] sm:$0xff]
          %v3382 = vld [vmem:[%s9 + $0x48] sm:$0xff]
          %v3383 = vld [vmem:[%s9 + $0x50] sm:$0xff]
          %v3384 = vld [vmem:[%s9 + $0x58] sm:$0xff]
          %v3385 = vld [vmem:[%s9 + $0x60] sm:$0xff]
          %v3386 = vld [vmem:[%s9 + $0x68] sm:$0xff]
          %v3387 = vld [vmem:[%s9 + $0x70] sm:$0xff]
          %v3388 = vld [vmem:[%s9 + $0x78] sm:$0xff]
          %v3389 = vld [vmem:[%s9 + $0x80] sm:$0xff]
          %v3390 = vld [vmem:[%s9 + $0x88] sm:$0xff]
          %v3391 = vld [vmem:[%s9 + $0x90] sm:$0xff]
          %v3392 = vld [vmem:[%s9 + $0x98] sm:$0xff]
          %v3393 = vld [vmem:[%s9 + $0xa0] sm:$0xff]
          %v3394 = vld [vmem:[%s9 + $0xa8] sm:$0xff]
          %v3395 = vld [vmem:[%s9 + $0xb0] sm:$0xff]
          %v3396 = vld [vmem:[%s9 + $0xb8] sm:$0xff]
          %v3397 = vld [vmem:[%s9 + $0xc0] sm:$0xff]
          %v3398 = vld [vmem:[%s9 + $0xc8] sm:$0xff]
          %v3399 = vld [vmem:[%s9 + $0xd0] sm:$0xff]
          %v3400 = vld [vmem:[%s9 + $0xd8] sm:$0xff]
          %v3401 = vld [vmem:[%s9 + $0xe0] sm:$0xff]
          %v3402 = vld [vmem:[%s9 + $0xe8] sm:$0xff]
          %v3403 = vld [vmem:[%s9 + $0xf0] sm:$0xff]
          %v3404 = vld [vmem:[%s9 + $0xf8] sm:$0xff]
          %v3405 = vld [vmem:[%s9 + $0x100] sm:$0xff]
          %v3406 = vld [vmem:[%s9 + $0x108] sm:$0xff]
          %v3407 = vld [vmem:[%s9 + $0x110] sm:$0xff]
          %v3408 = vld [vmem:[%s9 + $0x118] sm:$0xff]
          %v3409 = vld [vmem:[%s9 + $0x120] sm:$0xff]
          %v3410 = vld [vmem:[%s9 + $0x128] sm:$0xff]
          %v3411 = vld [vmem:[%s9 + $0x130] sm:$0xff]
          %v3412 = vld [vmem:[%s9 + $0x138] sm:$0xff]
          %v3413 = vld [vmem:[%s9 + $0x140] sm:$0xff]
          %v3414 = vld [vmem:[%s9 + $0x148] sm:$0xff]
          %v3415 = vld [vmem:[%s9 + $0x150] sm:$0xff]
          %v3416 = vld [vmem:[%s9 + $0x158] sm:$0xff]
          %v3417 = vld [vmem:[%s9 + $0x160] sm:$0xff]
          %v3418 = vld [vmem:[%s9 + $0x168] sm:$0xff]
          %v3419 = vld [vmem:[%s9 + $0x170] sm:$0xff]
          %v3420 = vld [vmem:[%s9 + $0x178] sm:$0xff]
          %v3421 = vld [vmem:[%s9 + $0x180] sm:$0xff]
          %v3422 = vld [vmem:[%s9 + $0x188] sm:$0xff]
          %v3423 = vld [vmem:[%s9 + $0x190] sm:$0xff]
          %v3424 = vld [vmem:[%s9 + $0x198] sm:$0xff]
          %v3425 = vld [vmem:[%s9 + $0x1a0] sm:$0xff]
          %v3426 = vld [vmem:[%s9 + $0x1a8] sm:$0xff]
          %v3427 = vld [vmem:[%s9 + $0x1b0] sm:$0xff]
          %v3428 = vld [vmem:[%s9 + $0x1b8] sm:$0xff]
          %v3429 = vld [vmem:[%s9 + $0x1c0] sm:$0xff]
          %v3430 = vld [vmem:[%s9 + $0x1c8] sm:$0xff]
          %v3431 = vld [vmem:[%s9 + $0x1d0] sm:$0xff]
          %v3432 = vld [vmem:[%s9 + $0x1d8] sm:$0xff]
          %v3433 = vld [vmem:[%s9 + $0x1e0] sm:$0xff]
          %v3434 = vld [vmem:[%s9 + $0x1e8] sm:$0xff]
          %v3435 = vld [vmem:[%s9 + $0x1f0] sm:$0xff]
          %v3436 = vld [vmem:[%s9 + $0x1f8] sm:$0xff]
          %v3437 = vld [vmem:[%s10] sm:$0x1]
          %3438 = vmatprep.subr.mxu0 0.0
          %3439 = vmatpush1.msra.mxu0 %v3388
          %3440 = vmatprep.subr.mxu0 0.0
          %3441 = vmatpush1.msra.mxu0 %v3387
          %3442 = vmatprep.subr.mxu0 0.0
          %3443 = vmatpush1.msra.mxu0 %v3386
          %3444 = vmatprep.subr.mxu0 0.0
          %3445 = vmatpush1.msra.mxu0 %v3385
          %3446 = vmatprep.subr.mxu0 0.0
          %3447 = vmatpush1.msra.mxu0 %v3384
          %3448 = vmatprep.subr.mxu0 0.0
          %3449 = vmatpush1.msra.mxu0 %v3383
          %3450 = vmatprep.subr.mxu0 0.0
          %3451 = vmatpush1.msra.mxu0 %v3382
          %3452 = vmatprep.subr.mxu0 0.0
          %3453 = vmatpush1.msra.mxu0 %v3381
          %3454 = vmatprep.subr.mxu0 0.0
          %3455 = vmatpush1.msra.mxu0 %v3380
          %3456 = vmatprep.subr.mxu0 0.0
          %3457 = vmatpush1.msra.mxu0 %v3379
          %3458 = vmatprep.subr.mxu0 0.0
          %3459 = vmatpush1.msra.mxu0 %v3378
          %3460 = vmatprep.subr.mxu0 0.0
          %3461 = vmatpush1.msra.mxu0 %v3377
          %3462 = vmatprep.subr.mxu0 0.0
          %3463 = vmatpush1.msra.mxu0 %v3376
          %3464 = vmatprep.subr.mxu0 0.0
          %3465 = vmatpush1.msra.mxu0 %v3375
          %3466 = vmatprep.subr.mxu0 0.0
          %3467 = vmatpush1.msra.mxu0 %v3374
          %3468 = vmatprep.subr.mxu0 0.0
          %3469 = vmatpush1.msra.mxu0 %v3373
          %3470 = vmatprep.subr.mxu0 0.0
          %3471 = vmatpush2.msra.mxu0 %v3404
          %3472 = vmatprep.subr.mxu0 0.0
          %3473 = vmatpush2.msra.mxu0 %v3403
          %3474 = vmatprep.subr.mxu0 0.0
          %3475 = vmatpush2.msra.mxu0 %v3402
          %3476 = vmatprep.subr.mxu0 0.0
          %3477 = vmatpush2.msra.mxu0 %v3401
          %3478 = vmatprep.subr.mxu0 0.0
          %3479 = vmatpush2.msra.mxu0 %v3400
          %3480 = vmatprep.subr.mxu0 0.0
          %3481 = vmatpush2.msra.mxu0 %v3399
          %3482 = vmatprep.subr.mxu0 0.0
          %3483 = vmatpush2.msra.mxu0 %v3398
          %3484 = vmatprep.subr.mxu0 0.0
          %3485 = vmatpush2.msra.mxu0 %v3397
          %3486 = vmatprep.subr.mxu0 0.0
          %3487 = vmatpush2.msra.mxu0 %v3396
          %3488 = vmatprep.subr.mxu0 0.0
          %3489 = vmatpush2.msra.mxu0 %v3395
          %3490 = vmatprep.subr.mxu0 0.0
          %3491 = vmatpush2.msra.mxu0 %v3394
          %3492 = vmatprep.subr.mxu0 0.0
          %3493 = vmatpush2.msra.mxu0 %v3393
          %3494 = vmatprep.subr.mxu0 0.0
          %3495 = vmatpush2.msra.mxu0 %v3392
          %3496 = vmatprep.subr.mxu0 0.0
          %3497 = vmatpush2.msra.mxu0 %v3391
          %3498 = vmatprep.subr.mxu0 0.0
          %3499 = vmatpush2.msra.mxu0 %v3390
          %3500 = vmatprep.subr.mxu0 0.0
          %3501 = vmatpush2.msra.mxu0 %v3389
          %3502 = vmatprep.mubr.f32.mxu0 %v3300
          %3503 = vmatmul.mubr.f32.gmra.mxu0 %v3298
          %v3504 = vpop.f32.mrf.mxu0
          %v3505 = vadd.f32 %v3437, %v3504
          %v3506 = vpop.f32.mrf.mxu0
          %3507 = vdwg.mxu0
          %3508 = vmatprep.subr.mxu0 0.0
          %3509 = vmatpush1.msra.mxu0 %v3420
          %3510 = vmatprep.subr.mxu0 0.0
          %3511 = vmatpush1.msra.mxu0 %v3419
          %3512 = vmatprep.subr.mxu0 0.0
          %3513 = vmatpush1.msra.mxu0 %v3418
          %3514 = vmatprep.subr.mxu0 0.0
          %3515 = vmatpush1.msra.mxu0 %v3417
          %3516 = vmatprep.subr.mxu0 0.0
          %3517 = vmatpush1.msra.mxu0 %v3416
          %3518 = vmatprep.subr.mxu0 0.0
          %3519 = vmatpush1.msra.mxu0 %v3415
          %3520 = vmatprep.subr.mxu0 0.0
          %3521 = vmatpush1.msra.mxu0 %v3414
          %3522 = vmatprep.subr.mxu0 0.0
          %3523 = vmatpush1.msra.mxu0 %v3413
          %3524 = vmatprep.subr.mxu0 0.0
          %3525 = vmatpush1.msra.mxu0 %v3412
          %3526 = vmatprep.subr.mxu0 0.0
          %3527 = vmatpush1.msra.mxu0 %v3411
          %3528 = vmatprep.subr.mxu0 0.0
          %3529 = vmatpush1.msra.mxu0 %v3410
          %3530 = vmatprep.subr.mxu0 0.0
          %3531 = vmatpush1.msra.mxu0 %v3409
          %3532 = vmatprep.subr.mxu0 0.0
          %3533 = vmatpush1.msra.mxu0 %v3408
          %3534 = vmatprep.subr.mxu0 0.0
          %3535 = vmatpush1.msra.mxu0 %v3407
          %3536 = vmatprep.subr.mxu0 0.0
          %3537 = vmatpush1.msra.mxu0 %v3406
          %3538 = vmatprep.subr.mxu0 0.0
          %3539 = vmatpush1.msra.mxu0 %v3405
          %3540 = vmatprep.subr.mxu0 0.0
          %3541 = vmatpush2.msra.mxu0 %v3436
          %3542 = vmatprep.subr.mxu0 0.0
          %3543 = vmatpush2.msra.mxu0 %v3435
          %3544 = vmatprep.subr.mxu0 0.0
          %3545 = vmatpush2.msra.mxu0 %v3434
          %3546 = vmatprep.subr.mxu0 0.0
          %3547 = vmatpush2.msra.mxu0 %v3433
          %3548 = vmatprep.subr.mxu0 0.0
          %3549 = vmatpush2.msra.mxu0 %v3432
          %3550 = vmatprep.subr.mxu0 0.0
          %3551 = vmatpush2.msra.mxu0 %v3431
          %3552 = vmatprep.subr.mxu0 0.0
          %3553 = vmatpush2.msra.mxu0 %v3430
          %3554 = vmatprep.subr.mxu0 0.0
          %3555 = vmatpush2.msra.mxu0 %v3429
          %3556 = vmatprep.subr.mxu0 0.0
          %3557 = vmatpush2.msra.mxu0 %v3428
          %3558 = vmatprep.subr.mxu0 0.0
          %3559 = vmatpush2.msra.mxu0 %v3427
          %3560 = vmatprep.subr.mxu0 0.0
          %3561 = vmatpush2.msra.mxu0 %v3426
          %3562 = vmatprep.subr.mxu0 0.0
          %3563 = vmatpush2.msra.mxu0 %v3425
          %3564 = vmatprep.subr.mxu0 0.0
          %3565 = vmatpush2.msra.mxu0 %v3424
          %3566 = vmatprep.subr.mxu0 0.0
          %3567 = vmatpush2.msra.mxu0 %v3423
          %3568 = vmatprep.subr.mxu0 0.0
          %3569 = vmatpush2.msra.mxu0 %v3422
          %3570 = vmatprep.subr.mxu0 0.0
          %3571 = vmatpush2.msra.mxu0 %v3421
          %3572 = vmatprep.mubr.f32.mxu0 %v3371
          %3573 = vmatmul.mubr.f32.gmra.mxu0 %v3369
          %v3574 = vpop.f32.mrf.mxu0
          %v3575 = vadd.f32 %v3505, %v3574
          %v3576 = vpop.f32.mrf.mxu0
          %3577 = vdwg.mxu0
          %3578 = vst [vmem:[%s411] sm:$0x1] %v3575
        $region76: #{tpu_custom_call.1} parent=63 // pred_fallthru
          _
        %s3579 = sand.u32 %s284, 1
        %s3580 = scalar_lea.sflag [#allocation5], %s3579
        %s3581 = sand.u32 %s284, 1
        %s3582 = scalar_lea.vmem [#allocation6], %s3581
        // Predicated region
        $region77: #{tpu_custom_call.1} parent=63 // pred_check
          %p3583 = pneg %p294
        $region78: #{tpu_custom_call.1} parent=63 // pred_check_branch
          %3585 = sbr.rel (%p3583) target = $region80
        $region79: #{tpu_custom_call.1} parent=63 // pred_region
          %s3587 = ssub.s32 16, 16
          %3588 = vsyncadd %s3580, %s3587
          %s3589 = smul.addr %s30, 16
          %s3590 = scalar_lea.hbm %s11, %s3589
          %s3592 = sshll.u32 %s3582, 4
          %s3593 = int_to_ptr.vmem [resolvable:$true] %s3592
          %3595 = dma.vmem_to_hbm [thread:$0]  %s3593, 16, %s3590, %s3580
        $region80: #{tpu_custom_call.1} parent=63 // pred_fallthru
          _
      $region64: #{tpu_custom_call.1} parent=5 // pred_fallthru
        _
      %p3596 = scmp.le.s32.totalorder 2, %s21
      // Predicated region
      $region81: #{tpu_custom_call.1} parent=5 // pred_check
        %p3597 = pneg %p3596
      $region82: #{tpu_custom_call.1} parent=5 // pred_check_branch
        %3599 = sbr.rel (%p3597) target = $region84
      $region83: #{tpu_custom_call.1} parent=5 // pred_region
        %s3600 = ssub.s32 %s21, 2
        // Predicated region
        $region85: #{tpu_custom_call.1} parent=83 // pred_check
          %p3601 = pneg %p300
        $region86: #{tpu_custom_call.1} parent=83 // pred_check_branch
          %3603 = sbr.rel (%p3601) target = $region88
        $region87: #{tpu_custom_call.1} parent=83 // pred_region
          %s3604 = sand.u32 %s285, 1
          %s3605 = scalar_lea.sflag [#allocation5], %s3604
          %s3606 = sand.u32 %s285, 1
          %s3607 = scalar_lea.vmem [#allocation6], %s3606
          %3608 = dma.done %s3605, 16
        $region88: #{tpu_custom_call.1} parent=83 // pred_fallthru
          _
      $region84: #{tpu_custom_call.1} parent=5 // pred_fallthru
        _
    $region6: #{tpu_custom_call.1} parent=1 // loop_footer
      %s25 = sadd.s32 1, %s21
    $region7: #{tpu_custom_call.1} parent=1 // loop_footer_branch
      %20 = sbr.rel target = $region3
    $region8: #{tpu_custom_call.1} parent=1 // loop_exit
      _
    %3609 = vsyncpa [#allocation4], 1
    %s3610 = scalar_lea.sflag [#allocation4], 1
    %3611 = vsyncpa %s3610, 1
    %3612 = vsyncpa [#allocation5], 1
    %s3613 = scalar_lea.sflag [#allocation5], 1
    %3614 = vsyncpa %s3613, 1

</llo_original>
